<compile_context>
chip_gen: v7x
topology: tpu7x:2x2x1
jax: 0.10.0
libtpu: 0.0.40
codegen_flags: <defaults>
</compile_context>

<pallas_src>
import functools

import jax
import jax.numpy as jnp
import numpy as np
from jax.experimental import pallas as pl
from jax.experimental.pallas import tpu as pltpu


# ----------------------------------------------------------------------------
# helpers
# ----------------------------------------------------------------------------
def _rup(x, m):
    return ((x + m - 1) // m) * m


def _vmem_tile_bytes(TH, H, W, Cin, Cmid, Cout, k2):
    """Rough per-grid-step VMEM footprint (bytes) of the fused kernel."""
    h1 = 1 + k2 // 2
    h = h1 + 1
    Hp, Wp = H + 2 * h, W + 2 * h
    RA, WA = TH + 2 * h1, W + 2 * h1
    RC, WC = TH + 2, W + 2

    def t(r, l, itemsize=4):
        return _rup(r, 8) * _rup(l, 128) * itemsize

    est = 2 * t(Hp, Wp * Cin)                      # padded image (double buffered)
    est += 2 * t(TH, W * Cout)                     # output tile (double buffered)
    est += t(RA, WA * Cmid) + t(RC, WC * Cout)     # scratch slabs
    est += 6 * t(RA, WA * max(Cin, Cmid))          # live stage-1/2 values (margin)
    est += t(9, WA * Cin) + t(k2 * k2, WC * Cmid) + t(9, W * Cout)   # dw taps
    est += 2 * (_rup(WA * Cin, 128) * _rup(WA * Cmid, 128)           # bf16 PW
                + _rup(WC * Cmid, 128) * _rup(WC * Cout, 128))
    est += 8 * t(1, WA * max(Cin, Cmid, Cout))     # biases / masks
    return est


def _pick_row_tile(H, W, Cin, Cmid, Cout, k2, budget_bytes):
    """Largest row tile (multiple of 8, or H itself) whose working set fits."""
    cands = [t for t in range(H, 0, -1) if H % t == 0 and (t % 8 == 0 or t == H)]
    for th in cands:
        if _vmem_tile_bytes(th, H, W, Cin, Cmid, Cout, k2) <= budget_bytes:
            return th
    return cands[-1]


# ----------------------------------------------------------------------------
# Fully fused CiB kernel (lane-dense layout: last dim = columns * channels).
#   x_ref     : (Hp, Wp*Cin)   zero-padded image, whole image in VMEM
#   w_dw*     : (k*k, Wdst*C)  BN-folded depthwise taps, lane-tiled per column
#   b_dw*     : (1, Wdst*C)
#   w_pw*     : (Wsrc*Cin, Wsrc*Cout) block-diagonal BN-folded 1x1 conv (bf16)
#   b_pw*     : (1, Wsrc*Cout)
#   cmask*    : (1, L)         1.0 inside the true image columns, else 0.0
#   o_ref     : (TH, W*Cout)   lane-dense output row tile
#   b_scr/d_scr: VMEM scratch slabs feeding the stage-3/5 tap loads
# ----------------------------------------------------------------------------
def _cib_kernel(x_ref, wdw1_ref, bdw1_ref, wpw1_ref, bpw1_ref,
                wdw2_ref, bdw2_ref, wpw2_ref, bpw2_ref,
                wdw3_ref, bdw3_ref, cmaskA_ref, cmaskC_ref,
                o_ref, b_scr, d_scr, *,
                TH, H, W, Cin, Cmid, Cout, k2, nT, use_identity):
    p2 = k2 // 2                    # padding of the second DW conv (1 or 3)
    h1 = 1 + p2                     # halo of the stage-1/2 extent
    h = h1 + 1                      # total zero padding applied by the wrapper
    RA, WA = TH + 2 * h1, W + 2 * h1
    RC, WC = TH + 2, W + 2
    LA_in, LA_mid = WA * Cin, WA * Cmid
    LC_mid, LC_out = WC * Cmid, WC * Cout
    LO = W * Cout

    if nT == 1:                     # static offsets for the common single-tile case
        r0 = 0
    else:
        r0 = pl.multiple_of(pl.program_id(1) * TH, TH)

    def silu(v):
        # approx reciprocal runs on the EUP slot (VPU is the saturating unit)
        return v * pl.reciprocal(1.0 + jnp.exp(-v), approx=True)

    # ---- stage 1: DW3x3 (+BN) + SiLU on the h1-halo extent -------------------
    acc = None
    for dh in range(3):
        for dw in range(3):
            w_t = wdw1_ref[pl.ds(dh * 3 + dw, 1), :]
            patch = x_ref[pl.ds(r0 + dh, RA), pl.ds(dw * Cin, LA_in)]
            term = patch * w_t
            acc = term if acc is None else acc + term
    a = silu(acc + bdw1_ref[...])

    # ---- stage 2: PW 1x1 (+BN) + SiLU via block-diagonal bf16 MXU matmul -----
    b = jnp.dot(a.astype(jnp.bfloat16), wpw1_ref[...],
                preferred_element_type=jnp.float32) + bpw1_ref[...]
    # Zero everything outside the original image: it acts as the zero padding
    # of the next depthwise conv (SiLU(bias) != 0 there, so masking is needed).
    gr = (r0 - h1) + jax.lax.broadcasted_iota(jnp.int32, (RA, 1), 0)
    rmask = ((gr >= 0) & (gr < H)).astype(jnp.float32)
    b_scr[...] = silu(b) * (rmask * cmaskA_ref[...])

    # ---- stage 3: second DW conv (3x3, or reparam RepVGGDW 7x7) + SiLU -------
    acc = None
    for dh in range(k2):
        for dw in range(k2):
            w_t = wdw2_ref[pl.ds(dh * k2 + dw, 1), :]
            patch = b_scr[pl.ds(dh, RC), pl.ds(dw * Cmid, LC_mid)]
            term = patch * w_t
            acc = term if acc is None else acc + term
    c = silu(acc + bdw2_ref[...])

    # ---- stage 4: PW 1x1 (+BN) + SiLU + border mask ---------------------------
    d = jnp.dot(c.astype(jnp.bfloat16), wpw2_ref[...],
                preferred_element_type=jnp.float32) + bpw2_ref[...]
    gr = (r0 - 1) + jax.lax.broadcasted_iota(jnp.int32, (RC, 1), 0)
    rmask = ((gr >= 0) & (gr < H)).astype(jnp.float32)
    d_scr[...] = silu(d) * (rmask * cmaskC_ref[...])

    # ---- stage 5: DW3x3 (+BN) + SiLU (+ identity shortcut) --------------------
    acc = None
    for dh in range(3):
        for dw in range(3):
            w_t = wdw3_ref[pl.ds(dh * 3 + dw, 1), :]
            patch = d_scr[pl.ds(dh, TH), pl.ds(dw * Cout, LO)]
            term = patch * w_t
            acc = term if acc is None else acc + term
    e = silu(acc + bdw3_ref[...])

    if use_identity:
        e = e + x_ref[pl.ds(r0 + h, TH), pl.ds(h * Cin, LO)]

    # lane-dense store: W folded into the lane dimension (W*Cout wide).
    o_ref[...] = e.astype(o_ref.dtype)


# ----------------------------------------------------------------------------
# Wrapper: NCHW in / NCHW out.
# ----------------------------------------------------------------------------
def cib_pallas(x_nchw, params, *, use_identity):
    N, Cin, H, W = x_nchw.shape
    Cmid = params["w_pw1"].shape[1]
    Cout = params["w_pw2"].shape[1]
    if use_identity:
        assert Cin == Cout, "identity shortcut requires Cin == Cout"
    k2 = int(round(params["w_dw2"].shape[0] ** 0.5))
    p2 = k2 // 2
    h1 = 1 + p2
    h = h1 + 1                                        # total spatial halo
    dtype = x_nchw.dtype

    # generation-aware VMEM budget (v7x: 64 MiB/TC, v5e/v6e: 128 MiB)
    try:
        vmem_cap = int(pltpu.get_tpu_info().vmem_capacity_bytes)
    except Exception:
        vmem_cap = 64 * 1024 * 1024
    budget = int(0.45 * vmem_cap)

    TH = _pick_row_tile(H, W, Cin, Cmid, Cout, k2, budget)
    nT = H // TH
    est = _vmem_tile_bytes(TH, H, W, Cin, Cmid, Cout, k2)
    vmem_limit = int(min(max(2 * est, 16 << 20), int(0.6 * vmem_cap)))

    Hp, Wp = H + 2 * h, W + 2 * h
    RA, WA = TH + 2 * h1, W + 2 * h1
    RC, WC = TH + 2, W + 2

    # ---- XLA-side prep: zero-padded NHWC image, lane-dense (cols*C last) -----
    # TODO(synk): this transpose+pad costs ~one extra read+write of x in HBM;
    # it could be folded into the producer / in-kernel masks if needed.
    x = jnp.transpose(x_nchw, (0, 2, 3, 1))
    xp = jnp.pad(x, ((0, 0), (h, h), (h, h), (0, 0))).reshape(N, Hp, Wp * Cin)

    # ---- kernel-layout weights (lane-tiled taps, block-diag PW, col masks) ---
    def tile_l(a, reps):                              # (r, C) -> (r, reps*C)
        return jnp.tile(a, (1, reps))

    def block_diag(w, reps):                          # (ci, co) -> (reps*ci, reps*co)
        ci, co = w.shape
        eye = jnp.eye(reps, dtype=w.dtype)
        return jnp.einsum("ab,ij->aibj", eye, w).reshape(reps * ci, reps * co)

    wdw1 = tile_l(params["w_dw1"], WA)
    bdw1 = tile_l(params["b_dw1"], WA)
    wpw1 = block_diag(params["w_pw1"], WA).astype(jnp.bfloat16)
    bpw1 = tile_l(params["b_pw1"], WA)
    wdw2 = tile_l(params["w_dw2"], WC)
    bdw2 = tile_l(params["b_dw2"], WC)
    wpw2 = block_diag(params["w_pw2"], WC).astype(jnp.bfloat16)
    bpw2 = tile_l(params["b_pw2"], WC)
    wdw3 = tile_l(params["w_dw3"], W)
    bdw3 = tile_l(params["b_dw3"], W)

    colA = jnp.repeat(jnp.arange(WA), Cmid)
    cmaskA = ((colA >= h1) & (colA < h1 + W)).astype(jnp.float32)[None, :]
    colC = jnp.repeat(jnp.arange(WC), Cout)
    cmaskC = ((colC >= 1) & (colC < 1 + W)).astype(jnp.float32)[None, :]

    # whole padded image per n (constant along the row-tile axis -> DMA'd once
    # per image); drop to single buffering when it would dominate the budget.
    img_shape = (pl.Squeezed(), Hp, Wp * Cin)
    img_map = lambda n, i: (n, 0, 0)
    img_bytes2 = 2 * _rup(Hp, 8) * _rup(Wp * Cin, 128) * 4
    if img_bytes2 > budget // 2:
        img_spec = pl.BlockSpec(img_shape, img_map, pipeline_mode=pl.Buffered(1))
    else:
        img_spec = pl.BlockSpec(img_shape, img_map)

    kern = functools.partial(_cib_kernel, TH=TH, H=H, W=W, Cin=Cin, Cmid=Cmid,
                             Cout=Cout, k2=k2, nT=nT, use_identity=use_identity)
    out = pl.pallas_call(
        kern,
        out_shape=jax.ShapeDtypeStruct((N, H, W * Cout), dtype),
        grid_spec=pltpu.PrefetchScalarGridSpec(
            num_scalar_prefetch=0,
            grid=(N, nT),
            in_specs=[
                img_spec,
                pl.BlockSpec((9, WA * Cin), lambda n, i: (0, 0)),
                pl.BlockSpec((1, WA * Cin), lambda n, i: (0, 0)),
                pl.BlockSpec((WA * Cin, WA * Cmid), lambda n, i: (0, 0)),
                pl.BlockSpec((1, WA * Cmid), lambda n, i: (0, 0)),
                pl.BlockSpec((k2 * k2, WC * Cmid), lambda n, i: (0, 0)),
                pl.BlockSpec((1, WC * Cmid), lambda n, i: (0, 0)),
                pl.BlockSpec((WC * Cmid, WC * Cout), lambda n, i: (0, 0)),
                pl.BlockSpec((1, WC * Cout), lambda n, i: (0, 0)),
                pl.BlockSpec((9, W * Cout), lambda n, i: (0, 0)),
                pl.BlockSpec((1, W * Cout), lambda n, i: (0, 0)),
                pl.BlockSpec((1, WA * Cmid), lambda n, i: (0, 0)),
                pl.BlockSpec((1, WC * Cout), lambda n, i: (0, 0)),
            ],
            out_specs=pl.BlockSpec((pl.Squeezed(), TH, W * Cout),
                                   lambda n, i: (n, i, 0)),
            scratch_shapes=[
                pltpu.VMEM((RA, WA * Cmid), jnp.float32),   # b (stage-2 output)
                pltpu.VMEM((RC, WC * Cout), jnp.float32),   # d (stage-4 output)
            ]),
        compiler_params=pltpu.CompilerParams(
            # batch axis "parallel" only: multi-core sharding stays on batch
            dimension_semantics=("parallel", "arbitrary"),
            vmem_limit_bytes=vmem_limit),
    )(xp, wdw1, bdw1, wpw1, bpw1, wdw2, bdw2, wpw2, bpw2, wdw3, bdw3,
      cmaskA, cmaskC)

    out = out.reshape(N, H, W, Cout)
    return jnp.transpose(out, (0, 3, 1, 2))           # back to NCHW


# ----------------------------------------------------------------------------
# Deterministic parameter construction (BN folded, inference mode)
# ----------------------------------------------------------------------------
def _fold_dw_params(key, channels, k, eps=1e-5):
    ks = jax.random.split(key, 5)
    w = 0.3 * jax.random.normal(ks[0], (channels, k, k), jnp.float32)
    g = 1.0 + 0.1 * jax.random.normal(ks[1], (channels,), jnp.float32)
    beta = 0.1 * jax.random.normal(ks[2], (channels,), jnp.float32)
    mean = 0.1 * jax.random.normal(ks[3], (channels,), jnp.float32)
    var = 1.0 + 0.5 * jax.random.uniform(ks[4], (channels,), jnp.float32)
    s = g / jnp.sqrt(var + eps)
    return w * s[:, None, None], beta - mean * s      # (C,k,k), (C,)


def _fold_pw_params(key, cin, cout, eps=1e-5):
    ks = jax.random.split(key, 5)
    w = 0.3 * jax.random.normal(ks[0], (cout, cin), jnp.float32)
    g = 1.0 + 0.1 * jax.random.normal(ks[1], (cout,), jnp.float32)
    beta = 0.1 * jax.random.normal(ks[2], (cout,), jnp.float32)
    mean = 0.1 * jax.random.normal(ks[3], (cout,), jnp.float32)
    var = 1.0 + 0.5 * jax.random.uniform(ks[4], (cout,), jnp.float32)
    s = g / jnp.sqrt(var + eps)
    return (w * s[:, None]).T, beta - mean * s        # (Cin,Cout), (Cout,)


def _dw_taps(w_ckk):
    C, k, _ = w_ckk.shape
    return jnp.transpose(w_ckk, (1, 2, 0)).reshape(k * k, C)   # row = kh*k+kw


def init_cib_params(key, in_channels, out_channels, expansion_rate=0.5,
                    large_kernel=False, eps=1e-5):
    mid = 2 * int(out_channels * expansion_rate)
    ks = jax.random.split(key, 6)
    wdw1, bdw1 = _fold_dw_params(ks[0], in_channels, 3, eps)
    wpw1, bpw1 = _fold_pw_params(ks[1], in_channels, mid, eps)
    if large_kernel:
        # RepVGGDW: DW7(+BN) + DW3(+BN) summed, then SiLU -> reparameterise
        # into one 7x7 conv (exactly RepVGGDW.fuse()).
        w7, b7 = _fold_dw_params(ks[2], mid, 7, eps)
        w3, b3 = _fold_dw_params(ks[3], mid, 3, eps)
        wdw2 = w7 + jnp.pad(w3, ((0, 0), (2, 2), (2, 2)))
        bdw2 = b7 + b3
    else:
        wdw2, bdw2 = _fold_dw_params(ks[2], mid, 3, eps)
    wpw2, bpw2 = _fold_pw_params(ks[4], mid, out_channels, eps)
    wdw3, bdw3 = _fold_dw_params(ks[5], out_channels, 3, eps)
    return {
        "w_dw1": _dw_taps(wdw1), "b_dw1": bdw1.reshape(1, -1),
        "w_pw1": wpw1,           "b_pw1": bpw1.reshape(1, -1),
        "w_dw2": _dw_taps(wdw2), "b_dw2": bdw2.reshape(1, -1),
        "w_pw2": wpw2,           "b_pw2": bpw2.reshape(1, -1),
        "w_dw3": _dw_taps(wdw3), "b_dw3": bdw3.reshape(1, -1),
    }


# ----------------------------------------------------------------------------
# Pure-JAX reference (same folded parameters, unfused stage-by-stage, f32)
# ----------------------------------------------------------------------------
def _silu_ref(x):
    return x * jax.nn.sigmoid(x)


def _dwconv_ref(x_nhwc, taps, bias, k):
    C = x_nhwc.shape[-1]
    w = taps.reshape(k, k, 1, C)                       # HWIO depthwise
    p = k // 2
    y = jax.lax.conv_general_dilated(
        x_nhwc, w, window_strides=(1, 1), padding=[(p, p), (p, p)],
        dimension_numbers=("NHWC", "HWIO", "NHWC"),
        feature_group_count=C, precision=jax.lax.Precision.HIGHEST)
    return y + bias.reshape(1, 1, 1, C)


def cib_reference(x_nchw, params, *, use_identity):
    k2 = int(round(params["w_dw2"].shape[0] ** 0.5))
    x = jnp.transpose(x_nchw, (0, 2, 3, 1))
    a = _silu_ref(_dwconv_ref(x, params["w_dw1"], params["b_dw1"], 3))
    b = _silu_ref(jnp.einsum("nhwc,cd->nhwd", a, params["w_pw1"])
                  + params["b_pw1"].reshape(1, 1, 1, -1))
    c = _silu_ref(_dwconv_ref(b, params["w_dw2"], params["b_dw2"], k2))
    d = _silu_ref(jnp.einsum("nhwc,cd->nhwd", c, params["w_pw2"])
                  + params["b_pw2"].reshape(1, 1, 1, -1))
    e = _silu_ref(_dwconv_ref(d, params["w_dw3"], params["b_dw3"], 3))
    out = e + x if use_identity else e
    return jnp.transpose(out, (0, 3, 1, 2))


if __name__ == "__main__":
    key = jax.random.PRNGKey(0)
    k_x, k_p1, k_p2, k_p3 = jax.random.split(key, 4)

    N, C, H, W = 2, 8, 16, 16
    x = jax.random.normal(k_x, (N, C, H, W), jnp.float32)

    configs = [
        # (large_kernel, cin, cout, use_identity, param key)
        (True,  C, C,  True,  k_p1),
        (False, C, C,  True,  k_p2),
        (False, C, 16, False, k_p3),
    ]
    for large_kernel, cin, cout, use_identity, k_p in configs:
        params = init_cib_params(k_p, cin, cout, expansion_rate=0.5,
                                 large_kernel=large_kernel)
        out = cib_pallas(x, params, use_identity=use_identity)
        out = jax.block_until_ready(out)
        ref = cib_reference(x, params, use_identity=use_identity)
        assert out.shape == (N, cout, H, W), out.shape
        if not np.allclose(np.asarray(out), np.asarray(ref), rtol=2e-2, atol=2e-2):
            err = float(np.max(np.abs(np.asarray(out) - np.asarray(ref))))
            raise AssertionError(
                f"Pallas CiB mismatch (large_kernel={large_kernel}, "
                f"cin={cin}, cout={cout}), max_abs_err={err}")

    print("KERNEL_OK")
</pallas_src>

<mosaic_0001>
module attributes {stable_mosaic.version = 11 : i64} {
  func.func @_cib_kernel(%arg0: i32, %arg1: i32, %arg2: memref<1x26x208xf32, #tpu.memory_space<vmem>>, %arg3: memref<9x192xf32, #tpu.memory_space<vmem>>, %arg4: memref<1x192xf32, #tpu.memory_space<vmem>>, %arg5: memref<192x192xbf16, #tpu.memory_space<vmem>>, %arg6: memref<1x192xf32, #tpu.memory_space<vmem>>, %arg7: memref<49x144xf32, #tpu.memory_space<vmem>>, %arg8: memref<1x144xf32, #tpu.memory_space<vmem>>, %arg9: memref<144x144xbf16, #tpu.memory_space<vmem>>, %arg10: memref<1x144xf32, #tpu.memory_space<vmem>>, %arg11: memref<9x128xf32, #tpu.memory_space<vmem>>, %arg12: memref<1x128xf32, #tpu.memory_space<vmem>>, %arg13: memref<1x192xf32, #tpu.memory_space<vmem>>, %arg14: memref<1x144xf32, #tpu.memory_space<vmem>>, %arg15: memref<1x16x128xf32, #tpu.memory_space<vmem>>, %arg16: memref<24x192xf32, #tpu.memory_space<vmem>>, %arg17: memref<18x144xf32, #tpu.memory_space<vmem>>) attributes {dimension_semantics = [#tpu.dimension_semantics<parallel>, #tpu.dimension_semantics<arbitrary>], iteration_bounds = array<i64: 2, 1>, scalar_prefetch = 0 : i64, scratch_operands = 2 : i64, tpu.core_type = #tpu.core_type<tc>, window_params = [{transform_indices = @transform_0, window_bounds = array<i64: 1, 26, 208>}, {pipeline_mode = #tpu.pipeline_mode<synchronous>, transform_indices = @transform_1, window_bounds = array<i64: 9, 192>}, {pipeline_mode = #tpu.pipeline_mode<synchronous>, transform_indices = @transform_2, window_bounds = array<i64: 1, 192>}, {pipeline_mode = #tpu.pipeline_mode<synchronous>, transform_indices = @transform_3, window_bounds = array<i64: 192, 192>}, {pipeline_mode = #tpu.pipeline_mode<synchronous>, transform_indices = @transform_4, window_bounds = array<i64: 1, 192>}, {pipeline_mode = #tpu.pipeline_mode<synchronous>, transform_indices = @transform_5, window_bounds = array<i64: 49, 144>}, {pipeline_mode = #tpu.pipeline_mode<synchronous>, transform_indices = @transform_6, window_bounds = array<i64: 1, 144>}, {pipeline_mode = #tpu.pipeline_mode<synchronous>, transform_indices = @transform_7, window_bounds = array<i64: 144, 144>}, {pipeline_mode = #tpu.pipeline_mode<synchronous>, transform_indices = @transform_8, window_bounds = array<i64: 1, 144>}, {pipeline_mode = #tpu.pipeline_mode<synchronous>, transform_indices = @transform_9, window_bounds = array<i64: 9, 128>}, {pipeline_mode = #tpu.pipeline_mode<synchronous>, transform_indices = @transform_10, window_bounds = array<i64: 1, 128>}, {pipeline_mode = #tpu.pipeline_mode<synchronous>, transform_indices = @transform_11, window_bounds = array<i64: 1, 192>}, {pipeline_mode = #tpu.pipeline_mode<synchronous>, transform_indices = @transform_12, window_bounds = array<i64: 1, 144>}, {transform_indices = @transform_13, window_bounds = array<i64: 1, 16, 128>}]} {
    %c0 = arith.constant 0 : index
    %c0_0 = arith.constant 0 : index
    %0 = vector.load %arg3[%c0, %c0_0] : memref<9x192xf32, #tpu.memory_space<vmem>>, vector<1x192xf32>
    %c0_1 = arith.constant 0 : index
    %c0_2 = arith.constant 0 : index
    %c0_3 = arith.constant 0 : index
    %1 = vector.load %arg2[%c0_1, %c0_2, %c0_3] : memref<1x26x208xf32, #tpu.memory_space<vmem>>, vector<1x24x192xf32>
    %2 = vector.shape_cast %1 : vector<1x24x192xf32> to vector<24x192xf32>
    %3 = vector.broadcast %0 : vector<1x192xf32> to vector<24x192xf32>
    %4 = arith.mulf %2, %3 : vector<24x192xf32>
    %c1 = arith.constant 1 : index
    %c0_4 = arith.constant 0 : index
    %5 = vector.load %arg3[%c1, %c0_4] : memref<9x192xf32, #tpu.memory_space<vmem>>, vector<1x192xf32>
    %c0_5 = arith.constant 0 : index
    %c0_6 = arith.constant 0 : index
    %c8 = arith.constant 8 : index
    %6 = vector.load %arg2[%c0_5, %c0_6, %c8] : memref<1x26x208xf32, #tpu.memory_space<vmem>>, vector<1x24x192xf32>
    %7 = vector.shape_cast %6 : vector<1x24x192xf32> to vector<24x192xf32>
    %8 = vector.broadcast %5 : vector<1x192xf32> to vector<24x192xf32>
    %9 = arith.mulf %7, %8 : vector<24x192xf32>
    %10 = arith.addf %4, %9 : vector<24x192xf32>
    %c2 = arith.constant 2 : index
    %c0_7 = arith.constant 0 : index
    %11 = vector.load %arg3[%c2, %c0_7] : memref<9x192xf32, #tpu.memory_space<vmem>>, vector<1x192xf32>
    %c0_8 = arith.constant 0 : index
    %c0_9 = arith.constant 0 : index
    %c16 = arith.constant 16 : index
    %12 = vector.load %arg2[%c0_8, %c0_9, %c16] : memref<1x26x208xf32, #tpu.memory_space<vmem>>, vector<1x24x192xf32>
    %13 = vector.shape_cast %12 : vector<1x24x192xf32> to vector<24x192xf32>
    %14 = vector.broadcast %11 : vector<1x192xf32> to vector<24x192xf32>
    %15 = arith.mulf %13, %14 : vector<24x192xf32>
    %16 = arith.addf %10, %15 : vector<24x192xf32>
    %c3 = arith.constant 3 : index
    %c0_10 = arith.constant 0 : index
    %17 = vector.load %arg3[%c3, %c0_10] : memref<9x192xf32, #tpu.memory_space<vmem>>, vector<1x192xf32>
    %c0_11 = arith.constant 0 : index
    %c1_12 = arith.constant 1 : index
    %c0_13 = arith.constant 0 : index
    %18 = vector.load %arg2[%c0_11, %c1_12, %c0_13] : memref<1x26x208xf32, #tpu.memory_space<vmem>>, vector<1x24x192xf32>
    %19 = vector.shape_cast %18 : vector<1x24x192xf32> to vector<24x192xf32>
    %20 = vector.broadcast %17 : vector<1x192xf32> to vector<24x192xf32>
    %21 = arith.mulf %19, %20 : vector<24x192xf32>
    %22 = arith.addf %16, %21 : vector<24x192xf32>
    %c4 = arith.constant 4 : index
    %c0_14 = arith.constant 0 : index
    %23 = vector.load %arg3[%c4, %c0_14] : memref<9x192xf32, #tpu.memory_space<vmem>>, vector<1x192xf32>
    %c0_15 = arith.constant 0 : index
    %c1_16 = arith.constant 1 : index
    %c8_17 = arith.constant 8 : index
    %24 = vector.load %arg2[%c0_15, %c1_16, %c8_17] : memref<1x26x208xf32, #tpu.memory_space<vmem>>, vector<1x24x192xf32>
    %25 = vector.shape_cast %24 : vector<1x24x192xf32> to vector<24x192xf32>
    %26 = vector.broadcast %23 : vector<1x192xf32> to vector<24x192xf32>
    %27 = arith.mulf %25, %26 : vector<24x192xf32>
    %28 = arith.addf %22, %27 : vector<24x192xf32>
    %c5 = arith.constant 5 : index
    %c0_18 = arith.constant 0 : index
    %29 = vector.load %arg3[%c5, %c0_18] : memref<9x192xf32, #tpu.memory_space<vmem>>, vector<1x192xf32>
    %c0_19 = arith.constant 0 : index
    %c1_20 = arith.constant 1 : index
    %c16_21 = arith.constant 16 : index
    %30 = vector.load %arg2[%c0_19, %c1_20, %c16_21] : memref<1x26x208xf32, #tpu.memory_space<vmem>>, vector<1x24x192xf32>
    %31 = vector.shape_cast %30 : vector<1x24x192xf32> to vector<24x192xf32>
    %32 = vector.broadcast %29 : vector<1x192xf32> to vector<24x192xf32>
    %33 = arith.mulf %31, %32 : vector<24x192xf32>
    %34 = arith.addf %28, %33 : vector<24x192xf32>
    %c6 = arith.constant 6 : index
    %c0_22 = arith.constant 0 : index
    %35 = vector.load %arg3[%c6, %c0_22] : memref<9x192xf32, #tpu.memory_space<vmem>>, vector<1x192xf32>
    %c0_23 = arith.constant 0 : index
    %c2_24 = arith.constant 2 : index
    %c0_25 = arith.constant 0 : index
    %36 = vector.load %arg2[%c0_23, %c2_24, %c0_25] : memref<1x26x208xf32, #tpu.memory_space<vmem>>, vector<1x24x192xf32>
    %37 = vector.shape_cast %36 : vector<1x24x192xf32> to vector<24x192xf32>
    %38 = vector.broadcast %35 : vector<1x192xf32> to vector<24x192xf32>
    %39 = arith.mulf %37, %38 : vector<24x192xf32>
    %40 = arith.addf %34, %39 : vector<24x192xf32>
    %c7 = arith.constant 7 : index
    %c0_26 = arith.constant 0 : index
    %41 = vector.load %arg3[%c7, %c0_26] : memref<9x192xf32, #tpu.memory_space<vmem>>, vector<1x192xf32>
    %c0_27 = arith.constant 0 : index
    %c2_28 = arith.constant 2 : index
    %c8_29 = arith.constant 8 : index
    %42 = vector.load %arg2[%c0_27, %c2_28, %c8_29] : memref<1x26x208xf32, #tpu.memory_space<vmem>>, vector<1x24x192xf32>
    %43 = vector.shape_cast %42 : vector<1x24x192xf32> to vector<24x192xf32>
    %44 = vector.broadcast %41 : vector<1x192xf32> to vector<24x192xf32>
    %45 = arith.mulf %43, %44 : vector<24x192xf32>
    %46 = arith.addf %40, %45 : vector<24x192xf32>
    %c8_30 = arith.constant 8 : index
    %c0_31 = arith.constant 0 : index
    %47 = vector.load %arg3[%c8_30, %c0_31] : memref<9x192xf32, #tpu.memory_space<vmem>>, vector<1x192xf32>
    %c0_32 = arith.constant 0 : index
    %c2_33 = arith.constant 2 : index
    %c16_34 = arith.constant 16 : index
    %48 = vector.load %arg2[%c0_32, %c2_33, %c16_34] : memref<1x26x208xf32, #tpu.memory_space<vmem>>, vector<1x24x192xf32>
    %49 = vector.shape_cast %48 : vector<1x24x192xf32> to vector<24x192xf32>
    %50 = vector.broadcast %47 : vector<1x192xf32> to vector<24x192xf32>
    %51 = arith.mulf %49, %50 : vector<24x192xf32>
    %52 = arith.addf %46, %51 : vector<24x192xf32>
    %c0_35 = arith.constant 0 : index
    %c0_36 = arith.constant 0 : index
    %53 = vector.load %arg4[%c0_35, %c0_36] : memref<1x192xf32, #tpu.memory_space<vmem>>, vector<1x192xf32>
    %54 = vector.broadcast %53 : vector<1x192xf32> to vector<24x192xf32>
    %55 = arith.addf %52, %54 : vector<24x192xf32>
    %cst = arith.constant 0.000000e+00 : f32
    %56 = vector.broadcast %cst : f32 to vector<24x192xf32>
    %57 = arith.subf %56, %55 : vector<24x192xf32>
    %58 = math.exp %57 : vector<24x192xf32>
    %cst_37 = arith.constant 1.000000e+00 : f32
    %59 = vector.broadcast %cst_37 : f32 to vector<24x192xf32>
    %60 = arith.addf %59, %58 : vector<24x192xf32>
    %61 = tpu.reciprocal %60 {approx = true} : vector<24x192xf32> -> vector<24x192xf32>
    %62 = arith.mulf %55, %61 : vector<24x192xf32>
    %63 = arith.truncf %62 : vector<24x192xf32> to vector<24x192xbf16>
    %c0_38 = arith.constant 0 : index
    %c0_39 = arith.constant 0 : index
    %64 = vector.load %arg5[%c0_38, %c0_39] : memref<192x192xbf16, #tpu.memory_space<vmem>>, vector<192x192xbf16>
    %cst_40 = arith.constant dense<0.000000e+00> : vector<24x192xf32>
    %65 = tpu.matmul %63, %64, %cst_40 {dimension_numbers = #tpu.dot_dimension_numbers<[1], [0], [0], [1], [0, 0, 1, 1], [], []>} : vector<24x192xbf16>, vector<192x192xbf16>, vector<24x192xf32> -> vector<24x192xf32>
    %c0_41 = arith.constant 0 : index
    %c0_42 = arith.constant 0 : index
    %66 = vector.load %arg6[%c0_41, %c0_42] : memref<1x192xf32, #tpu.memory_space<vmem>>, vector<1x192xf32>
    %67 = vector.broadcast %66 : vector<1x192xf32> to vector<24x192xf32>
    %68 = arith.addf %65, %67 : vector<24x192xf32>
    %69 = tpu.iota {dimensions = array<i32: 0>} : vector<24x1xi32>
    %c-4_i32 = arith.constant -4 : i32
    %70 = vector.broadcast %c-4_i32 : i32 to vector<24x1xi32>
    %71 = arith.addi %70, %69 : vector<24x1xi32>
    %c0_i32 = arith.constant 0 : i32
    %72 = vector.broadcast %c0_i32 : i32 to vector<24x1xi32>
    %73 = arith.cmpi sge, %71, %72 : vector<24x1xi32>
    %c16_i32 = arith.constant 16 : i32
    %74 = vector.broadcast %c16_i32 : i32 to vector<24x1xi32>
    %75 = arith.cmpi slt, %71, %74 : vector<24x1xi32>
    %76 = arith.andi %73, %75 : vector<24x1xi1>
    %77 = arith.extui %76 : vector<24x1xi1> to vector<24x1xi32>
    %78 = arith.sitofp %77 : vector<24x1xi32> to vector<24x1xf32>
    %cst_43 = arith.constant 0.000000e+00 : f32
    %79 = vector.broadcast %cst_43 : f32 to vector<24x192xf32>
    %80 = arith.subf %79, %68 : vector<24x192xf32>
    %81 = math.exp %80 : vector<24x192xf32>
    %cst_44 = arith.constant 1.000000e+00 : f32
    %82 = vector.broadcast %cst_44 : f32 to vector<24x192xf32>
    %83 = arith.addf %82, %81 : vector<24x192xf32>
    %84 = tpu.reciprocal %83 {approx = true} : vector<24x192xf32> -> vector<24x192xf32>
    %85 = arith.mulf %68, %84 : vector<24x192xf32>
    %c0_45 = arith.constant 0 : index
    %c0_46 = arith.constant 0 : index
    %86 = vector.load %arg13[%c0_45, %c0_46] : memref<1x192xf32, #tpu.memory_space<vmem>>, vector<1x192xf32>
    %87 = vector.broadcast %78 : vector<24x1xf32> to vector<24x192xf32>
    %88 = vector.broadcast %86 : vector<1x192xf32> to vector<24x192xf32>
    %89 = arith.mulf %87, %88 : vector<24x192xf32>
    %90 = arith.mulf %85, %89 : vector<24x192xf32>
    %c0_47 = arith.constant 0 : index
    %c0_48 = arith.constant 0 : index
    %91 = vector.load %arg16[%c0_47, %c0_48] : memref<24x192xf32, #tpu.memory_space<vmem>>, vector<24x192xf32>
    tpu.vector_store %arg16[%c0_47, %c0_48], %90 {strides = array<i32>} : memref<24x192xf32, #tpu.memory_space<vmem>>, vector<24x192xf32>,
    %c0_49 = arith.constant 0 : index
    %c0_50 = arith.constant 0 : index
    %92 = vector.load %arg7[%c0_49, %c0_50] : memref<49x144xf32, #tpu.memory_space<vmem>>, vector<1x144xf32>
    %c0_51 = arith.constant 0 : index
    %c0_52 = arith.constant 0 : index
    %93 = vector.load %arg16[%c0_51, %c0_52] : memref<24x192xf32, #tpu.memory_space<vmem>>, vector<18x144xf32>
    %94 = vector.broadcast %92 : vector<1x144xf32> to vector<18x144xf32>
    %95 = arith.mulf %93, %94 : vector<18x144xf32>
    %c1_53 = arith.constant 1 : index
    %c0_54 = arith.constant 0 : index
    %96 = vector.load %arg7[%c1_53, %c0_54] : memref<49x144xf32, #tpu.memory_space<vmem>>, vector<1x144xf32>
    %c0_55 = arith.constant 0 : index
    %c8_56 = arith.constant 8 : index
    %97 = vector.load %arg16[%c0_55, %c8_56] : memref<24x192xf32, #tpu.memory_space<vmem>>, vector<18x144xf32>
    %98 = vector.broadcast %96 : vector<1x144xf32> to vector<18x144xf32>
    %99 = arith.mulf %97, %98 : vector<18x144xf32>
    %100 = arith.addf %95, %99 : vector<18x144xf32>
    %c2_57 = arith.constant 2 : index
    %c0_58 = arith.constant 0 : index
    %101 = vector.load %arg7[%c2_57, %c0_58] : memref<49x144xf32, #tpu.memory_space<vmem>>, vector<1x144xf32>
    %c0_59 = arith.constant 0 : index
    %c16_60 = arith.constant 16 : index
    %102 = vector.load %arg16[%c0_59, %c16_60] : memref<24x192xf32, #tpu.memory_space<vmem>>, vector<18x144xf32>
    %103 = vector.broadcast %101 : vector<1x144xf32> to vector<18x144xf32>
    %104 = arith.mulf %102, %103 : vector<18x144xf32>
    %105 = arith.addf %100, %104 : vector<18x144xf32>
    %c3_61 = arith.constant 3 : index
    %c0_62 = arith.constant 0 : index
    %106 = vector.load %arg7[%c3_61, %c0_62] : memref<49x144xf32, #tpu.memory_space<vmem>>, vector<1x144xf32>
    %c0_63 = arith.constant 0 : index
    %c24 = arith.constant 24 : index
    %107 = vector.load %arg16[%c0_63, %c24] : memref<24x192xf32, #tpu.memory_space<vmem>>, vector<18x144xf32>
    %108 = vector.broadcast %106 : vector<1x144xf32> to vector<18x144xf32>
    %109 = arith.mulf %107, %108 : vector<18x144xf32>
    %110 = arith.addf %105, %109 : vector<18x144xf32>
    %c4_64 = arith.constant 4 : index
    %c0_65 = arith.constant 0 : index
    %111 = vector.load %arg7[%c4_64, %c0_65] : memref<49x144xf32, #tpu.memory_space<vmem>>, vector<1x144xf32>
    %c0_66 = arith.constant 0 : index
    %c32 = arith.constant 32 : index
    %112 = vector.load %arg16[%c0_66, %c32] : memref<24x192xf32, #tpu.memory_space<vmem>>, vector<18x144xf32>
    %113 = vector.broadcast %111 : vector<1x144xf32> to vector<18x144xf32>
    %114 = arith.mulf %112, %113 : vector<18x144xf32>
    %115 = arith.addf %110, %114 : vector<18x144xf32>
    %c5_67 = arith.constant 5 : index
    %c0_68 = arith.constant 0 : index
    %116 = vector.load %arg7[%c5_67, %c0_68] : memref<49x144xf32, #tpu.memory_space<vmem>>, vector<1x144xf32>
    %c0_69 = arith.constant 0 : index
    %c40 = arith.constant 40 : index
    %117 = vector.load %arg16[%c0_69, %c40] : memref<24x192xf32, #tpu.memory_space<vmem>>, vector<18x144xf32>
    %118 = vector.broadcast %116 : vector<1x144xf32> to vector<18x144xf32>
    %119 = arith.mulf %117, %118 : vector<18x144xf32>
    %120 = arith.addf %115, %119 : vector<18x144xf32>
    %c6_70 = arith.constant 6 : index
    %c0_71 = arith.constant 0 : index
    %121 = vector.load %arg7[%c6_70, %c0_71] : memref<49x144xf32, #tpu.memory_space<vmem>>, vector<1x144xf32>
    %c0_72 = arith.constant 0 : index
    %c48 = arith.constant 48 : index
    %122 = vector.load %arg16[%c0_72, %c48] : memref<24x192xf32, #tpu.memory_space<vmem>>, vector<18x144xf32>
    %123 = vector.broadcast %121 : vector<1x144xf32> to vector<18x144xf32>
    %124 = arith.mulf %122, %123 : vector<18x144xf32>
    %125 = arith.addf %120, %124 : vector<18x144xf32>
    %c7_73 = arith.constant 7 : index
    %c0_74 = arith.constant 0 : index
    %126 = vector.load %arg7[%c7_73, %c0_74] : memref<49x144xf32, #tpu.memory_space<vmem>>, vector<1x144xf32>
    %c1_75 = arith.constant 1 : index
    %c0_76 = arith.constant 0 : index
    %127 = vector.load %arg16[%c1_75, %c0_76] : memref<24x192xf32, #tpu.memory_space<vmem>>, vector<18x144xf32>
    %128 = vector.broadcast %126 : vector<1x144xf32> to vector<18x144xf32>
    %129 = arith.mulf %127, %128 : vector<18x144xf32>
    %130 = arith.addf %125, %129 : vector<18x144xf32>
    %c8_77 = arith.constant 8 : index
    %c0_78 = arith.constant 0 : index
    %131 = vector.load %arg7[%c8_77, %c0_78] : memref<49x144xf32, #tpu.memory_space<vmem>>, vector<1x144xf32>
    %c1_79 = arith.constant 1 : index
    %c8_80 = arith.constant 8 : index
    %132 = vector.load %arg16[%c1_79, %c8_80] : memref<24x192xf32, #tpu.memory_space<vmem>>, vector<18x144xf32>
    %133 = vector.broadcast %131 : vector<1x144xf32> to vector<18x144xf32>
    %134 = arith.mulf %132, %133 : vector<18x144xf32>
    %135 = arith.addf %130, %134 : vector<18x144xf32>
    %c9 = arith.constant 9 : index
    %c0_81 = arith.constant 0 : index
    %136 = vector.load %arg7[%c9, %c0_81] : memref<49x144xf32, #tpu.memory_space<vmem>>, vector<1x144xf32>
    %c1_82 = arith.constant 1 : index
    %c16_83 = arith.constant 16 : index
    %137 = vector.load %arg16[%c1_82, %c16_83] : memref<24x192xf32, #tpu.memory_space<vmem>>, vector<18x144xf32>
    %138 = vector.broadcast %136 : vector<1x144xf32> to vector<18x144xf32>
    %139 = arith.mulf %137, %138 : vector<18x144xf32>
    %140 = arith.addf %135, %139 : vector<18x144xf32>
    %c10 = arith.constant 10 : index
    %c0_84 = arith.constant 0 : index
    %141 = vector.load %arg7[%c10, %c0_84] : memref<49x144xf32, #tpu.memory_space<vmem>>, vector<1x144xf32>
    %c1_85 = arith.constant 1 : index
    %c24_86 = arith.constant 24 : index
    %142 = vector.load %arg16[%c1_85, %c24_86] : memref<24x192xf32, #tpu.memory_space<vmem>>, vector<18x144xf32>
    %143 = vector.broadcast %141 : vector<1x144xf32> to vector<18x144xf32>
    %144 = arith.mulf %142, %143 : vector<18x144xf32>
    %145 = arith.addf %140, %144 : vector<18x144xf32>
    %c11 = arith.constant 11 : index
    %c0_87 = arith.constant 0 : index
    %146 = vector.load %arg7[%c11, %c0_87] : memref<49x144xf32, #tpu.memory_space<vmem>>, vector<1x144xf32>
    %c1_88 = arith.constant 1 : index
    %c32_89 = arith.constant 32 : index
    %147 = vector.load %arg16[%c1_88, %c32_89] : memref<24x192xf32, #tpu.memory_space<vmem>>, vector<18x144xf32>
    %148 = vector.broadcast %146 : vector<1x144xf32> to vector<18x144xf32>
    %149 = arith.mulf %147, %148 : vector<18x144xf32>
    %150 = arith.addf %145, %149 : vector<18x144xf32>
    %c12 = arith.constant 12 : index
    %c0_90 = arith.constant 0 : index
    %151 = vector.load %arg7[%c12, %c0_90] : memref<49x144xf32, #tpu.memory_space<vmem>>, vector<1x144xf32>
    %c1_91 = arith.constant 1 : index
    %c40_92 = arith.constant 40 : index
    %152 = vector.load %arg16[%c1_91, %c40_92] : memref<24x192xf32, #tpu.memory_space<vmem>>, vector<18x144xf32>
    %153 = vector.broadcast %151 : vector<1x144xf32> to vector<18x144xf32>
    %154 = arith.mulf %152, %153 : vector<18x144xf32>
    %155 = arith.addf %150, %154 : vector<18x144xf32>
    %c13 = arith.constant 13 : index
    %c0_93 = arith.constant 0 : index
    %156 = vector.load %arg7[%c13, %c0_93] : memref<49x144xf32, #tpu.memory_space<vmem>>, vector<1x144xf32>
    %c1_94 = arith.constant 1 : index
    %c48_95 = arith.constant 48 : index
    %157 = vector.load %arg16[%c1_94, %c48_95] : memref<24x192xf32, #tpu.memory_space<vmem>>, vector<18x144xf32>
    %158 = vector.broadcast %156 : vector<1x144xf32> to vector<18x144xf32>
    %159 = arith.mulf %157, %158 : vector<18x144xf32>
    %160 = arith.addf %155, %159 : vector<18x144xf32>
    %c14 = arith.constant 14 : index
    %c0_96 = arith.constant 0 : index
    %161 = vector.load %arg7[%c14, %c0_96] : memref<49x144xf32, #tpu.memory_space<vmem>>, vector<1x144xf32>
    %c2_97 = arith.constant 2 : index
    %c0_98 = arith.constant 0 : index
    %162 = vector.load %arg16[%c2_97, %c0_98] : memref<24x192xf32, #tpu.memory_space<vmem>>, vector<18x144xf32>
    %163 = vector.broadcast %161 : vector<1x144xf32> to vector<18x144xf32>
    %164 = arith.mulf %162, %163 : vector<18x144xf32>
    %165 = arith.addf %160, %164 : vector<18x144xf32>
    %c15 = arith.constant 15 : index
    %c0_99 = arith.constant 0 : index
    %166 = vector.load %arg7[%c15, %c0_99] : memref<49x144xf32, #tpu.memory_space<vmem>>, vector<1x144xf32>
    %c2_100 = arith.constant 2 : index
    %c8_101 = arith.constant 8 : index
    %167 = vector.load %arg16[%c2_100, %c8_101] : memref<24x192xf32, #tpu.memory_space<vmem>>, vector<18x144xf32>
    %168 = vector.broadcast %166 : vector<1x144xf32> to vector<18x144xf32>
    %169 = arith.mulf %167, %168 : vector<18x144xf32>
    %170 = arith.addf %165, %169 : vector<18x144xf32>
    %c16_102 = arith.constant 16 : index
    %c0_103 = arith.constant 0 : index
    %171 = vector.load %arg7[%c16_102, %c0_103] : memref<49x144xf32, #tpu.memory_space<vmem>>, vector<1x144xf32>
    %c2_104 = arith.constant 2 : index
    %c16_105 = arith.constant 16 : index
    %172 = vector.load %arg16[%c2_104, %c16_105] : memref<24x192xf32, #tpu.memory_space<vmem>>, vector<18x144xf32>
    %173 = vector.broadcast %171 : vector<1x144xf32> to vector<18x144xf32>
    %174 = arith.mulf %172, %173 : vector<18x144xf32>
    %175 = arith.addf %170, %174 : vector<18x144xf32>
    %c17 = arith.constant 17 : index
    %c0_106 = arith.constant 0 : index
    %176 = vector.load %arg7[%c17, %c0_106] : memref<49x144xf32, #tpu.memory_space<vmem>>, vector<1x144xf32>
    %c2_107 = arith.constant 2 : index
    %c24_108 = arith.constant 24 : index
    %177 = vector.load %arg16[%c2_107, %c24_108] : memref<24x192xf32, #tpu.memory_space<vmem>>, vector<18x144xf32>
    %178 = vector.broadcast %176 : vector<1x144xf32> to vector<18x144xf32>
    %179 = arith.mulf %177, %178 : vector<18x144xf32>
    %180 = arith.addf %175, %179 : vector<18x144xf32>
    %c18 = arith.constant 18 : index
    %c0_109 = arith.constant 0 : index
    %181 = vector.load %arg7[%c18, %c0_109] : memref<49x144xf32, #tpu.memory_space<vmem>>, vector<1x144xf32>
    %c2_110 = arith.constant 2 : index
    %c32_111 = arith.constant 32 : index
    %182 = vector.load %arg16[%c2_110, %c32_111] : memref<24x192xf32, #tpu.memory_space<vmem>>, vector<18x144xf32>
    %183 = vector.broadcast %181 : vector<1x144xf32> to vector<18x144xf32>
    %184 = arith.mulf %182, %183 : vector<18x144xf32>
    %185 = arith.addf %180, %184 : vector<18x144xf32>
    %c19 = arith.constant 19 : index
    %c0_112 = arith.constant 0 : index
    %186 = vector.load %arg7[%c19, %c0_112] : memref<49x144xf32, #tpu.memory_space<vmem>>, vector<1x144xf32>
    %c2_113 = arith.constant 2 : index
    %c40_114 = arith.constant 40 : index
    %187 = vector.load %arg16[%c2_113, %c40_114] : memref<24x192xf32, #tpu.memory_space<vmem>>, vector<18x144xf32>
    %188 = vector.broadcast %186 : vector<1x144xf32> to vector<18x144xf32>
    %189 = arith.mulf %187, %188 : vector<18x144xf32>
    %190 = arith.addf %185, %189 : vector<18x144xf32>
    %c20 = arith.constant 20 : index
    %c0_115 = arith.constant 0 : index
    %191 = vector.load %arg7[%c20, %c0_115] : memref<49x144xf32, #tpu.memory_space<vmem>>, vector<1x144xf32>
    %c2_116 = arith.constant 2 : index
    %c48_117 = arith.constant 48 : index
    %192 = vector.load %arg16[%c2_116, %c48_117] : memref<24x192xf32, #tpu.memory_space<vmem>>, vector<18x144xf32>
    %193 = vector.broadcast %191 : vector<1x144xf32> to vector<18x144xf32>
    %194 = arith.mulf %192, %193 : vector<18x144xf32>
    %195 = arith.addf %190, %194 : vector<18x144xf32>
    %c21 = arith.constant 21 : index
    %c0_118 = arith.constant 0 : index
    %196 = vector.load %arg7[%c21, %c0_118] : memref<49x144xf32, #tpu.memory_space<vmem>>, vector<1x144xf32>
    %c3_119 = arith.constant 3 : index
    %c0_120 = arith.constant 0 : index
    %197 = vector.load %arg16[%c3_119, %c0_120] : memref<24x192xf32, #tpu.memory_space<vmem>>, vector<18x144xf32>
    %198 = vector.broadcast %196 : vector<1x144xf32> to vector<18x144xf32>
    %199 = arith.mulf %197, %198 : vector<18x144xf32>
    %200 = arith.addf %195, %199 : vector<18x144xf32>
    %c22 = arith.constant 22 : index
    %c0_121 = arith.constant 0 : index
    %201 = vector.load %arg7[%c22, %c0_121] : memref<49x144xf32, #tpu.memory_space<vmem>>, vector<1x144xf32>
    %c3_122 = arith.constant 3 : index
    %c8_123 = arith.constant 8 : index
    %202 = vector.load %arg16[%c3_122, %c8_123] : memref<24x192xf32, #tpu.memory_space<vmem>>, vector<18x144xf32>
    %203 = vector.broadcast %201 : vector<1x144xf32> to vector<18x144xf32>
    %204 = arith.mulf %202, %203 : vector<18x144xf32>
    %205 = arith.addf %200, %204 : vector<18x144xf32>
    %c23 = arith.constant 23 : index
    %c0_124 = arith.constant 0 : index
    %206 = vector.load %arg7[%c23, %c0_124] : memref<49x144xf32, #tpu.memory_space<vmem>>, vector<1x144xf32>
    %c3_125 = arith.constant 3 : index
    %c16_126 = arith.constant 16 : index
    %207 = vector.load %arg16[%c3_125, %c16_126] : memref<24x192xf32, #tpu.memory_space<vmem>>, vector<18x144xf32>
    %208 = vector.broadcast %206 : vector<1x144xf32> to vector<18x144xf32>
    %209 = arith.mulf %207, %208 : vector<18x144xf32>
    %210 = arith.addf %205, %209 : vector<18x144xf32>
    %c24_127 = arith.constant 24 : index
    %c0_128 = arith.constant 0 : index
    %211 = vector.load %arg7[%c24_127, %c0_128] : memref<49x144xf32, #tpu.memory_space<vmem>>, vector<1x144xf32>
    %c3_129 = arith.constant 3 : index
    %c24_130 = arith.constant 24 : index
    %212 = vector.load %arg16[%c3_129, %c24_130] : memref<24x192xf32, #tpu.memory_space<vmem>>, vector<18x144xf32>
    %213 = vector.broadcast %211 : vector<1x144xf32> to vector<18x144xf32>
    %214 = arith.mulf %212, %213 : vector<18x144xf32>
    %215 = arith.addf %210, %214 : vector<18x144xf32>
    %c25 = arith.constant 25 : index
    %c0_131 = arith.constant 0 : index
    %216 = vector.load %arg7[%c25, %c0_131] : memref<49x144xf32, #tpu.memory_space<vmem>>, vector<1x144xf32>
    %c3_132 = arith.constant 3 : index
    %c32_133 = arith.constant 32 : index
    %217 = vector.load %arg16[%c3_132, %c32_133] : memref<24x192xf32, #tpu.memory_space<vmem>>, vector<18x144xf32>
    %218 = vector.broadcast %216 : vector<1x144xf32> to vector<18x144xf32>
    %219 = arith.mulf %217, %218 : vector<18x144xf32>
    %220 = arith.addf %215, %219 : vector<18x144xf32>
    %c26 = arith.constant 26 : index
    %c0_134 = arith.constant 0 : index
    %221 = vector.load %arg7[%c26, %c0_134] : memref<49x144xf32, #tpu.memory_space<vmem>>, vector<1x144xf32>
    %c3_135 = arith.constant 3 : index
    %c40_136 = arith.constant 40 : index
    %222 = vector.load %arg16[%c3_135, %c40_136] : memref<24x192xf32, #tpu.memory_space<vmem>>, vector<18x144xf32>
    %223 = vector.broadcast %221 : vector<1x144xf32> to vector<18x144xf32>
    %224 = arith.mulf %222, %223 : vector<18x144xf32>
    %225 = arith.addf %220, %224 : vector<18x144xf32>
    %c27 = arith.constant 27 : index
    %c0_137 = arith.constant 0 : index
    %226 = vector.load %arg7[%c27, %c0_137] : memref<49x144xf32, #tpu.memory_space<vmem>>, vector<1x144xf32>
    %c3_138 = arith.constant 3 : index
    %c48_139 = arith.constant 48 : index
    %227 = vector.load %arg16[%c3_138, %c48_139] : memref<24x192xf32, #tpu.memory_space<vmem>>, vector<18x144xf32>
    %228 = vector.broadcast %226 : vector<1x144xf32> to vector<18x144xf32>
    %229 = arith.mulf %227, %228 : vector<18x144xf32>
    %230 = arith.addf %225, %229 : vector<18x144xf32>
    %c28 = arith.constant 28 : index
    %c0_140 = arith.constant 0 : index
    %231 = vector.load %arg7[%c28, %c0_140] : memref<49x144xf32, #tpu.memory_space<vmem>>, vector<1x144xf32>
    %c4_141 = arith.constant 4 : index
    %c0_142 = arith.constant 0 : index
    %232 = vector.load %arg16[%c4_141, %c0_142] : memref<24x192xf32, #tpu.memory_space<vmem>>, vector<18x144xf32>
    %233 = vector.broadcast %231 : vector<1x144xf32> to vector<18x144xf32>
    %234 = arith.mulf %232, %233 : vector<18x144xf32>
    %235 = arith.addf %230, %234 : vector<18x144xf32>
    %c29 = arith.constant 29 : index
    %c0_143 = arith.constant 0 : index
    %236 = vector.load %arg7[%c29, %c0_143] : memref<49x144xf32, #tpu.memory_space<vmem>>, vector<1x144xf32>
    %c4_144 = arith.constant 4 : index
    %c8_145 = arith.constant 8 : index
    %237 = vector.load %arg16[%c4_144, %c8_145] : memref<24x192xf32, #tpu.memory_space<vmem>>, vector<18x144xf32>
    %238 = vector.broadcast %236 : vector<1x144xf32> to vector<18x144xf32>
    %239 = arith.mulf %237, %238 : vector<18x144xf32>
    %240 = arith.addf %235, %239 : vector<18x144xf32>
    %c30 = arith.constant 30 : index
    %c0_146 = arith.constant 0 : index
    %241 = vector.load %arg7[%c30, %c0_146] : memref<49x144xf32, #tpu.memory_space<vmem>>, vector<1x144xf32>
    %c4_147 = arith.constant 4 : index
    %c16_148 = arith.constant 16 : index
    %242 = vector.load %arg16[%c4_147, %c16_148] : memref<24x192xf32, #tpu.memory_space<vmem>>, vector<18x144xf32>
    %243 = vector.broadcast %241 : vector<1x144xf32> to vector<18x144xf32>
    %244 = arith.mulf %242, %243 : vector<18x144xf32>
    %245 = arith.addf %240, %244 : vector<18x144xf32>
    %c31 = arith.constant 31 : index
    %c0_149 = arith.constant 0 : index
    %246 = vector.load %arg7[%c31, %c0_149] : memref<49x144xf32, #tpu.memory_space<vmem>>, vector<1x144xf32>
    %c4_150 = arith.constant 4 : index
    %c24_151 = arith.constant 24 : index
    %247 = vector.load %arg16[%c4_150, %c24_151] : memref<24x192xf32, #tpu.memory_space<vmem>>, vector<18x144xf32>
    %248 = vector.broadcast %246 : vector<1x144xf32> to vector<18x144xf32>
    %249 = arith.mulf %247, %248 : vector<18x144xf32>
    %250 = arith.addf %245, %249 : vector<18x144xf32>
    %c32_152 = arith.constant 32 : index
    %c0_153 = arith.constant 0 : index
    %251 = vector.load %arg7[%c32_152, %c0_153] : memref<49x144xf32, #tpu.memory_space<vmem>>, vector<1x144xf32>
    %c4_154 = arith.constant 4 : index
    %c32_155 = arith.constant 32 : index
    %252 = vector.load %arg16[%c4_154, %c32_155] : memref<24x192xf32, #tpu.memory_space<vmem>>, vector<18x144xf32>
    %253 = vector.broadcast %251 : vector<1x144xf32> to vector<18x144xf32>
    %254 = arith.mulf %252, %253 : vector<18x144xf32>
    %255 = arith.addf %250, %254 : vector<18x144xf32>
    %c33 = arith.constant 33 : index
    %c0_156 = arith.constant 0 : index
    %256 = vector.load %arg7[%c33, %c0_156] : memref<49x144xf32, #tpu.memory_space<vmem>>, vector<1x144xf32>
    %c4_157 = arith.constant 4 : index
    %c40_158 = arith.constant 40 : index
    %257 = vector.load %arg16[%c4_157, %c40_158] : memref<24x192xf32, #tpu.memory_space<vmem>>, vector<18x144xf32>
    %258 = vector.broadcast %256 : vector<1x144xf32> to vector<18x144xf32>
    %259 = arith.mulf %257, %258 : vector<18x144xf32>
    %260 = arith.addf %255, %259 : vector<18x144xf32>
    %c34 = arith.constant 34 : index
    %c0_159 = arith.constant 0 : index
    %261 = vector.load %arg7[%c34, %c0_159] : memref<49x144xf32, #tpu.memory_space<vmem>>, vector<1x144xf32>
    %c4_160 = arith.constant 4 : index
    %c48_161 = arith.constant 48 : index
    %262 = vector.load %arg16[%c4_160, %c48_161] : memref<24x192xf32, #tpu.memory_space<vmem>>, vector<18x144xf32>
    %263 = vector.broadcast %261 : vector<1x144xf32> to vector<18x144xf32>
    %264 = arith.mulf %262, %263 : vector<18x144xf32>
    %265 = arith.addf %260, %264 : vector<18x144xf32>
    %c35 = arith.constant 35 : index
    %c0_162 = arith.constant 0 : index
    %266 = vector.load %arg7[%c35, %c0_162] : memref<49x144xf32, #tpu.memory_space<vmem>>, vector<1x144xf32>
    %c5_163 = arith.constant 5 : index
    %c0_164 = arith.constant 0 : index
    %267 = vector.load %arg16[%c5_163, %c0_164] : memref<24x192xf32, #tpu.memory_space<vmem>>, vector<18x144xf32>
    %268 = vector.broadcast %266 : vector<1x144xf32> to vector<18x144xf32>
    %269 = arith.mulf %267, %268 : vector<18x144xf32>
    %270 = arith.addf %265, %269 : vector<18x144xf32>
    %c36 = arith.constant 36 : index
    %c0_165 = arith.constant 0 : index
    %271 = vector.load %arg7[%c36, %c0_165] : memref<49x144xf32, #tpu.memory_space<vmem>>, vector<1x144xf32>
    %c5_166 = arith.constant 5 : index
    %c8_167 = arith.constant 8 : index
    %272 = vector.load %arg16[%c5_166, %c8_167] : memref<24x192xf32, #tpu.memory_space<vmem>>, vector<18x144xf32>
    %273 = vector.broadcast %271 : vector<1x144xf32> to vector<18x144xf32>
    %274 = arith.mulf %272, %273 : vector<18x144xf32>
    %275 = arith.addf %270, %274 : vector<18x144xf32>
    %c37 = arith.constant 37 : index
    %c0_168 = arith.constant 0 : index
    %276 = vector.load %arg7[%c37, %c0_168] : memref<49x144xf32, #tpu.memory_space<vmem>>, vector<1x144xf32>
    %c5_169 = arith.constant 5 : index
    %c16_170 = arith.constant 16 : index
    %277 = vector.load %arg16[%c5_169, %c16_170] : memref<24x192xf32, #tpu.memory_space<vmem>>, vector<18x144xf32>
    %278 = vector.broadcast %276 : vector<1x144xf32> to vector<18x144xf32>
    %279 = arith.mulf %277, %278 : vector<18x144xf32>
    %280 = arith.addf %275, %279 : vector<18x144xf32>
    %c38 = arith.constant 38 : index
    %c0_171 = arith.constant 0 : index
    %281 = vector.load %arg7[%c38, %c0_171] : memref<49x144xf32, #tpu.memory_space<vmem>>, vector<1x144xf32>
    %c5_172 = arith.constant 5 : index
    %c24_173 = arith.constant 24 : index
    %282 = vector.load %arg16[%c5_172, %c24_173] : memref<24x192xf32, #tpu.memory_space<vmem>>, vector<18x144xf32>
    %283 = vector.broadcast %281 : vector<1x144xf32> to vector<18x144xf32>
    %284 = arith.mulf %282, %283 : vector<18x144xf32>
    %285 = arith.addf %280, %284 : vector<18x144xf32>
    %c39 = arith.constant 39 : index
    %c0_174 = arith.constant 0 : index
    %286 = vector.load %arg7[%c39, %c0_174] : memref<49x144xf32, #tpu.memory_space<vmem>>, vector<1x144xf32>
    %c5_175 = arith.constant 5 : index
    %c32_176 = arith.constant 32 : index
    %287 = vector.load %arg16[%c5_175, %c32_176] : memref<24x192xf32, #tpu.memory_space<vmem>>, vector<18x144xf32>
    %288 = vector.broadcast %286 : vector<1x144xf32> to vector<18x144xf32>
    %289 = arith.mulf %287, %288 : vector<18x144xf32>
    %290 = arith.addf %285, %289 : vector<18x144xf32>
    %c40_177 = arith.constant 40 : index
    %c0_178 = arith.constant 0 : index
    %291 = vector.load %arg7[%c40_177, %c0_178] : memref<49x144xf32, #tpu.memory_space<vmem>>, vector<1x144xf32>
    %c5_179 = arith.constant 5 : index
    %c40_180 = arith.constant 40 : index
    %292 = vector.load %arg16[%c5_179, %c40_180] : memref<24x192xf32, #tpu.memory_space<vmem>>, vector<18x144xf32>
    %293 = vector.broadcast %291 : vector<1x144xf32> to vector<18x144xf32>
    %294 = arith.mulf %292, %293 : vector<18x144xf32>
    %295 = arith.addf %290, %294 : vector<18x144xf32>
    %c41 = arith.constant 41 : index
    %c0_181 = arith.constant 0 : index
    %296 = vector.load %arg7[%c41, %c0_181] : memref<49x144xf32, #tpu.memory_space<vmem>>, vector<1x144xf32>
    %c5_182 = arith.constant 5 : index
    %c48_183 = arith.constant 48 : index
    %297 = vector.load %arg16[%c5_182, %c48_183] : memref<24x192xf32, #tpu.memory_space<vmem>>, vector<18x144xf32>
    %298 = vector.broadcast %296 : vector<1x144xf32> to vector<18x144xf32>
    %299 = arith.mulf %297, %298 : vector<18x144xf32>
    %300 = arith.addf %295, %299 : vector<18x144xf32>
    %c42 = arith.constant 42 : index
    %c0_184 = arith.constant 0 : index
    %301 = vector.load %arg7[%c42, %c0_184] : memref<49x144xf32, #tpu.memory_space<vmem>>, vector<1x144xf32>
    %c6_185 = arith.constant 6 : index
    %c0_186 = arith.constant 0 : index
    %302 = vector.load %arg16[%c6_185, %c0_186] : memref<24x192xf32, #tpu.memory_space<vmem>>, vector<18x144xf32>
    %303 = vector.broadcast %301 : vector<1x144xf32> to vector<18x144xf32>
    %304 = arith.mulf %302, %303 : vector<18x144xf32>
    %305 = arith.addf %300, %304 : vector<18x144xf32>
    %c43 = arith.constant 43 : index
    %c0_187 = arith.constant 0 : index
    %306 = vector.load %arg7[%c43, %c0_187] : memref<49x144xf32, #tpu.memory_space<vmem>>, vector<1x144xf32>
    %c6_188 = arith.constant 6 : index
    %c8_189 = arith.constant 8 : index
    %307 = vector.load %arg16[%c6_188, %c8_189] : memref<24x192xf32, #tpu.memory_space<vmem>>, vector<18x144xf32>
    %308 = vector.broadcast %306 : vector<1x144xf32> to vector<18x144xf32>
    %309 = arith.mulf %307, %308 : vector<18x144xf32>
    %310 = arith.addf %305, %309 : vector<18x144xf32>
    %c44 = arith.constant 44 : index
    %c0_190 = arith.constant 0 : index
    %311 = vector.load %arg7[%c44, %c0_190] : memref<49x144xf32, #tpu.memory_space<vmem>>, vector<1x144xf32>
    %c6_191 = arith.constant 6 : index
    %c16_192 = arith.constant 16 : index
    %312 = vector.load %arg16[%c6_191, %c16_192] : memref<24x192xf32, #tpu.memory_space<vmem>>, vector<18x144xf32>
    %313 = vector.broadcast %311 : vector<1x144xf32> to vector<18x144xf32>
    %314 = arith.mulf %312, %313 : vector<18x144xf32>
    %315 = arith.addf %310, %314 : vector<18x144xf32>
    %c45 = arith.constant 45 : index
    %c0_193 = arith.constant 0 : index
    %316 = vector.load %arg7[%c45, %c0_193] : memref<49x144xf32, #tpu.memory_space<vmem>>, vector<1x144xf32>
    %c6_194 = arith.constant 6 : index
    %c24_195 = arith.constant 24 : index
    %317 = vector.load %arg16[%c6_194, %c24_195] : memref<24x192xf32, #tpu.memory_space<vmem>>, vector<18x144xf32>
    %318 = vector.broadcast %316 : vector<1x144xf32> to vector<18x144xf32>
    %319 = arith.mulf %317, %318 : vector<18x144xf32>
    %320 = arith.addf %315, %319 : vector<18x144xf32>
    %c46 = arith.constant 46 : index
    %c0_196 = arith.constant 0 : index
    %321 = vector.load %arg7[%c46, %c0_196] : memref<49x144xf32, #tpu.memory_space<vmem>>, vector<1x144xf32>
    %c6_197 = arith.constant 6 : index
    %c32_198 = arith.constant 32 : index
    %322 = vector.load %arg16[%c6_197, %c32_198] : memref<24x192xf32, #tpu.memory_space<vmem>>, vector<18x144xf32>
    %323 = vector.broadcast %321 : vector<1x144xf32> to vector<18x144xf32>
    %324 = arith.mulf %322, %323 : vector<18x144xf32>
    %325 = arith.addf %320, %324 : vector<18x144xf32>
    %c47 = arith.constant 47 : index
    %c0_199 = arith.constant 0 : index
    %326 = vector.load %arg7[%c47, %c0_199] : memref<49x144xf32, #tpu.memory_space<vmem>>, vector<1x144xf32>
    %c6_200 = arith.constant 6 : index
    %c40_201 = arith.constant 40 : index
    %327 = vector.load %arg16[%c6_200, %c40_201] : memref<24x192xf32, #tpu.memory_space<vmem>>, vector<18x144xf32>
    %328 = vector.broadcast %326 : vector<1x144xf32> to vector<18x144xf32>
    %329 = arith.mulf %327, %328 : vector<18x144xf32>
    %330 = arith.addf %325, %329 : vector<18x144xf32>
    %c48_202 = arith.constant 48 : index
    %c0_203 = arith.constant 0 : index
    %331 = vector.load %arg7[%c48_202, %c0_203] : memref<49x144xf32, #tpu.memory_space<vmem>>, vector<1x144xf32>
    %c6_204 = arith.constant 6 : index
    %c48_205 = arith.constant 48 : index
    %332 = vector.load %arg16[%c6_204, %c48_205] : memref<24x192xf32, #tpu.memory_space<vmem>>, vector<18x144xf32>
    %333 = vector.broadcast %331 : vector<1x144xf32> to vector<18x144xf32>
    %334 = arith.mulf %332, %333 : vector<18x144xf32>
    %335 = arith.addf %330, %334 : vector<18x144xf32>
    %c0_206 = arith.constant 0 : index
    %c0_207 = arith.constant 0 : index
    %336 = vector.load %arg8[%c0_206, %c0_207] : memref<1x144xf32, #tpu.memory_space<vmem>>, vector<1x144xf32>
    %337 = vector.broadcast %336 : vector<1x144xf32> to vector<18x144xf32>
    %338 = arith.addf %335, %337 : vector<18x144xf32>
    %cst_208 = arith.constant 0.000000e+00 : f32
    %339 = vector.broadcast %cst_208 : f32 to vector<18x144xf32>
    %340 = arith.subf %339, %338 : vector<18x144xf32>
    %341 = math.exp %340 : vector<18x144xf32>
    %cst_209 = arith.constant 1.000000e+00 : f32
    %342 = vector.broadcast %cst_209 : f32 to vector<18x144xf32>
    %343 = arith.addf %342, %341 : vector<18x144xf32>
    %344 = tpu.reciprocal %343 {approx = true} : vector<18x144xf32> -> vector<18x144xf32>
    %345 = arith.mulf %338, %344 : vector<18x144xf32>
    %346 = arith.truncf %345 : vector<18x144xf32> to vector<18x144xbf16>
    %c0_210 = arith.constant 0 : index
    %c0_211 = arith.constant 0 : index
    %347 = vector.load %arg9[%c0_210, %c0_211] : memref<144x144xbf16, #tpu.memory_space<vmem>>, vector<144x144xbf16>
    %cst_212 = arith.constant dense<0.000000e+00> : vector<18x144xf32>
    %348 = tpu.matmul %346, %347, %cst_212 {dimension_numbers = #tpu.dot_dimension_numbers<[1], [0], [0], [1], [0, 0, 1, 1], [], []>} : vector<18x144xbf16>, vector<144x144xbf16>, vector<18x144xf32> -> vector<18x144xf32>
    %c0_213 = arith.constant 0 : index
    %c0_214 = arith.constant 0 : index
    %349 = vector.load %arg10[%c0_213, %c0_214] : memref<1x144xf32, #tpu.memory_space<vmem>>, vector<1x144xf32>
    %350 = vector.broadcast %349 : vector<1x144xf32> to vector<18x144xf32>
    %351 = arith.addf %348, %350 : vector<18x144xf32>
    %352 = tpu.iota {dimensions = array<i32: 0>} : vector<18x1xi32>
    %c-1_i32 = arith.constant -1 : i32
    %353 = vector.broadcast %c-1_i32 : i32 to vector<18x1xi32>
    %354 = arith.addi %353, %352 : vector<18x1xi32>
    %c0_i32_215 = arith.constant 0 : i32
    %355 = vector.broadcast %c0_i32_215 : i32 to vector<18x1xi32>
    %356 = arith.cmpi sge, %354, %355 : vector<18x1xi32>
    %c16_i32_216 = arith.constant 16 : i32
    %357 = vector.broadcast %c16_i32_216 : i32 to vector<18x1xi32>
    %358 = arith.cmpi slt, %354, %357 : vector<18x1xi32>
    %359 = arith.andi %356, %358 : vector<18x1xi1>
    %360 = arith.extui %359 : vector<18x1xi1> to vector<18x1xi32>
    %361 = arith.sitofp %360 : vector<18x1xi32> to vector<18x1xf32>
    %cst_217 = arith.constant 0.000000e+00 : f32
    %362 = vector.broadcast %cst_217 : f32 to vector<18x144xf32>
    %363 = arith.subf %362, %351 : vector<18x144xf32>
    %364 = math.exp %363 : vector<18x144xf32>
    %cst_218 = arith.constant 1.000000e+00 : f32
    %365 = vector.broadcast %cst_218 : f32 to vector<18x144xf32>
    %366 = arith.addf %365, %364 : vector<18x144xf32>
    %367 = tpu.reciprocal %366 {approx = true} : vector<18x144xf32> -> vector<18x144xf32>
    %368 = arith.mulf %351, %367 : vector<18x144xf32>
    %c0_219 = arith.constant 0 : index
    %c0_220 = arith.constant 0 : index
    %369 = vector.load %arg14[%c0_219, %c0_220] : memref<1x144xf32, #tpu.memory_space<vmem>>, vector<1x144xf32>
    %370 = vector.broadcast %361 : vector<18x1xf32> to vector<18x144xf32>
    %371 = vector.broadcast %369 : vector<1x144xf32> to vector<18x144xf32>
    %372 = arith.mulf %370, %371 : vector<18x144xf32>
    %373 = arith.mulf %368, %372 : vector<18x144xf32>
    %c0_221 = arith.constant 0 : index
    %c0_222 = arith.constant 0 : index
    %374 = vector.load %arg17[%c0_221, %c0_222] : memref<18x144xf32, #tpu.memory_space<vmem>>, vector<18x144xf32>
    tpu.vector_store %arg17[%c0_221, %c0_222], %373 {strides = array<i32>} : memref<18x144xf32, #tpu.memory_space<vmem>>, vector<18x144xf32>,
    %c0_223 = arith.constant 0 : index
    %c0_224 = arith.constant 0 : index
    %375 = vector.load %arg11[%c0_223, %c0_224] : memref<9x128xf32, #tpu.memory_space<vmem>>, vector<1x128xf32>
    %c0_225 = arith.constant 0 : index
    %c0_226 = arith.constant 0 : index
    %376 = vector.load %arg17[%c0_225, %c0_226] : memref<18x144xf32, #tpu.memory_space<vmem>>, vector<16x128xf32>
    %377 = vector.broadcast %375 : vector<1x128xf32> to vector<16x128xf32>
    %378 = arith.mulf %376, %377 : vector<16x128xf32>
    %c1_227 = arith.constant 1 : index
    %c0_228 = arith.constant 0 : index
    %379 = vector.load %arg11[%c1_227, %c0_228] : memref<9x128xf32, #tpu.memory_space<vmem>>, vector<1x128xf32>
    %c0_229 = arith.constant 0 : index
    %c8_230 = arith.constant 8 : index
    %380 = vector.load %arg17[%c0_229, %c8_230] : memref<18x144xf32, #tpu.memory_space<vmem>>, vector<16x128xf32>
    %381 = vector.broadcast %379 : vector<1x128xf32> to vector<16x128xf32>
    %382 = arith.mulf %380, %381 : vector<16x128xf32>
    %383 = arith.addf %378, %382 : vector<16x128xf32>
    %c2_231 = arith.constant 2 : index
    %c0_232 = arith.constant 0 : index
    %384 = vector.load %arg11[%c2_231, %c0_232] : memref<9x128xf32, #tpu.memory_space<vmem>>, vector<1x128xf32>
    %c0_233 = arith.constant 0 : index
    %c16_234 = arith.constant 16 : index
    %385 = vector.load %arg17[%c0_233, %c16_234] : memref<18x144xf32, #tpu.memory_space<vmem>>, vector<16x128xf32>
    %386 = vector.broadcast %384 : vector<1x128xf32> to vector<16x128xf32>
    %387 = arith.mulf %385, %386 : vector<16x128xf32>
    %388 = arith.addf %383, %387 : vector<16x128xf32>
    %c3_235 = arith.constant 3 : index
    %c0_236 = arith.constant 0 : index
    %389 = vector.load %arg11[%c3_235, %c0_236] : memref<9x128xf32, #tpu.memory_space<vmem>>, vector<1x128xf32>
    %c1_237 = arith.constant 1 : index
    %c0_238 = arith.constant 0 : index
    %390 = vector.load %arg17[%c1_237, %c0_238] : memref<18x144xf32, #tpu.memory_space<vmem>>, vector<16x128xf32>
    %391 = vector.broadcast %389 : vector<1x128xf32> to vector<16x128xf32>
    %392 = arith.mulf %390, %391 : vector<16x128xf32>
    %393 = arith.addf %388, %392 : vector<16x128xf32>
    %c4_239 = arith.constant 4 : index
    %c0_240 = arith.constant 0 : index
    %394 = vector.load %arg11[%c4_239, %c0_240] : memref<9x128xf32, #tpu.memory_space<vmem>>, vector<1x128xf32>
    %c1_241 = arith.constant 1 : index
    %c8_242 = arith.constant 8 : index
    %395 = vector.load %arg17[%c1_241, %c8_242] : memref<18x144xf32, #tpu.memory_space<vmem>>, vector<16x128xf32>
    %396 = vector.broadcast %394 : vector<1x128xf32> to vector<16x128xf32>
    %397 = arith.mulf %395, %396 : vector<16x128xf32>
    %398 = arith.addf %393, %397 : vector<16x128xf32>
    %c5_243 = arith.constant 5 : index
    %c0_244 = arith.constant 0 : index
    %399 = vector.load %arg11[%c5_243, %c0_244] : memref<9x128xf32, #tpu.memory_space<vmem>>, vector<1x128xf32>
    %c1_245 = arith.constant 1 : index
    %c16_246 = arith.constant 16 : index
    %400 = vector.load %arg17[%c1_245, %c16_246] : memref<18x144xf32, #tpu.memory_space<vmem>>, vector<16x128xf32>
    %401 = vector.broadcast %399 : vector<1x128xf32> to vector<16x128xf32>
    %402 = arith.mulf %400, %401 : vector<16x128xf32>
    %403 = arith.addf %398, %402 : vector<16x128xf32>
    %c6_247 = arith.constant 6 : index
    %c0_248 = arith.constant 0 : index
    %404 = vector.load %arg11[%c6_247, %c0_248] : memref<9x128xf32, #tpu.memory_space<vmem>>, vector<1x128xf32>
    %c2_249 = arith.constant 2 : index
    %c0_250 = arith.constant 0 : index
    %405 = vector.load %arg17[%c2_249, %c0_250] : memref<18x144xf32, #tpu.memory_space<vmem>>, vector<16x128xf32>
    %406 = vector.broadcast %404 : vector<1x128xf32> to vector<16x128xf32>
    %407 = arith.mulf %405, %406 : vector<16x128xf32>
    %408 = arith.addf %403, %407 : vector<16x128xf32>
    %c7_251 = arith.constant 7 : index
    %c0_252 = arith.constant 0 : index
    %409 = vector.load %arg11[%c7_251, %c0_252] : memref<9x128xf32, #tpu.memory_space<vmem>>, vector<1x128xf32>
    %c2_253 = arith.constant 2 : index
    %c8_254 = arith.constant 8 : index
    %410 = vector.load %arg17[%c2_253, %c8_254] : memref<18x144xf32, #tpu.memory_space<vmem>>, vector<16x128xf32>
    %411 = vector.broadcast %409 : vector<1x128xf32> to vector<16x128xf32>
    %412 = arith.mulf %410, %411 : vector<16x128xf32>
    %413 = arith.addf %408, %412 : vector<16x128xf32>
    %c8_255 = arith.constant 8 : index
    %c0_256 = arith.constant 0 : index
    %414 = vector.load %arg11[%c8_255, %c0_256] : memref<9x128xf32, #tpu.memory_space<vmem>>, vector<1x128xf32>
    %c2_257 = arith.constant 2 : index
    %c16_258 = arith.constant 16 : index
    %415 = vector.load %arg17[%c2_257, %c16_258] : memref<18x144xf32, #tpu.memory_space<vmem>>, vector<16x128xf32>
    %416 = vector.broadcast %414 : vector<1x128xf32> to vector<16x128xf32>
    %417 = arith.mulf %415, %416 : vector<16x128xf32>
    %418 = arith.addf %413, %417 : vector<16x128xf32>
    %c0_259 = arith.constant 0 : index
    %c0_260 = arith.constant 0 : index
    %419 = vector.load %arg12[%c0_259, %c0_260] : memref<1x128xf32, #tpu.memory_space<vmem>>, vector<1x128xf32>
    %420 = vector.broadcast %419 : vector<1x128xf32> to vector<16x128xf32>
    %421 = arith.addf %418, %420 : vector<16x128xf32>
    %cst_261 = arith.constant 0.000000e+00 : f32
    %422 = vector.broadcast %cst_261 : f32 to vector<16x128xf32>
    %423 = arith.subf %422, %421 : vector<16x128xf32>
    %424 = math.exp %423 : vector<16x128xf32>
    %cst_262 = arith.constant 1.000000e+00 : f32
    %425 = vector.broadcast %cst_262 : f32 to vector<16x128xf32>
    %426 = arith.addf %425, %424 : vector<16x128xf32>
    %427 = tpu.reciprocal %426 {approx = true} : vector<16x128xf32> -> vector<16x128xf32>
    %428 = arith.mulf %421, %427 : vector<16x128xf32>
    %c0_263 = arith.constant 0 : index
    %c5_264 = arith.constant 5 : index
    %c40_265 = arith.constant 40 : index
    %429 = vector.load %arg2[%c0_263, %c5_264, %c40_265] : memref<1x26x208xf32, #tpu.memory_space<vmem>>, vector<1x16x128xf32>
    %430 = vector.shape_cast %429 : vector<1x16x128xf32> to vector<16x128xf32>
    %431 = arith.addf %428, %430 : vector<16x128xf32>
    %c0_266 = arith.constant 0 : index
    %c0_267 = arith.constant 0 : index
    %c0_268 = arith.constant 0 : index
    %432 = vector.load %arg15[%c0_266, %c0_267, %c0_268] : memref<1x16x128xf32, #tpu.memory_space<vmem>>, vector<1x16x128xf32>
    %433 = vector.shape_cast %432 : vector<1x16x128xf32> to vector<16x128xf32>
    %434 = vector.shape_cast %431 : vector<16x128xf32> to vector<1x16x128xf32>
    tpu.vector_store %arg15[%c0_266, %c0_267, %c0_268], %434 {strides = array<i32>} : memref<1x16x128xf32, #tpu.memory_space<vmem>>, vector<1x16x128xf32>,
    return
  }
  func.func @transform_0(%arg0: i32, %arg1: i32) -> (i32, i32, i32) {
    %c0_i32 = arith.constant 0 : i32
    %c0_i32_0 = arith.constant 0 : i32
    %c0_i32_1 = arith.constant 0 : i32
    return %arg0, %c0_i32, %c0_i32_0 : i32, i32, i32
  }
  func.func @transform_1(%arg0: i32, %arg1: i32) -> (i32, i32) {
    %c0_i32 = arith.constant 0 : i32
    %c0_i32_0 = arith.constant 0 : i32
    %c0_i32_1 = arith.constant 0 : i32
    return %c0_i32, %c0_i32_0 : i32, i32
  }
  func.func @transform_2(%arg0: i32, %arg1: i32) -> (i32, i32) {
    %c0_i32 = arith.constant 0 : i32
    %c0_i32_0 = arith.constant 0 : i32
    %c0_i32_1 = arith.constant 0 : i32
    return %c0_i32, %c0_i32_0 : i32, i32
  }
  func.func @transform_3(%arg0: i32, %arg1: i32) -> (i32, i32) {
    %c0_i32 = arith.constant 0 : i32
    %c0_i32_0 = arith.constant 0 : i32
    %c0_i32_1 = arith.constant 0 : i32
    return %c0_i32, %c0_i32_0 : i32, i32
  }
  func.func @transform_4(%arg0: i32, %arg1: i32) -> (i32, i32) {
    %c0_i32 = arith.constant 0 : i32
    %c0_i32_0 = arith.constant 0 : i32
    %c0_i32_1 = arith.constant 0 : i32
    return %c0_i32, %c0_i32_0 : i32, i32
  }
  func.func @transform_5(%arg0: i32, %arg1: i32) -> (i32, i32) {
    %c0_i32 = arith.constant 0 : i32
    %c0_i32_0 = arith.constant 0 : i32
    %c0_i32_1 = arith.constant 0 : i32
    return %c0_i32, %c0_i32_0 : i32, i32
  }
  func.func @transform_6(%arg0: i32, %arg1: i32) -> (i32, i32) {
    %c0_i32 = arith.constant 0 : i32
    %c0_i32_0 = arith.constant 0 : i32
    %c0_i32_1 = arith.constant 0 : i32
    return %c0_i32, %c0_i32_0 : i32, i32
  }
  func.func @transform_7(%arg0: i32, %arg1: i32) -> (i32, i32) {
    %c0_i32 = arith.constant 0 : i32
    %c0_i32_0 = arith.constant 0 : i32
    %c0_i32_1 = arith.constant 0 : i32
    return %c0_i32, %c0_i32_0 : i32, i32
  }
  func.func @transform_8(%arg0: i32, %arg1: i32) -> (i32, i32) {
    %c0_i32 = arith.constant 0 : i32
    %c0_i32_0 = arith.constant 0 : i32
    %c0_i32_1 = arith.constant 0 : i32
    return %c0_i32, %c0_i32_0 : i32, i32
  }
  func.func @transform_9(%arg0: i32, %arg1: i32) -> (i32, i32) {
    %c0_i32 = arith.constant 0 : i32
    %c0_i32_0 = arith.constant 0 : i32
    %c0_i32_1 = arith.constant 0 : i32
    return %c0_i32, %c0_i32_0 : i32, i32
  }
  func.func @transform_10(%arg0: i32, %arg1: i32) -> (i32, i32) {
    %c0_i32 = arith.constant 0 : i32
    %c0_i32_0 = arith.constant 0 : i32
    %c0_i32_1 = arith.constant 0 : i32
    return %c0_i32, %c0_i32_0 : i32, i32
  }
  func.func @transform_11(%arg0: i32, %arg1: i32) -> (i32, i32) {
    %c0_i32 = arith.constant 0 : i32
    %c0_i32_0 = arith.constant 0 : i32
    %c0_i32_1 = arith.constant 0 : i32
    return %c0_i32, %c0_i32_0 : i32, i32
  }
  func.func @transform_12(%arg0: i32, %arg1: i32) -> (i32, i32) {
    %c0_i32 = arith.constant 0 : i32
    %c0_i32_0 = arith.constant 0 : i32
    %c0_i32_1 = arith.constant 0 : i32
    return %c0_i32, %c0_i32_0 : i32, i32
  }
  func.func @transform_13(%arg0: i32, %arg1: i32) -> (i32, i32, i32) {
    %c0_i32 = arith.constant 0 : i32
    %c0_i32_0 = arith.constant 0 : i32
    return %arg0, %arg1, %c0_i32 : i32, i32, i32
  }
}

</mosaic_0001>

<llo_original>
// kernel: tpu_custom_call.1
$region0: #{tpu_custom_call.1}
  #allocation0 [shape = 'u32[]', space=smem, size = 0x4, offset = 0x4, fixed_abs, tag = 'smem constant byte address 0x4 - core index']
  #allocation1 [shape = 'u32[144,128]{1,0:T(1,128)}', space=vmem, size = 0x12000, scoped, tag = 'internal scratch']
  #allocation2 [shape = 'f32[24,192]{1,0:T(8,128)}', space=vmem, size = 0x6000, scoped, tag = 'scratch operand']
  #allocation3 [shape = 'f32[18,144]{1,0:T(8,128)}', space=vmem, size = 0x6000, scoped, tag = 'scratch operand']
  %s0 = inlined_call_operand.vmem [shape: f32[2,26,208], index: 0, kind: input, shape index: {}]
  %s1 = inlined_call_operand.vmem [shape: f32[9,192], index: 1, kind: input, shape index: {}]
  %s2 = inlined_call_operand.vmem [shape: f32[1,192], index: 2, kind: input, shape index: {}]
  %s3 = inlined_call_operand.vmem [shape: bf16[192,192], index: 3, kind: input, shape index: {}]
  %s4 = inlined_call_operand.vmem [shape: f32[1,192], index: 4, kind: input, shape index: {}]
  %s5 = inlined_call_operand.hbm [shape: f32[49,144], index: 5, kind: input, shape index: {}]
  %s6 = inlined_call_operand.vmem [shape: f32[1,144], index: 6, kind: input, shape index: {}]
  %s7 = inlined_call_operand.hbm [shape: bf16[144,144], index: 7, kind: input, shape index: {}]
  %s8 = inlined_call_operand.vmem [shape: f32[1,144], index: 8, kind: input, shape index: {}]
  %s9 = inlined_call_operand.vmem [shape: f32[9,128], index: 9, kind: input, shape index: {}]
  %s10 = inlined_call_operand.vmem [shape: f32[1,128], index: 10, kind: input, shape index: {}]
  %s11 = inlined_call_operand.vmem [shape: f32[1,192], index: 11, kind: input, shape index: {}]
  %s12 = inlined_call_operand.vmem [shape: f32[1,144], index: 12, kind: input, shape index: {}]
  %s13 = inlined_call_operand.hbm [shape: f32[2,16,128], index: 13, kind: output, shape index: {}]
  %s14 = sld [smem:[#allocation0]]
  $region93: #{tpu_custom_call.1} parent=0
    _
  %s16 = ssub.s32 1, %s14
  %s17 = scalar_select 0, %s16, %s14
  $region1: #{tpu_custom_call.1} parent=0
    #allocation4 [shape = 'u8[57344]{0}', space=vmem, size = 0xe000, scoped, tag = 'input window, operand 5, single buffered']
    #allocation5 [shape = 's32[2]{0}', space=sflag, size = 0x8, scoped, tag = 'scoped memory for tpu_custom_call.1']
    #allocation6 [shape = 's32[2]{0}', space=sflag, size = 0x8, scoped, tag = 'scoped memory for tpu_custom_call.1']
    #allocation7 [shape = 'u8[73728]{0}', space=vmem, size = 0x12000, scoped, tag = 'input window, operand 7, single buffered']
    #allocation8 [shape = 's32[1]{0}', space=sflag, size = 0x4, scoped, tag = 'scoped memory for tpu_custom_call.1']
    #allocation9 [shape = 'u8[16384]{0}', space=vmem, size = 0x4000, scoped, tag = 'output window, operand 0']
    %18 = vsyncpa [#allocation5], 0
    %19 = vsyncpa [#allocation8], 0
    %20 = vsyncpa [#allocation6], 0
    %s21 = scalar_lea.sflag [#allocation6], 1
    %22 = vsyncpa %s21, 0
    loop: start=0, step=1, limit=4
    $region2: #{tpu_custom_call.1} parent=1 // loop_pre_header
      _
    $region3: #{tpu_custom_call.1} parent=1 // loop_header
      %s24 = sphi 0, %s28
      %p25 = scmp.ge.s32.totalorder %s24, 4
      %s31 = sphi 0, %s43
      %s32 = sphi 0, %s39
      %s33 = sphi 0, %s31
      %s34 = sphi 0, %s32
      %s35 = sphi 0, %s33
      %s36 = sphi 0, %s34
      %s46 = sphi 0, %s48
      %s49 = sphi 0, %s46
      %s50 = sphi 0, %s49
      %s66 = sphi 0, %s50
      %s70 = sphi 0, %s70
      %s72 = sphi 0, %s70
      %s73 = sphi 0, %s72
      %s87 = sphi 0, %s73
      %s91 = sphi 0, %s91
      %s93 = sphi 0, %s91
      %s94 = sphi 0, %s93
      %s108 = sphi 0, %s94
      %s112 = sphi 0, %s112
      %s114 = sphi 0, %s112
      %s115 = sphi 0, %s114
      %s129 = sphi 0, %s115
      %s133 = sphi 0, %s133
      %s135 = sphi 0, %s133
      %s136 = sphi 0, %s135
      %s150 = sphi 0, %s136
      %s154 = sphi 0, %s154
      %s156 = sphi 0, %s154
      %s157 = sphi 0, %s156
      %s171 = sphi 0, %s157
      %s175 = sphi 0, %s175
      %s177 = sphi 0, %s175
      %s178 = sphi 0, %s177
      %s192 = sphi 0, %s178
      %s196 = sphi 0, %s196
      %s198 = sphi 0, %s196
      %s199 = sphi 0, %s198
      %s213 = sphi 0, %s199
      %s217 = sphi 0, %s217
      %s219 = sphi 0, %s217
      %s220 = sphi 0, %s219
      %s234 = sphi 0, %s220
      %s238 = sphi 0, %s238
      %s240 = sphi 0, %s238
      %s241 = sphi 0, %s240
      %s255 = sphi 0, %s241
      %s259 = sphi 0, %s259
      %s261 = sphi 0, %s259
      %s262 = sphi 0, %s261
      %s276 = sphi 0, %s262
      %s280 = sphi 0, %s280
      %s282 = sphi 0, %s280
      %s283 = sphi 0, %s282
      %s297 = sphi 0, %s283
      %s301 = sphi 0, %s301
      %s303 = sphi 0, %s301
      %s304 = sphi 0, %s303
      %s318 = sphi 0, %s304
      %s326 = sphi 0, %s328
      %s329 = sphi 0, %s326
      %s330 = sphi 0, %s329
      %s346 = sphi 0, %s330
    $region4: #{tpu_custom_call.1} parent=1 // loop_header_branch
      %27 = sbr.rel (%p25) target = $region8
    $region5: #{tpu_custom_call.1} parent=1 // loop_body
      %s29 = ssub.s32 %s24, 1
      %s30 = ssub.s32 %s24, 2
      %s37 = sadd.s32 1, %s32
      %p38 = scmp.ge.s32.totalorder %s37, 1
      %s39 = scalar_select %p38, 0, %s37
      %s40 = sadd.s32 1, %s31
      %s41 = scalar_select %p38, %s40, %s31
      %p42 = scmp.ge.s32.totalorder %s41, 2
      %s43 = scalar_select %p42, 0, %s41
      %s44 = ssub.s32 %s31, %s43
      %p45 = scmp.eq.s32.totalorder %s44, 0
      %s47 = sadd.s32 %s46, 1
      %s48 = scalar_select %p45, %s46, %s47
      %p51 = pneg %p45
      %p52 = scmp.eq.s32.totalorder %s24, 1
      %p53 = por %p51, %p52
      %p54 = scmp.ne.s32.totalorder %s46, %s49
      %p55 = scmp.eq.s32.totalorder %s24, 0
      %p56 = por %p54, %p55
      %p57 = scmp.ne.s32.totalorder %s46, %s49
      %p58 = scmp.eq.s32.totalorder %s29, 1
      %p59 = por %p57, %p58
      %p60 = scmp.ne.s32.totalorder %s49, %s50
      %p61 = scmp.eq.s32.totalorder %s29, 0
      %p62 = por %p60, %p61
      %p63 = scmp.ne.s32.totalorder %s49, %s50
      %p64 = scmp.eq.s32.totalorder %s30, 1
      %p65 = por %p63, %p64
      %p67 = scmp.ne.s32.totalorder %s50, %s66
      %p68 = scmp.eq.s32.totalorder %s30, 0
      %p69 = por %p67, %p68
      %s71 = sadd.s32 %s70, 1
      %p74 = scmp.eq.s32.totalorder %s24, 1
      %p75 = scmp.ne.s32.totalorder %s70, %s72
      %p76 = scmp.eq.s32.totalorder %s24, 0
      %p77 = por %p75, %p76
      %p78 = scmp.ne.s32.totalorder %s70, %s72
      %p79 = scmp.eq.s32.totalorder %s29, 1
      %p80 = por %p78, %p79
      %p81 = scmp.ne.s32.totalorder %s72, %s73
      %p82 = scmp.eq.s32.totalorder %s29, 0
      %p83 = por %p81, %p82
      %p84 = scmp.ne.s32.totalorder %s72, %s73
      %p85 = scmp.eq.s32.totalorder %s30, 1
      %p86 = por %p84, %p85
      %p88 = scmp.ne.s32.totalorder %s73, %s87
      %p89 = scmp.eq.s32.totalorder %s30, 0
      %p90 = por %p88, %p89
      %s92 = sadd.s32 %s91, 1
      %p95 = scmp.eq.s32.totalorder %s24, 1
      %p96 = scmp.ne.s32.totalorder %s91, %s93
      %p97 = scmp.eq.s32.totalorder %s24, 0
      %p98 = por %p96, %p97
      %p99 = scmp.ne.s32.totalorder %s91, %s93
      %p100 = scmp.eq.s32.totalorder %s29, 1
      %p101 = por %p99, %p100
      %p102 = scmp.ne.s32.totalorder %s93, %s94
      %p103 = scmp.eq.s32.totalorder %s29, 0
      %p104 = por %p102, %p103
      %p105 = scmp.ne.s32.totalorder %s93, %s94
      %p106 = scmp.eq.s32.totalorder %s30, 1
      %p107 = por %p105, %p106
      %p109 = scmp.ne.s32.totalorder %s94, %s108
      %p110 = scmp.eq.s32.totalorder %s30, 0
      %p111 = por %p109, %p110
      %s113 = sadd.s32 %s112, 1
      %p116 = scmp.eq.s32.totalorder %s24, 1
      %p117 = scmp.ne.s32.totalorder %s112, %s114
      %p118 = scmp.eq.s32.totalorder %s24, 0
      %p119 = por %p117, %p118
      %p120 = scmp.ne.s32.totalorder %s112, %s114
      %p121 = scmp.eq.s32.totalorder %s29, 1
      %p122 = por %p120, %p121
      %p123 = scmp.ne.s32.totalorder %s114, %s115
      %p124 = scmp.eq.s32.totalorder %s29, 0
      %p125 = por %p123, %p124
      %p126 = scmp.ne.s32.totalorder %s114, %s115
      %p127 = scmp.eq.s32.totalorder %s30, 1
      %p128 = por %p126, %p127
      %p130 = scmp.ne.s32.totalorder %s115, %s129
      %p131 = scmp.eq.s32.totalorder %s30, 0
      %p132 = por %p130, %p131
      %s134 = sadd.s32 %s133, 1
      %p137 = scmp.eq.s32.totalorder %s24, 1
      %p138 = scmp.ne.s32.totalorder %s133, %s135
      %p139 = scmp.eq.s32.totalorder %s24, 0
      %p140 = por %p138, %p139
      %p141 = scmp.ne.s32.totalorder %s133, %s135
      %p142 = scmp.eq.s32.totalorder %s29, 1
      %p143 = por %p141, %p142
      %p144 = scmp.ne.s32.totalorder %s135, %s136
      %p145 = scmp.eq.s32.totalorder %s29, 0
      %p146 = por %p144, %p145
      %p147 = scmp.ne.s32.totalorder %s135, %s136
      %p148 = scmp.eq.s32.totalorder %s30, 1
      %p149 = por %p147, %p148
      %p151 = scmp.ne.s32.totalorder %s136, %s150
      %p152 = scmp.eq.s32.totalorder %s30, 0
      %p153 = por %p151, %p152
      %s155 = sadd.s32 %s154, 1
      %p158 = scmp.eq.s32.totalorder %s24, 1
      %p159 = scmp.ne.s32.totalorder %s154, %s156
      %p160 = scmp.eq.s32.totalorder %s24, 0
      %p161 = por %p159, %p160
      %p162 = scmp.ne.s32.totalorder %s154, %s156
      %p163 = scmp.eq.s32.totalorder %s29, 1
      %p164 = por %p162, %p163
      %p165 = scmp.ne.s32.totalorder %s156, %s157
      %p166 = scmp.eq.s32.totalorder %s29, 0
      %p167 = por %p165, %p166
      %p168 = scmp.ne.s32.totalorder %s156, %s157
      %p169 = scmp.eq.s32.totalorder %s30, 1
      %p170 = por %p168, %p169
      %p172 = scmp.ne.s32.totalorder %s157, %s171
      %p173 = scmp.eq.s32.totalorder %s30, 0
      %p174 = por %p172, %p173
      %s176 = sadd.s32 %s175, 1
      %p179 = scmp.eq.s32.totalorder %s24, 1
      %p180 = scmp.ne.s32.totalorder %s175, %s177
      %p181 = scmp.eq.s32.totalorder %s24, 0
      %p182 = por %p180, %p181
      %p183 = scmp.ne.s32.totalorder %s175, %s177
      %p184 = scmp.eq.s32.totalorder %s29, 1
      %p185 = por %p183, %p184
      %p186 = scmp.ne.s32.totalorder %s177, %s178
      %p187 = scmp.eq.s32.totalorder %s29, 0
      %p188 = por %p186, %p187
      %p189 = scmp.ne.s32.totalorder %s177, %s178
      %p190 = scmp.eq.s32.totalorder %s30, 1
      %p191 = por %p189, %p190
      %p193 = scmp.ne.s32.totalorder %s178, %s192
      %p194 = scmp.eq.s32.totalorder %s30, 0
      %p195 = por %p193, %p194
      %s197 = sadd.s32 %s196, 1
      %p200 = scmp.eq.s32.totalorder %s24, 1
      %p201 = scmp.ne.s32.totalorder %s196, %s198
      %p202 = scmp.eq.s32.totalorder %s24, 0
      %p203 = por %p201, %p202
      %p204 = scmp.ne.s32.totalorder %s196, %s198
      %p205 = scmp.eq.s32.totalorder %s29, 1
      %p206 = por %p204, %p205
      %p207 = scmp.ne.s32.totalorder %s198, %s199
      %p208 = scmp.eq.s32.totalorder %s29, 0
      %p209 = por %p207, %p208
      %p210 = scmp.ne.s32.totalorder %s198, %s199
      %p211 = scmp.eq.s32.totalorder %s30, 1
      %p212 = por %p210, %p211
      %p214 = scmp.ne.s32.totalorder %s199, %s213
      %p215 = scmp.eq.s32.totalorder %s30, 0
      %p216 = por %p214, %p215
      %s218 = sadd.s32 %s217, 1
      %p221 = scmp.eq.s32.totalorder %s24, 1
      %p222 = scmp.ne.s32.totalorder %s217, %s219
      %p223 = scmp.eq.s32.totalorder %s24, 0
      %p224 = por %p222, %p223
      %p225 = scmp.ne.s32.totalorder %s217, %s219
      %p226 = scmp.eq.s32.totalorder %s29, 1
      %p227 = por %p225, %p226
      %p228 = scmp.ne.s32.totalorder %s219, %s220
      %p229 = scmp.eq.s32.totalorder %s29, 0
      %p230 = por %p228, %p229
      %p231 = scmp.ne.s32.totalorder %s219, %s220
      %p232 = scmp.eq.s32.totalorder %s30, 1
      %p233 = por %p231, %p232
      %p235 = scmp.ne.s32.totalorder %s220, %s234
      %p236 = scmp.eq.s32.totalorder %s30, 0
      %p237 = por %p235, %p236
      %s239 = sadd.s32 %s238, 1
      %p242 = scmp.eq.s32.totalorder %s24, 1
      %p243 = scmp.ne.s32.totalorder %s238, %s240
      %p244 = scmp.eq.s32.totalorder %s24, 0
      %p245 = por %p243, %p244
      %p246 = scmp.ne.s32.totalorder %s238, %s240
      %p247 = scmp.eq.s32.totalorder %s29, 1
      %p248 = por %p246, %p247
      %p249 = scmp.ne.s32.totalorder %s240, %s241
      %p250 = scmp.eq.s32.totalorder %s29, 0
      %p251 = por %p249, %p250
      %p252 = scmp.ne.s32.totalorder %s240, %s241
      %p253 = scmp.eq.s32.totalorder %s30, 1
      %p254 = por %p252, %p253
      %p256 = scmp.ne.s32.totalorder %s241, %s255
      %p257 = scmp.eq.s32.totalorder %s30, 0
      %p258 = por %p256, %p257
      %s260 = sadd.s32 %s259, 1
      %p263 = scmp.eq.s32.totalorder %s24, 1
      %p264 = scmp.ne.s32.totalorder %s259, %s261
      %p265 = scmp.eq.s32.totalorder %s24, 0
      %p266 = por %p264, %p265
      %p267 = scmp.ne.s32.totalorder %s259, %s261
      %p268 = scmp.eq.s32.totalorder %s29, 1
      %p269 = por %p267, %p268
      %p270 = scmp.ne.s32.totalorder %s261, %s262
      %p271 = scmp.eq.s32.totalorder %s29, 0
      %p272 = por %p270, %p271
      %p273 = scmp.ne.s32.totalorder %s261, %s262
      %p274 = scmp.eq.s32.totalorder %s30, 1
      %p275 = por %p273, %p274
      %p277 = scmp.ne.s32.totalorder %s262, %s276
      %p278 = scmp.eq.s32.totalorder %s30, 0
      %p279 = por %p277, %p278
      %s281 = sadd.s32 %s280, 1
      %p284 = scmp.eq.s32.totalorder %s24, 1
      %p285 = scmp.ne.s32.totalorder %s280, %s282
      %p286 = scmp.eq.s32.totalorder %s24, 0
      %p287 = por %p285, %p286
      %p288 = scmp.ne.s32.totalorder %s280, %s282
      %p289 = scmp.eq.s32.totalorder %s29, 1
      %p290 = por %p288, %p289
      %p291 = scmp.ne.s32.totalorder %s282, %s283
      %p292 = scmp.eq.s32.totalorder %s29, 0
      %p293 = por %p291, %p292
      %p294 = scmp.ne.s32.totalorder %s282, %s283
      %p295 = scmp.eq.s32.totalorder %s30, 1
      %p296 = por %p294, %p295
      %p298 = scmp.ne.s32.totalorder %s283, %s297
      %p299 = scmp.eq.s32.totalorder %s30, 0
      %p300 = por %p298, %p299
      %s302 = sadd.s32 %s301, 1
      %p305 = scmp.eq.s32.totalorder %s24, 1
      %p306 = scmp.ne.s32.totalorder %s301, %s303
      %p307 = scmp.eq.s32.totalorder %s24, 0
      %p308 = por %p306, %p307
      %p309 = scmp.ne.s32.totalorder %s301, %s303
      %p310 = scmp.eq.s32.totalorder %s29, 1
      %p311 = por %p309, %p310
      %p312 = scmp.ne.s32.totalorder %s303, %s304
      %p313 = scmp.eq.s32.totalorder %s29, 0
      %p314 = por %p312, %p313
      %p315 = scmp.ne.s32.totalorder %s303, %s304
      %p316 = scmp.eq.s32.totalorder %s30, 1
      %p317 = por %p315, %p316
      %p319 = scmp.ne.s32.totalorder %s304, %s318
      %p320 = scmp.eq.s32.totalorder %s30, 0
      %p321 = por %p319, %p320
      %s322 = ssub.s32 %s31, %s43
      %s323 = ssub.s32 %s32, %s39
      %s324 = sor.u32 %s322, %s323
      %p325 = scmp.eq.s32.totalorder %s324, 0
      %s327 = sadd.s32 %s326, 1
      %s328 = scalar_select %p325, %s326, %s327
      %p331 = pneg %p325
      %p332 = scmp.eq.s32.totalorder %s24, 1
      %p333 = por %p331, %p332
      %p334 = scmp.ne.s32.totalorder %s326, %s329
      %p335 = scmp.eq.s32.totalorder %s24, 0
      %p336 = por %p334, %p335
      %p337 = scmp.ne.s32.totalorder %s326, %s329
      %p338 = scmp.eq.s32.totalorder %s29, 1
      %p339 = por %p337, %p338
      %p340 = scmp.ne.s32.totalorder %s329, %s330
      %p341 = scmp.eq.s32.totalorder %s29, 0
      %p342 = por %p340, %p341
      %p343 = scmp.ne.s32.totalorder %s329, %s330
      %p344 = scmp.eq.s32.totalorder %s30, 1
      %p345 = por %p343, %p344
      %p347 = scmp.ne.s32.totalorder %s330, %s346
      %p348 = scmp.eq.s32.totalorder %s30, 0
      %p349 = por %p347, %p348
      %p350 = scmp.le.s32.totalorder 1, %s24
      %p351 = scmp.lt.s32.totalorder %s24, 3
      %p352 = pnand %p350, %p351
      %p353 = pneg %p352
      // Predicated region
      $region9: #{tpu_custom_call.1} parent=5 // pred_check
        _
      $region10: #{tpu_custom_call.1} parent=5 // pred_check_branch
        %355 = sbr.rel (%p352) target = $region12
      $region11: #{tpu_custom_call.1} parent=5 // pred_region
        %s356 = ssub.s32 %s24, 1
        // Predicated region
        $region13: #{tpu_custom_call.1} parent=11 // pred_check
          %p357 = pneg %p83
        $region14: #{tpu_custom_call.1} parent=11 // pred_check_branch
          %359 = sbr.rel (%p357) target = $region16
        $region15: #{tpu_custom_call.1} parent=11 // pred_region
          _
        $region16: #{tpu_custom_call.1} parent=11 // pred_fallthru
          _
        // Predicated region
        $region17: #{tpu_custom_call.1} parent=11 // pred_check
          %p360 = pneg %p104
        $region18: #{tpu_custom_call.1} parent=11 // pred_check_branch
          %362 = sbr.rel (%p360) target = $region20
        $region19: #{tpu_custom_call.1} parent=11 // pred_region
          _
        $region20: #{tpu_custom_call.1} parent=11 // pred_fallthru
          _
        // Predicated region
        $region21: #{tpu_custom_call.1} parent=11 // pred_check
          %p363 = pneg %p125
        $region22: #{tpu_custom_call.1} parent=11 // pred_check_branch
          %365 = sbr.rel (%p363) target = $region24
        $region23: #{tpu_custom_call.1} parent=11 // pred_region
          _
        $region24: #{tpu_custom_call.1} parent=11 // pred_fallthru
          _
        // Predicated region
        $region25: #{tpu_custom_call.1} parent=11 // pred_check
          %p366 = pneg %p146
        $region26: #{tpu_custom_call.1} parent=11 // pred_check_branch
          %368 = sbr.rel (%p366) target = $region28
        $region27: #{tpu_custom_call.1} parent=11 // pred_region
          _
        $region28: #{tpu_custom_call.1} parent=11 // pred_fallthru
          _
        // Predicated region
        $region29: #{tpu_custom_call.1} parent=11 // pred_check
          %p369 = pneg %p167
        $region30: #{tpu_custom_call.1} parent=11 // pred_check_branch
          %371 = sbr.rel (%p369) target = $region32
        $region31: #{tpu_custom_call.1} parent=11 // pred_region
          %s373 = ssub.s32 1792, 1792
          %374 = vsyncadd [#allocation5], %s373
          %s375 = sshll.u32 [#allocation4], 4
          %s376 = int_to_ptr.vmem [resolvable:$true] %s375
          %381 = dma.hbm_to_vmem [thread:$0]  %s5, 1792, %s376, [#allocation5], 256, 256, 16
        $region32: #{tpu_custom_call.1} parent=11 // pred_fallthru
          _
        // Predicated region
        $region33: #{tpu_custom_call.1} parent=11 // pred_check
          %p382 = pneg %p188
        $region34: #{tpu_custom_call.1} parent=11 // pred_check_branch
          %384 = sbr.rel (%p382) target = $region36
        $region35: #{tpu_custom_call.1} parent=11 // pred_region
          _
        $region36: #{tpu_custom_call.1} parent=11 // pred_fallthru
          _
        // Predicated region
        $region37: #{tpu_custom_call.1} parent=11 // pred_check
          %p385 = pneg %p209
        $region38: #{tpu_custom_call.1} parent=11 // pred_check_branch
          %387 = sbr.rel (%p385) target = $region40
        $region39: #{tpu_custom_call.1} parent=11 // pred_region
          %s389 = ssub.s32 2304, 2304
          %390 = vsyncadd [#allocation8], %s389
          %s391 = sshll.u32 [#allocation7], 4
          %s392 = int_to_ptr.vmem [resolvable:$true] %s391
          %397 = dma.hbm_to_vmem [thread:$0]  %s7, 2304, %s392, [#allocation8], 128, 128, 8
        $region40: #{tpu_custom_call.1} parent=11 // pred_fallthru
          _
        // Predicated region
        $region41: #{tpu_custom_call.1} parent=11 // pred_check
          %p398 = pneg %p230
        $region42: #{tpu_custom_call.1} parent=11 // pred_check_branch
          %400 = sbr.rel (%p398) target = $region44
        $region43: #{tpu_custom_call.1} parent=11 // pred_region
          _
        $region44: #{tpu_custom_call.1} parent=11 // pred_fallthru
          _
        // Predicated region
        $region45: #{tpu_custom_call.1} parent=11 // pred_check
          %p401 = pneg %p251
        $region46: #{tpu_custom_call.1} parent=11 // pred_check_branch
          %403 = sbr.rel (%p401) target = $region48
        $region47: #{tpu_custom_call.1} parent=11 // pred_region
          _
        $region48: #{tpu_custom_call.1} parent=11 // pred_fallthru
          _
        // Predicated region
        $region49: #{tpu_custom_call.1} parent=11 // pred_check
          %p404 = pneg %p272
        $region50: #{tpu_custom_call.1} parent=11 // pred_check_branch
          %406 = sbr.rel (%p404) target = $region52
        $region51: #{tpu_custom_call.1} parent=11 // pred_region
          _
        $region52: #{tpu_custom_call.1} parent=11 // pred_fallthru
          _
        // Predicated region
        $region53: #{tpu_custom_call.1} parent=11 // pred_check
          %p407 = pneg %p293
        $region54: #{tpu_custom_call.1} parent=11 // pred_check_branch
          %409 = sbr.rel (%p407) target = $region56
        $region55: #{tpu_custom_call.1} parent=11 // pred_region
          _
        $region56: #{tpu_custom_call.1} parent=11 // pred_fallthru
          _
        // Predicated region
        $region57: #{tpu_custom_call.1} parent=11 // pred_check
          %p410 = pneg %p314
        $region58: #{tpu_custom_call.1} parent=11 // pred_check_branch
          %412 = sbr.rel (%p410) target = $region60
        $region59: #{tpu_custom_call.1} parent=11 // pred_region
          _
        $region60: #{tpu_custom_call.1} parent=11 // pred_fallthru
          _
      $region12: #{tpu_custom_call.1} parent=5 // pred_fallthru
        _
      %p413 = scmp.lt.s32.totalorder %s24, 2
      // Predicated region
      $region61: #{tpu_custom_call.1} parent=5 // pred_check
        %p414 = pneg %p413
      $region62: #{tpu_custom_call.1} parent=5 // pred_check_branch
        %416 = sbr.rel (%p414) target = $region64
      $region63: #{tpu_custom_call.1} parent=5 // pred_region
        // Predicated region
        $region65: #{tpu_custom_call.1} parent=63 // pred_check
          %p417 = pneg %p56
        $region66: #{tpu_custom_call.1} parent=63 // pred_check_branch
          %419 = sbr.rel (%p417) target = $region68
        $region67: #{tpu_custom_call.1} parent=63 // pred_region
          %p420 = scmp.lt.s32.totalorder %s31, 1
          %s421 = scalar_select %p420, %s31, 1
          %s422 = smul.addr %s421, 8
          %s423 = smul.addr %s422, 8
          %s424 = scalar_lea.vmem %s0, %s423
        $region68: #{tpu_custom_call.1} parent=63 // pred_fallthru
          _
      $region64: #{tpu_custom_call.1} parent=5 // pred_fallthru
        _
      %p425 = scmp.le.s32.totalorder 1, %s24
      %p426 = scmp.lt.s32.totalorder %s24, 3
      %p427 = pnand %p425, %p426
      %p428 = pneg %p427
      // Predicated region
      $region69: #{tpu_custom_call.1} parent=5 // pred_check
        _
      $region70: #{tpu_custom_call.1} parent=5 // pred_check_branch
        %430 = sbr.rel (%p427) target = $region72
      $region71: #{tpu_custom_call.1} parent=5 // pred_region
        %s431 = ssub.s32 %s24, 1
        // Predicated region
        $region73: #{tpu_custom_call.1} parent=71 // pred_check
          %p432 = pneg %p167
        $region74: #{tpu_custom_call.1} parent=71 // pred_check_branch
          %434 = sbr.rel (%p432) target = $region76
        $region75: #{tpu_custom_call.1} parent=71 // pred_region
          %435 = dma.done [#allocation5], 1792
        $region76: #{tpu_custom_call.1} parent=71 // pred_fallthru
          _
        // Predicated region
        $region77: #{tpu_custom_call.1} parent=71 // pred_check
          %p436 = pneg %p209
        $region78: #{tpu_custom_call.1} parent=71 // pred_check_branch
          %438 = sbr.rel (%p436) target = $region80
        $region79: #{tpu_custom_call.1} parent=71 // pred_region
          %439 = dma.done [#allocation8], 2304
        $region80: #{tpu_custom_call.1} parent=71 // pred_fallthru
          _
        %p440 = scmp.lt.s32.totalorder %s33, 1
        %s441 = scalar_select %p440, %s33, 1
        %s442 = smul.addr %s441, 8
        %s443 = smul.addr %s442, 8
        %s444 = scalar_lea.vmem %s0, %s443
        %p445 = pneg %p62
        %p446 = pneg %p59
        %p447 = pneg %p83
        %p448 = pneg %p80
        %p449 = pneg %p104
        %p450 = pneg %p101
        %p451 = pneg %p125
        %p452 = pneg %p122
        %p453 = pneg %p146
        %p454 = pneg %p143
        %p455 = pneg %p167
        %p456 = pneg %p164
        %p457 = pneg %p188
        %p458 = pneg %p185
        %p459 = pneg %p209
        %p460 = pneg %p206
        %p461 = pneg %p230
        %p462 = pneg %p227
        %p463 = pneg %p251
        %p464 = pneg %p248
        %p465 = pneg %p272
        %p466 = pneg %p269
        %p467 = pneg %p293
        %p468 = pneg %p290
        %p469 = pneg %p314
        %p470 = pneg %p311
        %p471 = pneg %p342
        %p472 = pneg %p339
        %s473 = sand.u32 %s329, 1
        %s474 = scalar_lea.sflag [#allocation6], %s473
        %s475 = sand.u32 %s329, 1
        %s476 = smul.addr %s475, 16
        %s477 = scalar_lea.vmem [#allocation9], %s476
        %p478 = scmp.lt.s32.totalorder %s33, 1
        %s479 = scalar_select %p478, %s33, 1
        %s480 = smul.addr %s479, 8
        %s481 = smul.addr %s480, 8
        %s482 = scalar_lea.vmem %s0, %s481
        %s483 = smul.u32 2, %s34
        %v485 = vld [vmem:[%s1] ss:$8 sm:$0x3]
        %v486 = vld [vmem:[%s482] sm:$0xff]
        %v487 = vld [vmem:[%s482 + $0x8] sm:$0xff]
        %v488 = vld [vmem:[%s482 + $0x10] sm:$0xff]
        %v489 = vld [vmem:[%s482 + $0x18] sm:$0xff]
        %v490 = vld [vmem:[%s482 + $0x20] sm:$0xff]
        %v491 = vld [vmem:[%s482 + $0x28] sm:$0xff]
        %v493 = vlaneseq
        %v494 = vshrl.u32 %v493, 7
        %v495 = vsub.s32 0, %v494
        %v496 = vrot.slane %v485, %v495
        %v497 = vlaneseq
        %v498 = vshrl.u32 %v497, 7
        %v499 = vsub.s32 1, %v498
        %v500 = vrot.slane %v485, %v499
        %v503 = vmul.f32 %v486, %v496
        %v504 = vmul.f32 %v487, %v500
        %v505 = vmul.f32 %v488, %v496
        %v506 = vmul.f32 %v489, %v500
        %v507 = vmul.f32 %v490, %v496
        %v508 = vmul.f32 %v491, %v500
        %s509 = scalar_lea.vmem %s1, 1
        %v510 = vld [vmem:[%s509] ss:$8 sm:$0x3]
        %v512 = vlaneseq
        %v513 = vshrl.u32 %v512, 7
        %v514 = vsub.s32 0, %v513
        %v515 = vrot.slane %v510, %v514
        %v516 = vlaneseq
        %v517 = vshrl.u32 %v516, 7
        %v518 = vsub.s32 1, %v517
        %v519 = vrot.slane %v510, %v518
        %520 = vrot.lane.b32.xlu0 %v515, 8
        %v521 = vpop.permute.xlu0 %520
        %522 = vrot.lane.b32.xlu0 %v519, 8
        %v523 = vpop.permute.xlu0 %522
        %vm524 = vcmask 64512
        %v525 = vsel %vm524, %v521, %v523
        %v528 = vmul.f32 %v486, %v521
        %v529 = vmul.f32 %v487, %v525
        %v530 = vmul.f32 %v488, %v521
        %v531 = vmul.f32 %v489, %v525
        %v532 = vmul.f32 %v490, %v521
        %v533 = vmul.f32 %v491, %v525
        %540 = vrot.lane.b32.xlu0 %v528, 120
        %v541 = vpop.permute.xlu0 %540
        %542 = vrot.lane.b32.xlu0 %v529, 120
        %v543 = vpop.permute.xlu0 %542
        %544 = vrot.lane.b32.xlu0 %v530, 120
        %v545 = vpop.permute.xlu0 %544
        %546 = vrot.lane.b32.xlu0 %v531, 120
        %v547 = vpop.permute.xlu0 %546
        %548 = vrot.lane.b32.xlu0 %v532, 120
        %v549 = vpop.permute.xlu0 %548
        %550 = vrot.lane.b32.xlu0 %v533, 120
        %v551 = vpop.permute.xlu0 %550
        %vm552 = vcmask 982016
        %v553 = vsel %vm552, %v541, %v543
        %v554 = vsel %vm552, %v545, %v547
        %v555 = vsel %vm552, %v549, %v551
        %v562 = vadd.f32 %v503, %v553
        %v563 = vadd.f32 %v504, %v543
        %v564 = vadd.f32 %v505, %v554
        %v565 = vadd.f32 %v506, %v547
        %v566 = vadd.f32 %v507, %v555
        %v567 = vadd.f32 %v508, %v551
        %s568 = scalar_lea.vmem %s1, 2
        %v569 = vld [vmem:[%s568] ss:$8 sm:$0x3]
        %v571 = vlaneseq
        %v572 = vshrl.u32 %v571, 7
        %v573 = vsub.s32 0, %v572
        %v574 = vrot.slane %v569, %v573
        %v575 = vlaneseq
        %v576 = vshrl.u32 %v575, 7
        %v577 = vsub.s32 1, %v576
        %v578 = vrot.slane %v569, %v577
        %579 = vrot.lane.b32.xlu0 %v574, 16
        %v580 = vpop.permute.xlu0 %579
        %581 = vrot.lane.b32.xlu0 %v578, 16
        %v582 = vpop.permute.xlu0 %581
        %vm583 = vcmask 130048
        %v584 = vsel %vm583, %v580, %v582
        %v587 = vmul.f32 %v486, %v580
        %v588 = vmul.f32 %v487, %v584
        %v589 = vmul.f32 %v488, %v580
        %v590 = vmul.f32 %v489, %v584
        %v591 = vmul.f32 %v490, %v580
        %v592 = vmul.f32 %v491, %v584
        %599 = vrot.lane.b32.xlu0 %v587, 112
        %v600 = vpop.permute.xlu0 %599
        %601 = vrot.lane.b32.xlu0 %v588, 112
        %v602 = vpop.permute.xlu0 %601
        %603 = vrot.lane.b32.xlu0 %v589, 112
        %v604 = vpop.permute.xlu0 %603
        %605 = vrot.lane.b32.xlu0 %v590, 112
        %v606 = vpop.permute.xlu0 %605
        %607 = vrot.lane.b32.xlu0 %v591, 112
        %v608 = vpop.permute.xlu0 %607
        %609 = vrot.lane.b32.xlu0 %v592, 112
        %v610 = vpop.permute.xlu0 %609
        %vm611 = vcmask 916480
        %v612 = vsel %vm611, %v600, %v602
        %v613 = vsel %vm611, %v604, %v606
        %v614 = vsel %vm611, %v608, %v610
        %v621 = vadd.f32 %v562, %v612
        %v622 = vadd.f32 %v563, %v602
        %v623 = vadd.f32 %v564, %v613
        %v624 = vadd.f32 %v565, %v606
        %v625 = vadd.f32 %v566, %v614
        %v626 = vadd.f32 %v567, %v610
        %s627 = scalar_lea.vmem %s1, 3
        %v628 = vld [vmem:[%s627] ss:$8 sm:$0x3]
        %v629 = vld [vmem:[%s482] sm:$0xfe]
        %v630 = vld [vmem:[%s482 + $0x8] sm:$0xfe]
        %v631 = vld [vmem:[%s482 + $0x30] sm:$0x1]
        %v632 = vld [vmem:[%s482 + $0x38] sm:$0x1]
        %v634 = vlaneseq
        %v635 = vshrl.u32 %v634, 7
        %v636 = vsub.s32 0, %v635
        %v637 = vrot.slane %v628, %v636
        %v638 = vlaneseq
        %v639 = vshrl.u32 %v638, 7
        %v640 = vsub.s32 1, %v639
        %v641 = vrot.slane %v628, %v640
        %v644 = vmul.f32 %v629, %v637
        %v645 = vmul.f32 %v630, %v641
        %v646 = vmul.f32 %v488, %v637
        %v647 = vmul.f32 %v489, %v641
        %v648 = vmul.f32 %v490, %v637
        %v649 = vmul.f32 %v491, %v641
        %v650 = vmul.f32 %v631, %v637
        %v651 = vmul.f32 %v632, %v641
        %vm660 = vcmask 1046528
        %v661 = vrot.slane %v644, 1
        %v662 = vrot.slane %v646, 1
        %v663 = vsel %vm660, %v661, %v662
        %v664 = vrot.slane %v645, 1
        %v665 = vrot.slane %v647, 1
        %v666 = vsel %vm660, %v664, %v665
        %v667 = vrot.slane %v648, 1
        %v668 = vsel %vm660, %v662, %v667
        %v669 = vrot.slane %v649, 1
        %v670 = vsel %vm660, %v665, %v669
        %v671 = vrot.slane %v650, 1
        %v672 = vsel %vm660, %v667, %v671
        %v673 = vrot.slane %v651, 1
        %v674 = vsel %vm660, %v669, %v673
        %v681 = vadd.f32 %v621, %v663
        %v682 = vadd.f32 %v622, %v666
        %v683 = vadd.f32 %v623, %v668
        %v684 = vadd.f32 %v624, %v670
        %v685 = vadd.f32 %v625, %v672
        %v686 = vadd.f32 %v626, %v674
        %s687 = scalar_lea.vmem %s1, 4
        %v688 = vld [vmem:[%s687] ss:$8 sm:$0x3]
        %v690 = vlaneseq
        %v691 = vshrl.u32 %v690, 7
        %v692 = vsub.s32 0, %v691
        %v693 = vrot.slane %v688, %v692
        %v694 = vlaneseq
        %v695 = vshrl.u32 %v694, 7
        %v696 = vsub.s32 1, %v695
        %v697 = vrot.slane %v688, %v696
        %698 = vrot.lane.b32.xlu0 %v693, 8
        %v699 = vpop.permute.xlu0 %698
        %700 = vrot.lane.b32.xlu0 %v697, 8
        %v701 = vpop.permute.xlu0 %700
        %v702 = vsel %vm524, %v699, %v701
        %v705 = vmul.f32 %v629, %v699
        %v706 = vmul.f32 %v630, %v702
        %v707 = vmul.f32 %v488, %v699
        %v708 = vmul.f32 %v489, %v702
        %v709 = vmul.f32 %v490, %v699
        %v710 = vmul.f32 %v491, %v702
        %v711 = vmul.f32 %v631, %v699
        %v712 = vmul.f32 %v632, %v702
        %v721 = vrot.slane %v705, 1
        %v722 = vrot.slane %v707, 1
        %v723 = vsel %vm660, %v721, %v722
        %v724 = vrot.slane %v706, 1
        %v725 = vrot.slane %v708, 1
        %v726 = vsel %vm660, %v724, %v725
        %v727 = vrot.slane %v709, 1
        %v728 = vsel %vm660, %v722, %v727
        %v729 = vrot.slane %v710, 1
        %v730 = vsel %vm660, %v725, %v729
        %v731 = vrot.slane %v711, 1
        %v732 = vsel %vm660, %v727, %v731
        %v733 = vrot.slane %v712, 1
        %v734 = vsel %vm660, %v729, %v733
        %735 = vrot.lane.b32.xlu0 %v723, 120
        %v736 = vpop.permute.xlu0 %735
        %737 = vrot.lane.b32.xlu0 %v726, 120
        %v738 = vpop.permute.xlu0 %737
        %739 = vrot.lane.b32.xlu0 %v728, 120
        %v740 = vpop.permute.xlu0 %739
        %741 = vrot.lane.b32.xlu0 %v730, 120
        %v742 = vpop.permute.xlu0 %741
        %743 = vrot.lane.b32.xlu0 %v732, 120
        %v744 = vpop.permute.xlu0 %743
        %745 = vrot.lane.b32.xlu0 %v734, 120
        %v746 = vpop.permute.xlu0 %745
        %v747 = vsel %vm552, %v736, %v738
        %v748 = vsel %vm552, %v740, %v742
        %v749 = vsel %vm552, %v744, %v746
        %v756 = vadd.f32 %v681, %v747
        %v757 = vadd.f32 %v682, %v738
        %v758 = vadd.f32 %v683, %v748
        %v759 = vadd.f32 %v684, %v742
        %v760 = vadd.f32 %v685, %v749
        %v761 = vadd.f32 %v686, %v746
        %s762 = scalar_lea.vmem %s1, 5
        %v763 = vld [vmem:[%s762] ss:$8 sm:$0x3]
        %v765 = vlaneseq
        %v766 = vshrl.u32 %v765, 7
        %v767 = vsub.s32 0, %v766
        %v768 = vrot.slane %v763, %v767
        %v769 = vlaneseq
        %v770 = vshrl.u32 %v769, 7
        %v771 = vsub.s32 1, %v770
        %v772 = vrot.slane %v763, %v771
        %773 = vrot.lane.b32.xlu0 %v768, 16
        %v774 = vpop.permute.xlu0 %773
        %775 = vrot.lane.b32.xlu0 %v772, 16
        %v776 = vpop.permute.xlu0 %775
        %v777 = vsel %vm583, %v774, %v776
        %v780 = vmul.f32 %v629, %v774
        %v781 = vmul.f32 %v630, %v777
        %v782 = vmul.f32 %v488, %v774
        %v783 = vmul.f32 %v489, %v777
        %v784 = vmul.f32 %v490, %v774
        %v785 = vmul.f32 %v491, %v777
        %v786 = vmul.f32 %v631, %v774
        %v787 = vmul.f32 %v632, %v777
        %v796 = vrot.slane %v780, 1
        %v797 = vrot.slane %v782, 1
        %v798 = vsel %vm660, %v796, %v797
        %v799 = vrot.slane %v781, 1
        %v800 = vrot.slane %v783, 1
        %v801 = vsel %vm660, %v799, %v800
        %v802 = vrot.slane %v784, 1
        %v803 = vsel %vm660, %v797, %v802
        %v804 = vrot.slane %v785, 1
        %v805 = vsel %vm660, %v800, %v804
        %v806 = vrot.slane %v786, 1
        %v807 = vsel %vm660, %v802, %v806
        %v808 = vrot.slane %v787, 1
        %v809 = vsel %vm660, %v804, %v808
        %810 = vrot.lane.b32.xlu0 %v798, 112
        %v811 = vpop.permute.xlu0 %810
        %812 = vrot.lane.b32.xlu0 %v801, 112
        %v813 = vpop.permute.xlu0 %812
        %814 = vrot.lane.b32.xlu0 %v803, 112
        %v815 = vpop.permute.xlu0 %814
        %816 = vrot.lane.b32.xlu0 %v805, 112
        %v817 = vpop.permute.xlu0 %816
        %818 = vrot.lane.b32.xlu0 %v807, 112
        %v819 = vpop.permute.xlu0 %818
        %820 = vrot.lane.b32.xlu0 %v809, 112
        %v821 = vpop.permute.xlu0 %820
        %v822 = vsel %vm611, %v811, %v813
        %v823 = vsel %vm611, %v815, %v817
        %v824 = vsel %vm611, %v819, %v821
        %v831 = vadd.f32 %v756, %v822
        %v832 = vadd.f32 %v757, %v813
        %v833 = vadd.f32 %v758, %v823
        %v834 = vadd.f32 %v759, %v817
        %v835 = vadd.f32 %v760, %v824
        %v836 = vadd.f32 %v761, %v821
        %s837 = scalar_lea.vmem %s1, 6
        %v838 = vld [vmem:[%s837] ss:$8 sm:$0x3]
        %v839 = vld [vmem:[%s482] sm:$0xfc]
        %v840 = vld [vmem:[%s482 + $0x8] sm:$0xfc]
        %v841 = vld [vmem:[%s482 + $0x30] sm:$0x3]
        %v842 = vld [vmem:[%s482 + $0x38] sm:$0x3]
        %v844 = vlaneseq
        %v845 = vshrl.u32 %v844, 7
        %v846 = vsub.s32 0, %v845
        %v847 = vrot.slane %v838, %v846
        %v848 = vlaneseq
        %v849 = vshrl.u32 %v848, 7
        %v850 = vsub.s32 1, %v849
        %v851 = vrot.slane %v838, %v850
        %v854 = vmul.f32 %v839, %v847
        %v855 = vmul.f32 %v840, %v851
        %v856 = vmul.f32 %v488, %v847
        %v857 = vmul.f32 %v489, %v851
        %v858 = vmul.f32 %v490, %v847
        %v859 = vmul.f32 %v491, %v851
        %v860 = vmul.f32 %v841, %v847
        %v861 = vmul.f32 %v842, %v851
        %vm870 = vcmask 1045504
        %v871 = vrot.slane %v854, 2
        %v872 = vrot.slane %v856, 2
        %v873 = vsel %vm870, %v871, %v872
        %v874 = vrot.slane %v855, 2
        %v875 = vrot.slane %v857, 2
        %v876 = vsel %vm870, %v874, %v875
        %v877 = vrot.slane %v858, 2
        %v878 = vsel %vm870, %v872, %v877
        %v879 = vrot.slane %v859, 2
        %v880 = vsel %vm870, %v875, %v879
        %v881 = vrot.slane %v860, 2
        %v882 = vsel %vm870, %v877, %v881
        %v883 = vrot.slane %v861, 2
        %v884 = vsel %vm870, %v879, %v883
        %v891 = vadd.f32 %v831, %v873
        %v892 = vadd.f32 %v832, %v876
        %v893 = vadd.f32 %v833, %v878
        %v894 = vadd.f32 %v834, %v880
        %v895 = vadd.f32 %v835, %v882
        %v896 = vadd.f32 %v836, %v884
        %s897 = scalar_lea.vmem %s1, 7
        %v898 = vld [vmem:[%s897] ss:$8 sm:$0x3]
        %v900 = vlaneseq
        %v901 = vshrl.u32 %v900, 7
        %v902 = vsub.s32 0, %v901
        %v903 = vrot.slane %v898, %v902
        %v904 = vlaneseq
        %v905 = vshrl.u32 %v904, 7
        %v906 = vsub.s32 1, %v905
        %v907 = vrot.slane %v898, %v906
        %908 = vrot.lane.b32.xlu0 %v903, 8
        %v909 = vpop.permute.xlu0 %908
        %910 = vrot.lane.b32.xlu0 %v907, 8
        %v911 = vpop.permute.xlu0 %910
        %v912 = vsel %vm524, %v909, %v911
        %v915 = vmul.f32 %v839, %v909
        %v916 = vmul.f32 %v840, %v912
        %v917 = vmul.f32 %v488, %v909
        %v918 = vmul.f32 %v489, %v912
        %v919 = vmul.f32 %v490, %v909
        %v920 = vmul.f32 %v491, %v912
        %v921 = vmul.f32 %v841, %v909
        %v922 = vmul.f32 %v842, %v912
        %v931 = vrot.slane %v915, 2
        %v932 = vrot.slane %v917, 2
        %v933 = vsel %vm870, %v931, %v932
        %v934 = vrot.slane %v916, 2
        %v935 = vrot.slane %v918, 2
        %v936 = vsel %vm870, %v934, %v935
        %v937 = vrot.slane %v919, 2
        %v938 = vsel %vm870, %v932, %v937
        %v939 = vrot.slane %v920, 2
        %v940 = vsel %vm870, %v935, %v939
        %v941 = vrot.slane %v921, 2
        %v942 = vsel %vm870, %v937, %v941
        %v943 = vrot.slane %v922, 2
        %v944 = vsel %vm870, %v939, %v943
        %945 = vrot.lane.b32.xlu0 %v933, 120
        %v946 = vpop.permute.xlu0 %945
        %947 = vrot.lane.b32.xlu0 %v936, 120
        %v948 = vpop.permute.xlu0 %947
        %949 = vrot.lane.b32.xlu0 %v938, 120
        %v950 = vpop.permute.xlu0 %949
        %951 = vrot.lane.b32.xlu0 %v940, 120
        %v952 = vpop.permute.xlu0 %951
        %953 = vrot.lane.b32.xlu0 %v942, 120
        %v954 = vpop.permute.xlu0 %953
        %955 = vrot.lane.b32.xlu0 %v944, 120
        %v956 = vpop.permute.xlu0 %955
        %v957 = vsel %vm552, %v946, %v948
        %v958 = vsel %vm552, %v950, %v952
        %v959 = vsel %vm552, %v954, %v956
        %v966 = vadd.f32 %v891, %v957
        %v967 = vadd.f32 %v892, %v948
        %v968 = vadd.f32 %v893, %v958
        %v969 = vadd.f32 %v894, %v952
        %v970 = vadd.f32 %v895, %v959
        %v971 = vadd.f32 %v896, %v956
        %s972 = scalar_lea.vmem %s1, 16
        %v973 = vld [vmem:[%s972] ss:$8 sm:$0x3]
        %v975 = vlaneseq
        %v976 = vshrl.u32 %v975, 7
        %v977 = vsub.s32 0, %v976
        %v978 = vrot.slane %v973, %v977
        %v979 = vlaneseq
        %v980 = vshrl.u32 %v979, 7
        %v981 = vsub.s32 1, %v980
        %v982 = vrot.slane %v973, %v981
        %983 = vrot.lane.b32.xlu0 %v978, 16
        %v984 = vpop.permute.xlu0 %983
        %985 = vrot.lane.b32.xlu0 %v982, 16
        %v986 = vpop.permute.xlu0 %985
        %v987 = vsel %vm583, %v984, %v986
        %v990 = vmul.f32 %v839, %v984
        %v991 = vmul.f32 %v840, %v987
        %v992 = vmul.f32 %v488, %v984
        %v993 = vmul.f32 %v489, %v987
        %v994 = vmul.f32 %v490, %v984
        %v995 = vmul.f32 %v491, %v987
        %v996 = vmul.f32 %v841, %v984
        %v997 = vmul.f32 %v842, %v987
        %v1006 = vrot.slane %v990, 2
        %v1007 = vrot.slane %v992, 2
        %v1008 = vsel %vm870, %v1006, %v1007
        %v1009 = vrot.slane %v991, 2
        %v1010 = vrot.slane %v993, 2
        %v1011 = vsel %vm870, %v1009, %v1010
        %v1012 = vrot.slane %v994, 2
        %v1013 = vsel %vm870, %v1007, %v1012
        %v1014 = vrot.slane %v995, 2
        %v1015 = vsel %vm870, %v1010, %v1014
        %v1016 = vrot.slane %v996, 2
        %v1017 = vsel %vm870, %v1012, %v1016
        %v1018 = vrot.slane %v997, 2
        %v1019 = vsel %vm870, %v1014, %v1018
        %1020 = vrot.lane.b32.xlu0 %v1008, 112
        %v1021 = vpop.permute.xlu0 %1020
        %1022 = vrot.lane.b32.xlu0 %v1011, 112
        %v1023 = vpop.permute.xlu0 %1022
        %1024 = vrot.lane.b32.xlu0 %v1013, 112
        %v1025 = vpop.permute.xlu0 %1024
        %1026 = vrot.lane.b32.xlu0 %v1015, 112
        %v1027 = vpop.permute.xlu0 %1026
        %1028 = vrot.lane.b32.xlu0 %v1017, 112
        %v1029 = vpop.permute.xlu0 %1028
        %1030 = vrot.lane.b32.xlu0 %v1019, 112
        %v1031 = vpop.permute.xlu0 %1030
        %v1032 = vsel %vm611, %v1021, %v1023
        %v1033 = vsel %vm611, %v1025, %v1027
        %v1034 = vsel %vm611, %v1029, %v1031
        %v1041 = vadd.f32 %v966, %v1032
        %v1042 = vadd.f32 %v967, %v1023
        %v1043 = vadd.f32 %v968, %v1033
        %v1044 = vadd.f32 %v969, %v1027
        %v1045 = vadd.f32 %v970, %v1034
        %v1046 = vadd.f32 %v971, %v1031
        %v1047 = vld [vmem:[%s2] sm:$0x3]
        %v1049 = vlaneseq
        %v1050 = vshrl.u32 %v1049, 7
        %v1051 = vsub.s32 0, %v1050
        %v1052 = vrot.slane %v1047, %v1051
        %v1053 = vlaneseq
        %v1054 = vshrl.u32 %v1053, 7
        %v1055 = vsub.s32 1, %v1054
        %v1056 = vrot.slane %v1047, %v1055
        %v1059 = vadd.f32 %v1041, %v1052
        %v1060 = vadd.f32 %v1042, %v1056
        %v1061 = vadd.f32 %v1043, %v1052
        %v1062 = vadd.f32 %v1044, %v1056
        %v1063 = vadd.f32 %v1045, %v1052
        %v1064 = vadd.f32 %v1046, %v1056
        %v1065 = vsub.f32 0.0, %v1059
        %v1066 = vsub.f32 0.0, %v1060
        %v1067 = vsub.f32 0.0, %v1061
        %v1068 = vsub.f32 0.0, %v1062
        %v1069 = vsub.f32 0.0, %v1063
        %v1070 = vsub.f32 0.0, %v1064
        %v1071 = vmul.f32 %v1065, 1.442695
        %v1072 = vpow.pop %v1071
        %v1073 = vmul.f32 %v1066, 1.442695
        %v1074 = vpow.pop %v1073
        %v1075 = vmul.f32 %v1067, 1.442695
        %v1076 = vpow.pop %v1075
        %v1077 = vmul.f32 %v1068, 1.442695
        %v1078 = vpow.pop %v1077
        %v1079 = vmul.f32 %v1069, 1.442695
        %v1080 = vpow.pop %v1079
        %v1081 = vmul.f32 %v1070, 1.442695
        %v1082 = vpow.pop %v1081
        %v1083 = vadd.f32 %v1072, 1.0
        %v1084 = vadd.f32 %v1074, 1.0
        %v1085 = vadd.f32 %v1076, 1.0
        %v1086 = vadd.f32 %v1078, 1.0
        %v1087 = vadd.f32 %v1080, 1.0
        %v1088 = vadd.f32 %v1082, 1.0
        %v1089 = vrcp.pop %v1083
        %v1090 = vrcp.pop %v1084
        %v1091 = vrcp.pop %v1085
        %v1092 = vrcp.pop %v1086
        %v1093 = vrcp.pop %v1087
        %v1094 = vrcp.pop %v1088
        %v1095 = vmul.f32 %v1059, %v1089
        %v1096 = vmul.f32 %v1060, %v1090
        %v1097 = vmul.f32 %v1061, %v1091
        %v1098 = vmul.f32 %v1062, %v1092
        %v1099 = vmul.f32 %v1063, %v1093
        %v1100 = vmul.f32 %v1064, %v1094
        %v1101 = vpack.c.bf16 %v1097, %v1095
        %v1102 = vpack.c.bf16 %v1098, %v1096
        %v1103 = vpack.c.bf16 %v1099, %v1099
        %v1104 = vpack.c.bf16 %v1100, %v1100
        %v1105 = vld [vmem:[%s3] sm:$0xff]
        %v1106 = vld [vmem:[%s3 + $0x8] sm:$0xff]
        %v1107 = vld [vmem:[%s3 + $0x10] sm:$0xff]
        %v1108 = vld [vmem:[%s3 + $0x18] sm:$0xff]
        %v1109 = vld [vmem:[%s3 + $0x20] sm:$0xff]
        %v1110 = vld [vmem:[%s3 + $0x28] sm:$0xff]
        %v1111 = vld [vmem:[%s3 + $0x30] sm:$0xff]
        %v1112 = vld [vmem:[%s3 + $0x38] sm:$0xff]
        %v1113 = vld [vmem:[%s3 + $0x40] sm:$0xff]
        %v1114 = vld [vmem:[%s3 + $0x48] sm:$0xff]
        %v1115 = vld [vmem:[%s3 + $0x50] sm:$0xff]
        %v1116 = vld [vmem:[%s3 + $0x58] sm:$0xff]
        %v1117 = vld [vmem:[%s3 + $0x60] sm:$0xff]
        %v1118 = vld [vmem:[%s3 + $0x68] sm:$0xff]
        %v1119 = vld [vmem:[%s3 + $0x70] sm:$0xff]
        %v1120 = vld [vmem:[%s3 + $0x78] sm:$0xff]
        %v1121 = vld [vmem:[%s3 + $0x80] sm:$0xff]
        %v1122 = vld [vmem:[%s3 + $0x88] sm:$0xff]
        %v1123 = vld [vmem:[%s3 + $0x90] sm:$0xff]
        %v1124 = vld [vmem:[%s3 + $0x98] sm:$0xff]
        %v1125 = vld [vmem:[%s3 + $0xa0] sm:$0xff]
        %v1126 = vld [vmem:[%s3 + $0xa8] sm:$0xff]
        %v1127 = vld [vmem:[%s3 + $0xb0] sm:$0xff]
        %v1128 = vld [vmem:[%s3 + $0xb8] sm:$0xff]
        %v1129 = vld [vmem:[%s4] sm:$0x3]
        %v1131 = vlaneseq
        %v1132 = vshrl.u32 %v1131, 7
        %v1133 = vsub.s32 0, %v1132
        %v1134 = vrot.slane %v1129, %v1133
        %v1135 = vlaneseq
        %v1136 = vshrl.u32 %v1135, 7
        %v1137 = vsub.s32 1, %v1136
        %v1138 = vrot.slane %v1129, %v1137
        %v1165 = vunpack.c.l.b16 %v1105
        %v1166 = vunpack.c.h.b16 %v1105
        %v1167 = vunpack.c.l.b16 %v1106
        %v1168 = vunpack.c.h.b16 %v1106
        %v1169 = vunpack.c.l.b16 %v1107
        %v1170 = vunpack.c.h.b16 %v1107
        %v1171 = vunpack.c.l.b16 %v1108
        %v1172 = vunpack.c.h.b16 %v1108
        %v1173 = vunpack.c.l.b16 %v1109
        %v1174 = vunpack.c.h.b16 %v1109
        %v1175 = vunpack.c.l.b16 %v1110
        %v1176 = vunpack.c.h.b16 %v1110
        %v1177 = vunpack.c.l.b16 %v1111
        %v1178 = vunpack.c.h.b16 %v1111
        %v1179 = vunpack.c.l.b16 %v1112
        %v1180 = vunpack.c.h.b16 %v1112
        %v1181 = vunpack.c.l.b16 %v1113
        %v1182 = vunpack.c.h.b16 %v1113
        %v1183 = vunpack.c.l.b16 %v1114
        %v1184 = vunpack.c.h.b16 %v1114
        %v1185 = vunpack.c.l.b16 %v1115
        %v1186 = vunpack.c.h.b16 %v1115
        %v1187 = vunpack.c.l.b16 %v1116
        %v1188 = vunpack.c.h.b16 %v1116
        %v1189 = vunpack.c.l.b16 %v1117
        %v1190 = vunpack.c.h.b16 %v1117
        %v1191 = vunpack.c.l.b16 %v1118
        %v1192 = vunpack.c.h.b16 %v1118
        %v1193 = vunpack.c.l.b16 %v1119
        %v1194 = vunpack.c.h.b16 %v1119
        %v1195 = vunpack.c.l.b16 %v1120
        %v1196 = vunpack.c.h.b16 %v1120
        %v1197 = vunpack.c.l.b16 %v1121
        %v1198 = vunpack.c.h.b16 %v1121
        %v1199 = vunpack.c.l.b16 %v1122
        %v1200 = vunpack.c.h.b16 %v1122
        %v1201 = vunpack.c.l.b16 %v1123
        %v1202 = vunpack.c.h.b16 %v1123
        %v1203 = vunpack.c.l.b16 %v1124
        %v1204 = vunpack.c.h.b16 %v1124
        %v1205 = vunpack.c.l.b16 %v1125
        %v1206 = vunpack.c.h.b16 %v1125
        %v1207 = vunpack.c.l.b16 %v1126
        %v1208 = vunpack.c.h.b16 %v1126
        %v1209 = vunpack.c.l.b16 %v1127
        %v1210 = vunpack.c.h.b16 %v1127
        %v1211 = vunpack.c.l.b16 %v1128
        %v1212 = vunpack.c.h.b16 %v1128
        %v1213 = vpack.c.b16 %v1167, %v1165
        %v1214 = vpack.c.b16 %v1168, %v1166
        %v1215 = vpack.c.b16 %v1171, %v1169
        %v1216 = vpack.c.b16 %v1172, %v1170
        %v1217 = vpack.c.b16 %v1175, %v1173
        %v1218 = vpack.c.b16 %v1176, %v1174
        %v1219 = vpack.c.b16 %v1179, %v1177
        %v1220 = vpack.c.b16 %v1180, %v1178
        %v1221 = vpack.c.b16 %v1183, %v1181
        %v1222 = vpack.c.b16 %v1184, %v1182
        %v1223 = vpack.c.b16 %v1187, %v1185
        %v1224 = vpack.c.b16 %v1188, %v1186
        %v1225 = vpack.c.b16 %v1191, %v1189
        %v1226 = vpack.c.b16 %v1192, %v1190
        %v1227 = vpack.c.b16 %v1195, %v1193
        %v1228 = vpack.c.b16 %v1196, %v1194
        %v1229 = vpack.c.b16 %v1199, %v1197
        %v1230 = vpack.c.b16 %v1200, %v1198
        %v1231 = vpack.c.b16 %v1203, %v1201
        %v1232 = vpack.c.b16 %v1204, %v1202
        %v1233 = vpack.c.b16 %v1207, %v1205
        %v1234 = vpack.c.b16 %v1208, %v1206
        %v1235 = vpack.c.b16 %v1211, %v1209
        %v1236 = vpack.c.b16 %v1212, %v1210
        %vm1261 = vcmask 523264
        %v1263 = vsel %vm1261, %v1102, 0
        %v1266 = vsel %vm1261, %v1104, 0
        %1268 = vmatprep.subr.bf16.mxu0 %v1214
        %1269 = vmatpush1.bf16.msra.mxu0 %v1213
        %1270 = vmatprep.subr.bf16.mxu0 %v1216
        %1271 = vmatpush1.bf16.msra.mxu0 %v1215
        %1272 = vmatprep.subr.bf16.mxu0 %v1218
        %1273 = vmatpush1.bf16.msra.mxu0 %v1217
        %1274 = vmatprep.subr.bf16.mxu0 %v1220
        %1275 = vmatpush1.bf16.msra.mxu0 %v1219
        %1276 = vmatprep.subr.bf16.mxu0 %v1222
        %1277 = vmatpush1.bf16.msra.mxu0 %v1221
        %1278 = vmatprep.subr.bf16.mxu0 %v1224
        %1279 = vmatpush1.bf16.msra.mxu0 %v1223
        %1280 = vmatprep.subr.bf16.mxu0 %v1226
        %1281 = vmatpush1.bf16.msra.mxu0 %v1225
        %1282 = vmatprep.subr.bf16.mxu0 %v1228
        %1283 = vmatpush1.bf16.msra.mxu0 %v1227
        %1284 = vmatprep.subr.bf16.mxu0 %v1230
        %1285 = vmatpush1.bf16.msra.mxu0 %v1229
        %1286 = vmatprep.subr.bf16.mxu0 %v1232
        %1287 = vmatpush1.bf16.msra.mxu0 %v1231
        %1288 = vmatprep.subr.bf16.mxu0 %v1234
        %1289 = vmatpush1.bf16.msra.mxu0 %v1233
        %1290 = vmatprep.subr.bf16.mxu0 %v1236
        %1291 = vmatpush1.bf16.msra.mxu0 %v1235
        %1292 = vmatprep.subr.bf16.mxu0 0
        %1293 = vmatpush1.bf16.msra.mxu0 0
        %1294 = vmatprep.subr.bf16.mxu0 0
        %1295 = vmatpush1.bf16.msra.mxu0 0
        %1296 = vmatprep.subr.bf16.mxu0 0
        %1297 = vmatpush1.bf16.msra.mxu0 0
        %1298 = vmatprep.subr.bf16.mxu0 0
        %1299 = vmatpush1.bf16.msra.mxu0 0
        %1300 = vmatprep.mubr.bf16.mxu0 %v1263
        %1301 = vmatmul.mubr.bf16.gmra.mrb[0].mxu0 %v1101
        %v1302 = vpop.f32.mrb[0].mxu0
        %v1303 = vadd.f32 %v1134, %v1302
        %v1304 = vpop.f32.mrb[0].mxu0
        %v1305 = vadd.f32 %v1138, %v1304
        %v1306 = vpop.f32.mrb[0].mxu0
        %v1307 = vadd.f32 %v1134, %v1306
        %v1308 = vpop.f32.mrb[0].mxu0
        %v1309 = vadd.f32 %v1138, %v1308
        %1310 = vmatprep.mubr.bf16.mxu0 %v1266
        %1311 = vmatmul.mubr.bf16.gmra.mrb[0].mxu0 %v1103
        %v1312 = vpop.f32.mrb[0].mxu0
        %v1313 = vadd.f32 %v1134, %v1312
        %v1314 = vpop.f32.mrb[0].mxu0
        %v1315 = vadd.f32 %v1138, %v1314
        %v1316 = vpop.f32.mrb[0].mxu0
        %v1317 = vpop.f32.mrb[0].mxu0
        %1318 = vdwg.mxu0
        %v1319 = vlaneseq
        %v1320 = vshrl.u32 %v1319, 7
        %v1321 = vadd.s32 %v1320, 8
        %v1322 = vadd.s32 %v1320, 16
        %v1323 = vadd.s32 %v1320, 4294967292
        %v1324 = vadd.s32 %v1321, 4294967292
        %v1325 = vadd.s32 %v1322, 4294967292
        %vm1326 = vcmp.ge.s32.totalorder %v1323, 0
        %vm1327 = vcmp.ge.s32.totalorder %v1324, 0
        %vm1328 = vcmp.ge.s32.totalorder %v1325, 0
        %vm1329 = vcmp.lt.s32.totalorder %v1323, 16
        %vm1330 = vcmp.lt.s32.totalorder %v1324, 16
        %vm1331 = vcmp.lt.s32.totalorder %v1325, 16
        %vm1332 = vmand %vm1326, %vm1329
        %vm1333 = vmand %vm1327, %vm1330
        %vm1334 = vmand %vm1328, %vm1331
        %v1335 = vsel %vm1332, 1, 0
        %v1336 = vsel %vm1333, 1, 0
        %v1337 = vsel %vm1334, 1, 0
        %v1338 = vcvt.s32.f32 %v1335
        %v1339 = vcvt.s32.f32 %v1336
        %v1340 = vcvt.s32.f32 %v1337
        %v1341 = vsub.f32 0.0, %v1303
        %v1342 = vsub.f32 0.0, %v1305
        %v1343 = vsub.f32 0.0, %v1307
        %v1344 = vsub.f32 0.0, %v1309
        %v1345 = vsub.f32 0.0, %v1313
        %v1346 = vsub.f32 0.0, %v1315
        %v1347 = vmul.f32 %v1341, 1.442695
        %v1348 = vpow.pop %v1347
        %v1349 = vmul.f32 %v1342, 1.442695
        %v1350 = vpow.pop %v1349
        %v1351 = vmul.f32 %v1343, 1.442695
        %v1352 = vpow.pop %v1351
        %v1353 = vmul.f32 %v1344, 1.442695
        %v1354 = vpow.pop %v1353
        %v1355 = vmul.f32 %v1345, 1.442695
        %v1356 = vpow.pop %v1355
        %v1357 = vmul.f32 %v1346, 1.442695
        %v1358 = vpow.pop %v1357
        %v1359 = vadd.f32 %v1348, 1.0
        %v1360 = vadd.f32 %v1350, 1.0
        %v1361 = vadd.f32 %v1352, 1.0
        %v1362 = vadd.f32 %v1354, 1.0
        %v1363 = vadd.f32 %v1356, 1.0
        %v1364 = vadd.f32 %v1358, 1.0
        %v1365 = vrcp.pop %v1359
        %v1366 = vrcp.pop %v1360
        %v1367 = vrcp.pop %v1361
        %v1368 = vrcp.pop %v1362
        %v1369 = vrcp.pop %v1363
        %v1370 = vrcp.pop %v1364
        %v1371 = vmul.f32 %v1303, %v1365
        %v1372 = vmul.f32 %v1305, %v1366
        %v1373 = vmul.f32 %v1307, %v1367
        %v1374 = vmul.f32 %v1309, %v1368
        %v1375 = vmul.f32 %v1313, %v1369
        %v1376 = vmul.f32 %v1315, %v1370
        %v1377 = vld [vmem:[%s11] sm:$0x3]
        %v1379 = vlaneseq
        %v1380 = vshrl.u32 %v1379, 7
        %v1381 = vsub.s32 0, %v1380
        %v1382 = vrot.slane %v1377, %v1381
        %v1383 = vlaneseq
        %v1384 = vshrl.u32 %v1383, 7
        %v1385 = vsub.s32 1, %v1384
        %v1386 = vrot.slane %v1377, %v1385
        %v1389 = vmul.f32 %v1338, %v1382
        %v1390 = vmul.f32 %v1338, %v1386
        %v1391 = vmul.f32 %v1339, %v1382
        %v1392 = vmul.f32 %v1339, %v1386
        %v1393 = vmul.f32 %v1340, %v1382
        %v1394 = vmul.f32 %v1340, %v1386
        %v1395 = vmul.f32 %v1371, %v1389
        %v1396 = vmul.f32 %v1372, %v1390
        %v1397 = vmul.f32 %v1373, %v1391
        %v1398 = vmul.f32 %v1374, %v1392
        %v1399 = vmul.f32 %v1375, %v1393
        %v1400 = vmul.f32 %v1376, %v1394
        %1401 = vst [vmem:[#allocation2] sm:$0xff] %v1395
        %1402 = vst.msk [vmem:[#allocation2 + $0x8] sm:$0xff] %vm1261, %v1396
        %1403 = vst [vmem:[#allocation2 + $0x10] sm:$0xff] %v1397
        %1404 = vst.msk [vmem:[#allocation2 + $0x18] sm:$0xff] %vm1261, %v1398
        %1405 = vst [vmem:[#allocation2 + $0x20] sm:$0xff] %v1399
        %1406 = vst.msk [vmem:[#allocation2 + $0x28] sm:$0xff] %vm1261, %v1400
        %v1407 = vld [vmem:[#allocation4] ss:$8 sm:$0x3]
        %v1408 = vld [vmem:[#allocation2] sm:$0xff]
        %v1409 = vld [vmem:[#allocation2 + $0x8] sm:$0xff]
        %v1410 = vld [vmem:[#allocation2 + $0x10] sm:$0xff]
        %v1411 = vld [vmem:[#allocation2 + $0x18] sm:$0xff]
        %v1412 = vld [vmem:[#allocation2 + $0x20] sm:$0x3]
        %v1413 = vld [vmem:[#allocation2 + $0x28] sm:$0x3]
        %v1415 = vlaneseq
        %v1416 = vshrl.u32 %v1415, 7
        %v1417 = vsub.s32 0, %v1416
        %v1418 = vrot.slane %v1407, %v1417
        %v1419 = vlaneseq
        %v1420 = vshrl.u32 %v1419, 7
        %v1421 = vsub.s32 1, %v1420
        %v1422 = vrot.slane %v1407, %v1421
        %v1425 = vmul.f32 %v1408, %v1418
        %v1426 = vmul.f32 %v1409, %v1422
        %v1427 = vmul.f32 %v1410, %v1418
        %v1428 = vmul.f32 %v1411, %v1422
        %v1429 = vmul.f32 %v1412, %v1418
        %v1430 = vmul.f32 %v1413, %v1422
        %s1431 = scalar_lea.vmem [#allocation4], 1
        %v1432 = vld [vmem:[%s1431] ss:$8 sm:$0x3]
        %v1434 = vlaneseq
        %v1435 = vshrl.u32 %v1434, 7
        %v1436 = vsub.s32 0, %v1435
        %v1437 = vrot.slane %v1432, %v1436
        %v1438 = vlaneseq
        %v1439 = vshrl.u32 %v1438, 7
        %v1440 = vsub.s32 1, %v1439
        %v1441 = vrot.slane %v1432, %v1440
        %1442 = vrot.lane.b32.xlu0 %v1437, 8
        %v1443 = vpop.permute.xlu0 %1442
        %1444 = vrot.lane.b32.xlu0 %v1441, 8
        %v1445 = vpop.permute.xlu0 %1444
        %v1446 = vsel %vm524, %v1443, %v1445
        %v1449 = vmul.f32 %v1408, %v1443
        %v1450 = vmul.f32 %v1409, %v1446
        %v1451 = vmul.f32 %v1410, %v1443
        %v1452 = vmul.f32 %v1411, %v1446
        %v1453 = vmul.f32 %v1412, %v1443
        %v1454 = vmul.f32 %v1413, %v1446
        %1461 = vrot.lane.b32.xlu0 %v1449, 120
        %v1462 = vpop.permute.xlu0 %1461
        %1463 = vrot.lane.b32.xlu0 %v1450, 120
        %v1464 = vpop.permute.xlu0 %1463
        %1465 = vrot.lane.b32.xlu0 %v1451, 120
        %v1466 = vpop.permute.xlu0 %1465
        %1467 = vrot.lane.b32.xlu0 %v1452, 120
        %v1468 = vpop.permute.xlu0 %1467
        %1469 = vrot.lane.b32.xlu0 %v1453, 120
        %v1470 = vpop.permute.xlu0 %1469
        %1471 = vrot.lane.b32.xlu0 %v1454, 120
        %v1472 = vpop.permute.xlu0 %1471
        %v1473 = vsel %vm552, %v1462, %v1464
        %v1474 = vsel %vm552, %v1466, %v1468
        %v1475 = vsel %vm552, %v1470, %v1472
        %v1482 = vadd.f32 %v1425, %v1473
        %v1483 = vadd.f32 %v1426, %v1464
        %v1484 = vadd.f32 %v1427, %v1474
        %v1485 = vadd.f32 %v1428, %v1468
        %v1486 = vadd.f32 %v1429, %v1475
        %v1487 = vadd.f32 %v1430, %v1472
        %s1488 = scalar_lea.vmem [#allocation4], 2
        %v1489 = vld [vmem:[%s1488] ss:$8 sm:$0x3]
        %v1491 = vlaneseq
        %v1492 = vshrl.u32 %v1491, 7
        %v1493 = vsub.s32 0, %v1492
        %v1494 = vrot.slane %v1489, %v1493
        %v1495 = vlaneseq
        %v1496 = vshrl.u32 %v1495, 7
        %v1497 = vsub.s32 1, %v1496
        %v1498 = vrot.slane %v1489, %v1497
        %1499 = vrot.lane.b32.xlu0 %v1494, 16
        %v1500 = vpop.permute.xlu0 %1499
        %1501 = vrot.lane.b32.xlu0 %v1498, 16
        %v1502 = vpop.permute.xlu0 %1501
        %v1503 = vsel %vm583, %v1500, %v1502
        %v1506 = vmul.f32 %v1408, %v1500
        %v1507 = vmul.f32 %v1409, %v1503
        %v1508 = vmul.f32 %v1410, %v1500
        %v1509 = vmul.f32 %v1411, %v1503
        %v1510 = vmul.f32 %v1412, %v1500
        %v1511 = vmul.f32 %v1413, %v1503
        %1518 = vrot.lane.b32.xlu0 %v1506, 112
        %v1519 = vpop.permute.xlu0 %1518
        %1520 = vrot.lane.b32.xlu0 %v1507, 112
        %v1521 = vpop.permute.xlu0 %1520
        %1522 = vrot.lane.b32.xlu0 %v1508, 112
        %v1523 = vpop.permute.xlu0 %1522
        %1524 = vrot.lane.b32.xlu0 %v1509, 112
        %v1525 = vpop.permute.xlu0 %1524
        %1526 = vrot.lane.b32.xlu0 %v1510, 112
        %v1527 = vpop.permute.xlu0 %1526
        %1528 = vrot.lane.b32.xlu0 %v1511, 112
        %v1529 = vpop.permute.xlu0 %1528
        %v1530 = vsel %vm611, %v1519, %v1521
        %v1531 = vsel %vm611, %v1523, %v1525
        %v1532 = vsel %vm611, %v1527, %v1529
        %v1539 = vadd.f32 %v1482, %v1530
        %v1540 = vadd.f32 %v1483, %v1521
        %v1541 = vadd.f32 %v1484, %v1531
        %v1542 = vadd.f32 %v1485, %v1525
        %v1543 = vadd.f32 %v1486, %v1532
        %v1544 = vadd.f32 %v1487, %v1529
        %s1545 = scalar_lea.vmem [#allocation4], 3
        %v1546 = vld [vmem:[%s1545] ss:$8 sm:$0x3]
        %v1548 = vlaneseq
        %v1549 = vshrl.u32 %v1548, 7
        %v1550 = vsub.s32 0, %v1549
        %v1551 = vrot.slane %v1546, %v1550
        %v1552 = vlaneseq
        %v1553 = vshrl.u32 %v1552, 7
        %v1554 = vsub.s32 1, %v1553
        %v1555 = vrot.slane %v1546, %v1554
        %1556 = vrot.lane.b32.xlu0 %v1551, 24
        %v1557 = vpop.permute.xlu0 %1556
        %1558 = vrot.lane.b32.xlu0 %v1555, 24
        %v1559 = vpop.permute.xlu0 %1558
        %vm1560 = vcmask 195584
        %v1561 = vsel %vm1560, %v1557, %v1559
        %v1564 = vmul.f32 %v1408, %v1557
        %v1565 = vmul.f32 %v1409, %v1561
        %v1566 = vmul.f32 %v1410, %v1557
        %v1567 = vmul.f32 %v1411, %v1561
        %v1568 = vmul.f32 %v1412, %v1557
        %v1569 = vmul.f32 %v1413, %v1561
        %1576 = vrot.lane.b32.xlu0 %v1564, 104
        %v1577 = vpop.permute.xlu0 %1576
        %1578 = vrot.lane.b32.xlu0 %v1565, 104
        %v1579 = vpop.permute.xlu0 %1578
        %1580 = vrot.lane.b32.xlu0 %v1566, 104
        %v1581 = vpop.permute.xlu0 %1580
        %1582 = vrot.lane.b32.xlu0 %v1567, 104
        %v1583 = vpop.permute.xlu0 %1582
        %1584 = vrot.lane.b32.xlu0 %v1568, 104
        %v1585 = vpop.permute.xlu0 %1584
        %1586 = vrot.lane.b32.xlu0 %v1569, 104
        %v1587 = vpop.permute.xlu0 %1586
        %vm1588 = vcmask 850944
        %v1589 = vsel %vm1588, %v1577, %v1579
        %v1590 = vsel %vm1588, %v1581, %v1583
        %v1591 = vsel %vm1588, %v1585, %v1587
        %v1598 = vadd.f32 %v1539, %v1589
        %v1599 = vadd.f32 %v1540, %v1579
        %v1600 = vadd.f32 %v1541, %v1590
        %v1601 = vadd.f32 %v1542, %v1583
        %v1602 = vadd.f32 %v1543, %v1591
        %v1603 = vadd.f32 %v1544, %v1587
        %s1604 = scalar_lea.vmem [#allocation4], 4
        %v1605 = vld [vmem:[%s1604] ss:$8 sm:$0x3]
        %v1607 = vlaneseq
        %v1608 = vshrl.u32 %v1607, 7
        %v1609 = vsub.s32 0, %v1608
        %v1610 = vrot.slane %v1605, %v1609
        %v1611 = vlaneseq
        %v1612 = vshrl.u32 %v1611, 7
        %v1613 = vsub.s32 1, %v1612
        %v1614 = vrot.slane %v1605, %v1613
        %1615 = vrot.lane.b32.xlu0 %v1610, 32
        %v1616 = vpop.permute.xlu0 %1615
        %1617 = vrot.lane.b32.xlu0 %v1614, 32
        %v1618 = vpop.permute.xlu0 %1617
        %vm1619 = vcmask 261120
        %v1620 = vsel %vm1619, %v1616, %v1618
        %v1623 = vmul.f32 %v1408, %v1616
        %v1624 = vmul.f32 %v1409, %v1620
        %v1625 = vmul.f32 %v1410, %v1616
        %v1626 = vmul.f32 %v1411, %v1620
        %v1627 = vmul.f32 %v1412, %v1616
        %v1628 = vmul.f32 %v1413, %v1620
        %1635 = vrot.lane.b32.xlu0 %v1623, 96
        %v1636 = vpop.permute.xlu0 %1635
        %1637 = vrot.lane.b32.xlu0 %v1624, 96
        %v1638 = vpop.permute.xlu0 %1637
        %1639 = vrot.lane.b32.xlu0 %v1625, 96
        %v1640 = vpop.permute.xlu0 %1639
        %1641 = vrot.lane.b32.xlu0 %v1626, 96
        %v1642 = vpop.permute.xlu0 %1641
        %1643 = vrot.lane.b32.xlu0 %v1627, 96
        %v1644 = vpop.permute.xlu0 %1643
        %1645 = vrot.lane.b32.xlu0 %v1628, 96
        %v1646 = vpop.permute.xlu0 %1645
        %vm1647 = vcmask 785408
        %v1648 = vsel %vm1647, %v1636, %v1638
        %v1649 = vsel %vm1647, %v1640, %v1642
        %v1650 = vsel %vm1647, %v1644, %v1646
        %v1657 = vadd.f32 %v1598, %v1648
        %v1658 = vadd.f32 %v1599, %v1638
        %v1659 = vadd.f32 %v1600, %v1649
        %v1660 = vadd.f32 %v1601, %v1642
        %v1661 = vadd.f32 %v1602, %v1650
        %v1662 = vadd.f32 %v1603, %v1646
        %s1663 = scalar_lea.vmem [#allocation4], 5
        %v1664 = vld [vmem:[%s1663] ss:$8 sm:$0x3]
        %v1666 = vlaneseq
        %v1667 = vshrl.u32 %v1666, 7
        %v1668 = vsub.s32 0, %v1667
        %v1669 = vrot.slane %v1664, %v1668
        %v1670 = vlaneseq
        %v1671 = vshrl.u32 %v1670, 7
        %v1672 = vsub.s32 1, %v1671
        %v1673 = vrot.slane %v1664, %v1672
        %1674 = vrot.lane.b32.xlu0 %v1669, 40
        %v1675 = vpop.permute.xlu0 %1674
        %1676 = vrot.lane.b32.xlu0 %v1673, 40
        %v1677 = vpop.permute.xlu0 %1676
        %vm1678 = vcmask 326656
        %v1679 = vsel %vm1678, %v1675, %v1677
        %v1682 = vmul.f32 %v1408, %v1675
        %v1683 = vmul.f32 %v1409, %v1679
        %v1684 = vmul.f32 %v1410, %v1675
        %v1685 = vmul.f32 %v1411, %v1679
        %v1686 = vmul.f32 %v1412, %v1675
        %v1687 = vmul.f32 %v1413, %v1679
        %1694 = vrot.lane.b32.xlu0 %v1682, 88
        %v1695 = vpop.permute.xlu0 %1694
        %1696 = vrot.lane.b32.xlu0 %v1683, 88
        %v1697 = vpop.permute.xlu0 %1696
        %1698 = vrot.lane.b32.xlu0 %v1684, 88
        %v1699 = vpop.permute.xlu0 %1698
        %1700 = vrot.lane.b32.xlu0 %v1685, 88
        %v1701 = vpop.permute.xlu0 %1700
        %1702 = vrot.lane.b32.xlu0 %v1686, 88
        %v1703 = vpop.permute.xlu0 %1702
        %1704 = vrot.lane.b32.xlu0 %v1687, 88
        %v1705 = vpop.permute.xlu0 %1704
        %vm1706 = vcmask 719872
        %v1707 = vsel %vm1706, %v1695, %v1697
        %v1708 = vsel %vm1706, %v1699, %v1701
        %v1709 = vsel %vm1706, %v1703, %v1705
        %v1716 = vadd.f32 %v1657, %v1707
        %v1717 = vadd.f32 %v1658, %v1697
        %v1718 = vadd.f32 %v1659, %v1708
        %v1719 = vadd.f32 %v1660, %v1701
        %v1720 = vadd.f32 %v1661, %v1709
        %v1721 = vadd.f32 %v1662, %v1705
        %s1722 = scalar_lea.vmem [#allocation4], 6
        %v1723 = vld [vmem:[%s1722] ss:$8 sm:$0x3]
        %v1725 = vlaneseq
        %v1726 = vshrl.u32 %v1725, 7
        %v1727 = vsub.s32 0, %v1726
        %v1728 = vrot.slane %v1723, %v1727
        %v1729 = vlaneseq
        %v1730 = vshrl.u32 %v1729, 7
        %v1731 = vsub.s32 1, %v1730
        %v1732 = vrot.slane %v1723, %v1731
        %1733 = vrot.lane.b32.xlu0 %v1728, 48
        %v1734 = vpop.permute.xlu0 %1733
        %1735 = vrot.lane.b32.xlu0 %v1732, 48
        %v1736 = vpop.permute.xlu0 %1735
        %vm1737 = vcmask 392192
        %v1738 = vsel %vm1737, %v1734, %v1736
        %v1741 = vmul.f32 %v1408, %v1734
        %v1742 = vmul.f32 %v1409, %v1738
        %v1743 = vmul.f32 %v1410, %v1734
        %v1744 = vmul.f32 %v1411, %v1738
        %v1745 = vmul.f32 %v1412, %v1734
        %v1746 = vmul.f32 %v1413, %v1738
        %1753 = vrot.lane.b32.xlu0 %v1741, 80
        %v1754 = vpop.permute.xlu0 %1753
        %1755 = vrot.lane.b32.xlu0 %v1742, 80
        %v1756 = vpop.permute.xlu0 %1755
        %1757 = vrot.lane.b32.xlu0 %v1743, 80
        %v1758 = vpop.permute.xlu0 %1757
        %1759 = vrot.lane.b32.xlu0 %v1744, 80
        %v1760 = vpop.permute.xlu0 %1759
        %1761 = vrot.lane.b32.xlu0 %v1745, 80
        %v1762 = vpop.permute.xlu0 %1761
        %1763 = vrot.lane.b32.xlu0 %v1746, 80
        %v1764 = vpop.permute.xlu0 %1763
        %vm1765 = vcmask 654336
        %v1766 = vsel %vm1765, %v1754, %v1756
        %v1767 = vsel %vm1765, %v1758, %v1760
        %v1768 = vsel %vm1765, %v1762, %v1764
        %v1775 = vadd.f32 %v1716, %v1766
        %v1776 = vadd.f32 %v1717, %v1756
        %v1777 = vadd.f32 %v1718, %v1767
        %v1778 = vadd.f32 %v1719, %v1760
        %v1779 = vadd.f32 %v1720, %v1768
        %v1780 = vadd.f32 %v1721, %v1764
        %s1781 = scalar_lea.vmem [#allocation4], 7
        %v1782 = vld [vmem:[%s1781] ss:$8 sm:$0x3]
        %v1783 = vld [vmem:[#allocation2] sm:$0xfe]
        %v1784 = vld [vmem:[#allocation2 + $0x8] sm:$0xfe]
        %v1785 = vld [vmem:[#allocation2 + $0x20] sm:$0x7]
        %v1786 = vld [vmem:[#allocation2 + $0x28] sm:$0x7]
        %v1788 = vlaneseq
        %v1789 = vshrl.u32 %v1788, 7
        %v1790 = vsub.s32 0, %v1789
        %v1791 = vrot.slane %v1782, %v1790
        %v1792 = vlaneseq
        %v1793 = vshrl.u32 %v1792, 7
        %v1794 = vsub.s32 1, %v1793
        %v1795 = vrot.slane %v1782, %v1794
        %v1798 = vmul.f32 %v1783, %v1791
        %v1799 = vmul.f32 %v1784, %v1795
        %v1800 = vmul.f32 %v1410, %v1791
        %v1801 = vmul.f32 %v1411, %v1795
        %v1802 = vmul.f32 %v1785, %v1791
        %v1803 = vmul.f32 %v1786, %v1795
        %v1810 = vrot.slane %v1798, 1
        %v1811 = vrot.slane %v1800, 1
        %v1812 = vsel %vm660, %v1810, %v1811
        %v1813 = vrot.slane %v1799, 1
        %v1814 = vrot.slane %v1801, 1
        %v1815 = vsel %vm660, %v1813, %v1814
        %v1816 = vrot.slane %v1802, 1
        %v1817 = vsel %vm660, %v1811, %v1816
        %v1818 = vrot.slane %v1803, 1
        %v1819 = vsel %vm660, %v1814, %v1818
        %v1826 = vadd.f32 %v1775, %v1812
        %v1827 = vadd.f32 %v1776, %v1815
        %v1828 = vadd.f32 %v1777, %v1817
        %v1829 = vadd.f32 %v1778, %v1819
        %v1830 = vadd.f32 %v1779, %v1816
        %v1831 = vadd.f32 %v1780, %v1818
        %s1832 = scalar_lea.vmem [#allocation4], 16
        %v1833 = vld [vmem:[%s1832] ss:$8 sm:$0x3]
        %v1835 = vlaneseq
        %v1836 = vshrl.u32 %v1835, 7
        %v1837 = vsub.s32 0, %v1836
        %v1838 = vrot.slane %v1833, %v1837
        %v1839 = vlaneseq
        %v1840 = vshrl.u32 %v1839, 7
        %v1841 = vsub.s32 1, %v1840
        %v1842 = vrot.slane %v1833, %v1841
        %1843 = vrot.lane.b32.xlu0 %v1838, 8
        %v1844 = vpop.permute.xlu0 %1843
        %1845 = vrot.lane.b32.xlu0 %v1842, 8
        %v1846 = vpop.permute.xlu0 %1845
        %v1847 = vsel %vm524, %v1844, %v1846
        %v1850 = vmul.f32 %v1783, %v1844
        %v1851 = vmul.f32 %v1784, %v1847
        %v1852 = vmul.f32 %v1410, %v1844
        %v1853 = vmul.f32 %v1411, %v1847
        %v1854 = vmul.f32 %v1785, %v1844
        %v1855 = vmul.f32 %v1786, %v1847
        %v1862 = vrot.slane %v1850, 1
        %v1863 = vrot.slane %v1852, 1
        %v1864 = vsel %vm660, %v1862, %v1863
        %v1865 = vrot.slane %v1851, 1
        %v1866 = vrot.slane %v1853, 1
        %v1867 = vsel %vm660, %v1865, %v1866
        %v1868 = vrot.slane %v1854, 1
        %v1869 = vsel %vm660, %v1863, %v1868
        %v1870 = vrot.slane %v1855, 1
        %v1871 = vsel %vm660, %v1866, %v1870
        %1872 = vrot.lane.b32.xlu0 %v1864, 120
        %v1873 = vpop.permute.xlu0 %1872
        %1874 = vrot.lane.b32.xlu0 %v1867, 120
        %v1875 = vpop.permute.xlu0 %1874
        %1876 = vrot.lane.b32.xlu0 %v1869, 120
        %v1877 = vpop.permute.xlu0 %1876
        %1878 = vrot.lane.b32.xlu0 %v1871, 120
        %v1879 = vpop.permute.xlu0 %1878
        %1880 = vrot.lane.b32.xlu0 %v1868, 120
        %v1881 = vpop.permute.xlu0 %1880
        %1882 = vrot.lane.b32.xlu0 %v1870, 120
        %v1883 = vpop.permute.xlu0 %1882
        %v1884 = vsel %vm552, %v1873, %v1875
        %v1885 = vsel %vm552, %v1877, %v1879
        %v1886 = vsel %vm552, %v1881, %v1883
        %v1893 = vadd.f32 %v1826, %v1884
        %v1894 = vadd.f32 %v1827, %v1875
        %v1895 = vadd.f32 %v1828, %v1885
        %v1896 = vadd.f32 %v1829, %v1879
        %v1897 = vadd.f32 %v1830, %v1886
        %v1898 = vadd.f32 %v1831, %v1883
        %s1899 = scalar_lea.vmem [#allocation4], 17
        %v1900 = vld [vmem:[%s1899] ss:$8 sm:$0x3]
        %v1902 = vlaneseq
        %v1903 = vshrl.u32 %v1902, 7
        %v1904 = vsub.s32 0, %v1903
        %v1905 = vrot.slane %v1900, %v1904
        %v1906 = vlaneseq
        %v1907 = vshrl.u32 %v1906, 7
        %v1908 = vsub.s32 1, %v1907
        %v1909 = vrot.slane %v1900, %v1908
        %1910 = vrot.lane.b32.xlu0 %v1905, 16
        %v1911 = vpop.permute.xlu0 %1910
        %1912 = vrot.lane.b32.xlu0 %v1909, 16
        %v1913 = vpop.permute.xlu0 %1912
        %v1914 = vsel %vm583, %v1911, %v1913
        %v1917 = vmul.f32 %v1783, %v1911
        %v1918 = vmul.f32 %v1784, %v1914
        %v1919 = vmul.f32 %v1410, %v1911
        %v1920 = vmul.f32 %v1411, %v1914
        %v1921 = vmul.f32 %v1785, %v1911
        %v1922 = vmul.f32 %v1786, %v1914
        %v1929 = vrot.slane %v1917, 1
        %v1930 = vrot.slane %v1919, 1
        %v1931 = vsel %vm660, %v1929, %v1930
        %v1932 = vrot.slane %v1918, 1
        %v1933 = vrot.slane %v1920, 1
        %v1934 = vsel %vm660, %v1932, %v1933
        %v1935 = vrot.slane %v1921, 1
        %v1936 = vsel %vm660, %v1930, %v1935
        %v1937 = vrot.slane %v1922, 1
        %v1938 = vsel %vm660, %v1933, %v1937
        %1939 = vrot.lane.b32.xlu0 %v1931, 112
        %v1940 = vpop.permute.xlu0 %1939
        %1941 = vrot.lane.b32.xlu0 %v1934, 112
        %v1942 = vpop.permute.xlu0 %1941
        %1943 = vrot.lane.b32.xlu0 %v1936, 112
        %v1944 = vpop.permute.xlu0 %1943
        %1945 = vrot.lane.b32.xlu0 %v1938, 112
        %v1946 = vpop.permute.xlu0 %1945
        %1947 = vrot.lane.b32.xlu0 %v1935, 112
        %v1948 = vpop.permute.xlu0 %1947
        %1949 = vrot.lane.b32.xlu0 %v1937, 112
        %v1950 = vpop.permute.xlu0 %1949
        %v1951 = vsel %vm611, %v1940, %v1942
        %v1952 = vsel %vm611, %v1944, %v1946
        %v1953 = vsel %vm611, %v1948, %v1950
        %v1960 = vadd.f32 %v1893, %v1951
        %v1961 = vadd.f32 %v1894, %v1942
        %v1962 = vadd.f32 %v1895, %v1952
        %v1963 = vadd.f32 %v1896, %v1946
        %v1964 = vadd.f32 %v1897, %v1953
        %v1965 = vadd.f32 %v1898, %v1950
        %s1966 = scalar_lea.vmem [#allocation4], 18
        %v1967 = vld [vmem:[%s1966] ss:$8 sm:$0x3]
        %v1969 = vlaneseq
        %v1970 = vshrl.u32 %v1969, 7
        %v1971 = vsub.s32 0, %v1970
        %v1972 = vrot.slane %v1967, %v1971
        %v1973 = vlaneseq
        %v1974 = vshrl.u32 %v1973, 7
        %v1975 = vsub.s32 1, %v1974
        %v1976 = vrot.slane %v1967, %v1975
        %1977 = vrot.lane.b32.xlu0 %v1972, 24
        %v1978 = vpop.permute.xlu0 %1977
        %1979 = vrot.lane.b32.xlu0 %v1976, 24
        %v1980 = vpop.permute.xlu0 %1979
        %v1981 = vsel %vm1560, %v1978, %v1980
        %v1984 = vmul.f32 %v1783, %v1978
        %v1985 = vmul.f32 %v1784, %v1981
        %v1986 = vmul.f32 %v1410, %v1978
        %v1987 = vmul.f32 %v1411, %v1981
        %v1988 = vmul.f32 %v1785, %v1978
        %v1989 = vmul.f32 %v1786, %v1981
        %v1996 = vrot.slane %v1984, 1
        %v1997 = vrot.slane %v1986, 1
        %v1998 = vsel %vm660, %v1996, %v1997
        %v1999 = vrot.slane %v1985, 1
        %v2000 = vrot.slane %v1987, 1
        %v2001 = vsel %vm660, %v1999, %v2000
        %v2002 = vrot.slane %v1988, 1
        %v2003 = vsel %vm660, %v1997, %v2002
        %v2004 = vrot.slane %v1989, 1
        %v2005 = vsel %vm660, %v2000, %v2004
        %2006 = vrot.lane.b32.xlu0 %v1998, 104
        %v2007 = vpop.permute.xlu0 %2006
        %2008 = vrot.lane.b32.xlu0 %v2001, 104
        %v2009 = vpop.permute.xlu0 %2008
        %2010 = vrot.lane.b32.xlu0 %v2003, 104
        %v2011 = vpop.permute.xlu0 %2010
        %2012 = vrot.lane.b32.xlu0 %v2005, 104
        %v2013 = vpop.permute.xlu0 %2012
        %2014 = vrot.lane.b32.xlu0 %v2002, 104
        %v2015 = vpop.permute.xlu0 %2014
        %2016 = vrot.lane.b32.xlu0 %v2004, 104
        %v2017 = vpop.permute.xlu0 %2016
        %v2018 = vsel %vm1588, %v2007, %v2009
        %v2019 = vsel %vm1588, %v2011, %v2013
        %v2020 = vsel %vm1588, %v2015, %v2017
        %v2027 = vadd.f32 %v1960, %v2018
        %v2028 = vadd.f32 %v1961, %v2009
        %v2029 = vadd.f32 %v1962, %v2019
        %v2030 = vadd.f32 %v1963, %v2013
        %v2031 = vadd.f32 %v1964, %v2020
        %v2032 = vadd.f32 %v1965, %v2017
        %s2033 = scalar_lea.vmem [#allocation4], 19
        %v2034 = vld [vmem:[%s2033] ss:$8 sm:$0x3]
        %v2036 = vlaneseq
        %v2037 = vshrl.u32 %v2036, 7
        %v2038 = vsub.s32 0, %v2037
        %v2039 = vrot.slane %v2034, %v2038
        %v2040 = vlaneseq
        %v2041 = vshrl.u32 %v2040, 7
        %v2042 = vsub.s32 1, %v2041
        %v2043 = vrot.slane %v2034, %v2042
        %2044 = vrot.lane.b32.xlu0 %v2039, 32
        %v2045 = vpop.permute.xlu0 %2044
        %2046 = vrot.lane.b32.xlu0 %v2043, 32
        %v2047 = vpop.permute.xlu0 %2046
        %v2048 = vsel %vm1619, %v2045, %v2047
        %v2051 = vmul.f32 %v1783, %v2045
        %v2052 = vmul.f32 %v1784, %v2048
        %v2053 = vmul.f32 %v1410, %v2045
        %v2054 = vmul.f32 %v1411, %v2048
        %v2055 = vmul.f32 %v1785, %v2045
        %v2056 = vmul.f32 %v1786, %v2048
        %v2063 = vrot.slane %v2051, 1
        %v2064 = vrot.slane %v2053, 1
        %v2065 = vsel %vm660, %v2063, %v2064
        %v2066 = vrot.slane %v2052, 1
        %v2067 = vrot.slane %v2054, 1
        %v2068 = vsel %vm660, %v2066, %v2067
        %v2069 = vrot.slane %v2055, 1
        %v2070 = vsel %vm660, %v2064, %v2069
        %v2071 = vrot.slane %v2056, 1
        %v2072 = vsel %vm660, %v2067, %v2071
        %2073 = vrot.lane.b32.xlu0 %v2065, 96
        %v2074 = vpop.permute.xlu0 %2073
        %2075 = vrot.lane.b32.xlu0 %v2068, 96
        %v2076 = vpop.permute.xlu0 %2075
        %2077 = vrot.lane.b32.xlu0 %v2070, 96
        %v2078 = vpop.permute.xlu0 %2077
        %2079 = vrot.lane.b32.xlu0 %v2072, 96
        %v2080 = vpop.permute.xlu0 %2079
        %2081 = vrot.lane.b32.xlu0 %v2069, 96
        %v2082 = vpop.permute.xlu0 %2081
        %2083 = vrot.lane.b32.xlu0 %v2071, 96
        %v2084 = vpop.permute.xlu0 %2083
        %v2085 = vsel %vm1647, %v2074, %v2076
        %v2086 = vsel %vm1647, %v2078, %v2080
        %v2087 = vsel %vm1647, %v2082, %v2084
        %v2094 = vadd.f32 %v2027, %v2085
        %v2095 = vadd.f32 %v2028, %v2076
        %v2096 = vadd.f32 %v2029, %v2086
        %v2097 = vadd.f32 %v2030, %v2080
        %v2098 = vadd.f32 %v2031, %v2087
        %v2099 = vadd.f32 %v2032, %v2084
        %s2100 = scalar_lea.vmem [#allocation4], 20
        %v2101 = vld [vmem:[%s2100] ss:$8 sm:$0x3]
        %v2103 = vlaneseq
        %v2104 = vshrl.u32 %v2103, 7
        %v2105 = vsub.s32 0, %v2104
        %v2106 = vrot.slane %v2101, %v2105
        %v2107 = vlaneseq
        %v2108 = vshrl.u32 %v2107, 7
        %v2109 = vsub.s32 1, %v2108
        %v2110 = vrot.slane %v2101, %v2109
        %2111 = vrot.lane.b32.xlu0 %v2106, 40
        %v2112 = vpop.permute.xlu0 %2111
        %2113 = vrot.lane.b32.xlu0 %v2110, 40
        %v2114 = vpop.permute.xlu0 %2113
        %v2115 = vsel %vm1678, %v2112, %v2114
        %v2118 = vmul.f32 %v1783, %v2112
        %v2119 = vmul.f32 %v1784, %v2115
        %v2120 = vmul.f32 %v1410, %v2112
        %v2121 = vmul.f32 %v1411, %v2115
        %v2122 = vmul.f32 %v1785, %v2112
        %v2123 = vmul.f32 %v1786, %v2115
        %v2130 = vrot.slane %v2118, 1
        %v2131 = vrot.slane %v2120, 1
        %v2132 = vsel %vm660, %v2130, %v2131
        %v2133 = vrot.slane %v2119, 1
        %v2134 = vrot.slane %v2121, 1
        %v2135 = vsel %vm660, %v2133, %v2134
        %v2136 = vrot.slane %v2122, 1
        %v2137 = vsel %vm660, %v2131, %v2136
        %v2138 = vrot.slane %v2123, 1
        %v2139 = vsel %vm660, %v2134, %v2138
        %2140 = vrot.lane.b32.xlu0 %v2132, 88
        %v2141 = vpop.permute.xlu0 %2140
        %2142 = vrot.lane.b32.xlu0 %v2135, 88
        %v2143 = vpop.permute.xlu0 %2142
        %2144 = vrot.lane.b32.xlu0 %v2137, 88
        %v2145 = vpop.permute.xlu0 %2144
        %2146 = vrot.lane.b32.xlu0 %v2139, 88
        %v2147 = vpop.permute.xlu0 %2146
        %2148 = vrot.lane.b32.xlu0 %v2136, 88
        %v2149 = vpop.permute.xlu0 %2148
        %2150 = vrot.lane.b32.xlu0 %v2138, 88
        %v2151 = vpop.permute.xlu0 %2150
        %v2152 = vsel %vm1706, %v2141, %v2143
        %v2153 = vsel %vm1706, %v2145, %v2147
        %v2154 = vsel %vm1706, %v2149, %v2151
        %v2161 = vadd.f32 %v2094, %v2152
        %v2162 = vadd.f32 %v2095, %v2143
        %v2163 = vadd.f32 %v2096, %v2153
        %v2164 = vadd.f32 %v2097, %v2147
        %v2165 = vadd.f32 %v2098, %v2154
        %v2166 = vadd.f32 %v2099, %v2151
        %s2167 = scalar_lea.vmem [#allocation4], 21
        %v2168 = vld [vmem:[%s2167] ss:$8 sm:$0x3]
        %v2170 = vlaneseq
        %v2171 = vshrl.u32 %v2170, 7
        %v2172 = vsub.s32 0, %v2171
        %v2173 = vrot.slane %v2168, %v2172
        %v2174 = vlaneseq
        %v2175 = vshrl.u32 %v2174, 7
        %v2176 = vsub.s32 1, %v2175
        %v2177 = vrot.slane %v2168, %v2176
        %2178 = vrot.lane.b32.xlu0 %v2173, 48
        %v2179 = vpop.permute.xlu0 %2178
        %2180 = vrot.lane.b32.xlu0 %v2177, 48
        %v2181 = vpop.permute.xlu0 %2180
        %v2182 = vsel %vm1737, %v2179, %v2181
        %v2185 = vmul.f32 %v1783, %v2179
        %v2186 = vmul.f32 %v1784, %v2182
        %v2187 = vmul.f32 %v1410, %v2179
        %v2188 = vmul.f32 %v1411, %v2182
        %v2189 = vmul.f32 %v1785, %v2179
        %v2190 = vmul.f32 %v1786, %v2182
        %v2197 = vrot.slane %v2185, 1
        %v2198 = vrot.slane %v2187, 1
        %v2199 = vsel %vm660, %v2197, %v2198
        %v2200 = vrot.slane %v2186, 1
        %v2201 = vrot.slane %v2188, 1
        %v2202 = vsel %vm660, %v2200, %v2201
        %v2203 = vrot.slane %v2189, 1
        %v2204 = vsel %vm660, %v2198, %v2203
        %v2205 = vrot.slane %v2190, 1
        %v2206 = vsel %vm660, %v2201, %v2205
        %2207 = vrot.lane.b32.xlu0 %v2199, 80
        %v2208 = vpop.permute.xlu0 %2207
        %2209 = vrot.lane.b32.xlu0 %v2202, 80
        %v2210 = vpop.permute.xlu0 %2209
        %2211 = vrot.lane.b32.xlu0 %v2204, 80
        %v2212 = vpop.permute.xlu0 %2211
        %2213 = vrot.lane.b32.xlu0 %v2206, 80
        %v2214 = vpop.permute.xlu0 %2213
        %2215 = vrot.lane.b32.xlu0 %v2203, 80
        %v2216 = vpop.permute.xlu0 %2215
        %2217 = vrot.lane.b32.xlu0 %v2205, 80
        %v2218 = vpop.permute.xlu0 %2217
        %v2219 = vsel %vm1765, %v2208, %v2210
        %v2220 = vsel %vm1765, %v2212, %v2214
        %v2221 = vsel %vm1765, %v2216, %v2218
        %v2228 = vadd.f32 %v2161, %v2219
        %v2229 = vadd.f32 %v2162, %v2210
        %v2230 = vadd.f32 %v2163, %v2220
        %v2231 = vadd.f32 %v2164, %v2214
        %v2232 = vadd.f32 %v2165, %v2221
        %v2233 = vadd.f32 %v2166, %v2218
        %s2234 = scalar_lea.vmem [#allocation4], 22
        %v2235 = vld [vmem:[%s2234] ss:$8 sm:$0x3]
        %v2236 = vld [vmem:[#allocation2] sm:$0xfc]
        %v2237 = vld [vmem:[#allocation2 + $0x8] sm:$0xfc]
        %v2238 = vld [vmem:[#allocation2 + $0x20] sm:$0xf]
        %v2239 = vld [vmem:[#allocation2 + $0x28] sm:$0xf]
        %v2241 = vlaneseq
        %v2242 = vshrl.u32 %v2241, 7
        %v2243 = vsub.s32 0, %v2242
        %v2244 = vrot.slane %v2235, %v2243
        %v2245 = vlaneseq
        %v2246 = vshrl.u32 %v2245, 7
        %v2247 = vsub.s32 1, %v2246
        %v2248 = vrot.slane %v2235, %v2247
        %v2251 = vmul.f32 %v2236, %v2244
        %v2252 = vmul.f32 %v2237, %v2248
        %v2253 = vmul.f32 %v1410, %v2244
        %v2254 = vmul.f32 %v1411, %v2248
        %v2255 = vmul.f32 %v2238, %v2244
        %v2256 = vmul.f32 %v2239, %v2248
        %v2263 = vrot.slane %v2251, 2
        %v2264 = vrot.slane %v2253, 2
        %v2265 = vsel %vm870, %v2263, %v2264
        %v2266 = vrot.slane %v2252, 2
        %v2267 = vrot.slane %v2254, 2
        %v2268 = vsel %vm870, %v2266, %v2267
        %v2269 = vrot.slane %v2255, 2
        %v2270 = vsel %vm870, %v2264, %v2269
        %v2271 = vrot.slane %v2256, 2
        %v2272 = vsel %vm870, %v2267, %v2271
        %v2279 = vadd.f32 %v2228, %v2265
        %v2280 = vadd.f32 %v2229, %v2268
        %v2281 = vadd.f32 %v2230, %v2270
        %v2282 = vadd.f32 %v2231, %v2272
        %v2283 = vadd.f32 %v2232, %v2269
        %v2284 = vadd.f32 %v2233, %v2271
        %s2285 = scalar_lea.vmem [#allocation4], 23
        %v2286 = vld [vmem:[%s2285] ss:$8 sm:$0x3]
        %v2288 = vlaneseq
        %v2289 = vshrl.u32 %v2288, 7
        %v2290 = vsub.s32 0, %v2289
        %v2291 = vrot.slane %v2286, %v2290
        %v2292 = vlaneseq
        %v2293 = vshrl.u32 %v2292, 7
        %v2294 = vsub.s32 1, %v2293
        %v2295 = vrot.slane %v2286, %v2294
        %2296 = vrot.lane.b32.xlu0 %v2291, 8
        %v2297 = vpop.permute.xlu0 %2296
        %2298 = vrot.lane.b32.xlu0 %v2295, 8
        %v2299 = vpop.permute.xlu0 %2298
        %v2300 = vsel %vm524, %v2297, %v2299
        %v2303 = vmul.f32 %v2236, %v2297
        %v2304 = vmul.f32 %v2237, %v2300
        %v2305 = vmul.f32 %v1410, %v2297
        %v2306 = vmul.f32 %v1411, %v2300
        %v2307 = vmul.f32 %v2238, %v2297
        %v2308 = vmul.f32 %v2239, %v2300
        %v2315 = vrot.slane %v2303, 2
        %v2316 = vrot.slane %v2305, 2
        %v2317 = vsel %vm870, %v2315, %v2316
        %v2318 = vrot.slane %v2304, 2
        %v2319 = vrot.slane %v2306, 2
        %v2320 = vsel %vm870, %v2318, %v2319
        %v2321 = vrot.slane %v2307, 2
        %v2322 = vsel %vm870, %v2316, %v2321
        %v2323 = vrot.slane %v2308, 2
        %v2324 = vsel %vm870, %v2319, %v2323
        %2325 = vrot.lane.b32.xlu0 %v2317, 120
        %v2326 = vpop.permute.xlu0 %2325
        %2327 = vrot.lane.b32.xlu0 %v2320, 120
        %v2328 = vpop.permute.xlu0 %2327
        %2329 = vrot.lane.b32.xlu0 %v2322, 120
        %v2330 = vpop.permute.xlu0 %2329
        %2331 = vrot.lane.b32.xlu0 %v2324, 120
        %v2332 = vpop.permute.xlu0 %2331
        %2333 = vrot.lane.b32.xlu0 %v2321, 120
        %v2334 = vpop.permute.xlu0 %2333
        %2335 = vrot.lane.b32.xlu0 %v2323, 120
        %v2336 = vpop.permute.xlu0 %2335
        %v2337 = vsel %vm552, %v2326, %v2328
        %v2338 = vsel %vm552, %v2330, %v2332
        %v2339 = vsel %vm552, %v2334, %v2336
        %v2346 = vadd.f32 %v2279, %v2337
        %v2347 = vadd.f32 %v2280, %v2328
        %v2348 = vadd.f32 %v2281, %v2338
        %v2349 = vadd.f32 %v2282, %v2332
        %v2350 = vadd.f32 %v2283, %v2339
        %v2351 = vadd.f32 %v2284, %v2336
        %s2352 = scalar_lea.vmem [#allocation4], 32
        %v2353 = vld [vmem:[%s2352] ss:$8 sm:$0x3]
        %v2355 = vlaneseq
        %v2356 = vshrl.u32 %v2355, 7
        %v2357 = vsub.s32 0, %v2356
        %v2358 = vrot.slane %v2353, %v2357
        %v2359 = vlaneseq
        %v2360 = vshrl.u32 %v2359, 7
        %v2361 = vsub.s32 1, %v2360
        %v2362 = vrot.slane %v2353, %v2361
        %2363 = vrot.lane.b32.xlu0 %v2358, 16
        %v2364 = vpop.permute.xlu0 %2363
        %2365 = vrot.lane.b32.xlu0 %v2362, 16
        %v2366 = vpop.permute.xlu0 %2365
        %v2367 = vsel %vm583, %v2364, %v2366
        %v2370 = vmul.f32 %v2236, %v2364
        %v2371 = vmul.f32 %v2237, %v2367
        %v2372 = vmul.f32 %v1410, %v2364
        %v2373 = vmul.f32 %v1411, %v2367
        %v2374 = vmul.f32 %v2238, %v2364
        %v2375 = vmul.f32 %v2239, %v2367
        %v2382 = vrot.slane %v2370, 2
        %v2383 = vrot.slane %v2372, 2
        %v2384 = vsel %vm870, %v2382, %v2383
        %v2385 = vrot.slane %v2371, 2
        %v2386 = vrot.slane %v2373, 2
        %v2387 = vsel %vm870, %v2385, %v2386
        %v2388 = vrot.slane %v2374, 2
        %v2389 = vsel %vm870, %v2383, %v2388
        %v2390 = vrot.slane %v2375, 2
        %v2391 = vsel %vm870, %v2386, %v2390
        %2392 = vrot.lane.b32.xlu0 %v2384, 112
        %v2393 = vpop.permute.xlu0 %2392
        %2394 = vrot.lane.b32.xlu0 %v2387, 112
        %v2395 = vpop.permute.xlu0 %2394
        %2396 = vrot.lane.b32.xlu0 %v2389, 112
        %v2397 = vpop.permute.xlu0 %2396
        %2398 = vrot.lane.b32.xlu0 %v2391, 112
        %v2399 = vpop.permute.xlu0 %2398
        %2400 = vrot.lane.b32.xlu0 %v2388, 112
        %v2401 = vpop.permute.xlu0 %2400
        %2402 = vrot.lane.b32.xlu0 %v2390, 112
        %v2403 = vpop.permute.xlu0 %2402
        %v2404 = vsel %vm611, %v2393, %v2395
        %v2405 = vsel %vm611, %v2397, %v2399
        %v2406 = vsel %vm611, %v2401, %v2403
        %v2413 = vadd.f32 %v2346, %v2404
        %v2414 = vadd.f32 %v2347, %v2395
        %v2415 = vadd.f32 %v2348, %v2405
        %v2416 = vadd.f32 %v2349, %v2399
        %v2417 = vadd.f32 %v2350, %v2406
        %v2418 = vadd.f32 %v2351, %v2403
        %s2419 = scalar_lea.vmem [#allocation4], 33
        %v2420 = vld [vmem:[%s2419] ss:$8 sm:$0x3]
        %v2422 = vlaneseq
        %v2423 = vshrl.u32 %v2422, 7
        %v2424 = vsub.s32 0, %v2423
        %v2425 = vrot.slane %v2420, %v2424
        %v2426 = vlaneseq
        %v2427 = vshrl.u32 %v2426, 7
        %v2428 = vsub.s32 1, %v2427
        %v2429 = vrot.slane %v2420, %v2428
        %2430 = vrot.lane.b32.xlu0 %v2425, 24
        %v2431 = vpop.permute.xlu0 %2430
        %2432 = vrot.lane.b32.xlu0 %v2429, 24
        %v2433 = vpop.permute.xlu0 %2432
        %v2434 = vsel %vm1560, %v2431, %v2433
        %v2437 = vmul.f32 %v2236, %v2431
        %v2438 = vmul.f32 %v2237, %v2434
        %v2439 = vmul.f32 %v1410, %v2431
        %v2440 = vmul.f32 %v1411, %v2434
        %v2441 = vmul.f32 %v2238, %v2431
        %v2442 = vmul.f32 %v2239, %v2434
        %v2449 = vrot.slane %v2437, 2
        %v2450 = vrot.slane %v2439, 2
        %v2451 = vsel %vm870, %v2449, %v2450
        %v2452 = vrot.slane %v2438, 2
        %v2453 = vrot.slane %v2440, 2
        %v2454 = vsel %vm870, %v2452, %v2453
        %v2455 = vrot.slane %v2441, 2
        %v2456 = vsel %vm870, %v2450, %v2455
        %v2457 = vrot.slane %v2442, 2
        %v2458 = vsel %vm870, %v2453, %v2457
        %2459 = vrot.lane.b32.xlu0 %v2451, 104
        %v2460 = vpop.permute.xlu0 %2459
        %2461 = vrot.lane.b32.xlu0 %v2454, 104
        %v2462 = vpop.permute.xlu0 %2461
        %2463 = vrot.lane.b32.xlu0 %v2456, 104
        %v2464 = vpop.permute.xlu0 %2463
        %2465 = vrot.lane.b32.xlu0 %v2458, 104
        %v2466 = vpop.permute.xlu0 %2465
        %2467 = vrot.lane.b32.xlu0 %v2455, 104
        %v2468 = vpop.permute.xlu0 %2467
        %2469 = vrot.lane.b32.xlu0 %v2457, 104
        %v2470 = vpop.permute.xlu0 %2469
        %v2471 = vsel %vm1588, %v2460, %v2462
        %v2472 = vsel %vm1588, %v2464, %v2466
        %v2473 = vsel %vm1588, %v2468, %v2470
        %v2480 = vadd.f32 %v2413, %v2471
        %v2481 = vadd.f32 %v2414, %v2462
        %v2482 = vadd.f32 %v2415, %v2472
        %v2483 = vadd.f32 %v2416, %v2466
        %v2484 = vadd.f32 %v2417, %v2473
        %v2485 = vadd.f32 %v2418, %v2470
        %s2486 = scalar_lea.vmem [#allocation4], 34
        %v2487 = vld [vmem:[%s2486] ss:$8 sm:$0x3]
        %v2489 = vlaneseq
        %v2490 = vshrl.u32 %v2489, 7
        %v2491 = vsub.s32 0, %v2490
        %v2492 = vrot.slane %v2487, %v2491
        %v2493 = vlaneseq
        %v2494 = vshrl.u32 %v2493, 7
        %v2495 = vsub.s32 1, %v2494
        %v2496 = vrot.slane %v2487, %v2495
        %2497 = vrot.lane.b32.xlu0 %v2492, 32
        %v2498 = vpop.permute.xlu0 %2497
        %2499 = vrot.lane.b32.xlu0 %v2496, 32
        %v2500 = vpop.permute.xlu0 %2499
        %v2501 = vsel %vm1619, %v2498, %v2500
        %v2504 = vmul.f32 %v2236, %v2498
        %v2505 = vmul.f32 %v2237, %v2501
        %v2506 = vmul.f32 %v1410, %v2498
        %v2507 = vmul.f32 %v1411, %v2501
        %v2508 = vmul.f32 %v2238, %v2498
        %v2509 = vmul.f32 %v2239, %v2501
        %v2516 = vrot.slane %v2504, 2
        %v2517 = vrot.slane %v2506, 2
        %v2518 = vsel %vm870, %v2516, %v2517
        %v2519 = vrot.slane %v2505, 2
        %v2520 = vrot.slane %v2507, 2
        %v2521 = vsel %vm870, %v2519, %v2520
        %v2522 = vrot.slane %v2508, 2
        %v2523 = vsel %vm870, %v2517, %v2522
        %v2524 = vrot.slane %v2509, 2
        %v2525 = vsel %vm870, %v2520, %v2524
        %2526 = vrot.lane.b32.xlu0 %v2518, 96
        %v2527 = vpop.permute.xlu0 %2526
        %2528 = vrot.lane.b32.xlu0 %v2521, 96
        %v2529 = vpop.permute.xlu0 %2528
        %2530 = vrot.lane.b32.xlu0 %v2523, 96
        %v2531 = vpop.permute.xlu0 %2530
        %2532 = vrot.lane.b32.xlu0 %v2525, 96
        %v2533 = vpop.permute.xlu0 %2532
        %2534 = vrot.lane.b32.xlu0 %v2522, 96
        %v2535 = vpop.permute.xlu0 %2534
        %2536 = vrot.lane.b32.xlu0 %v2524, 96
        %v2537 = vpop.permute.xlu0 %2536
        %v2538 = vsel %vm1647, %v2527, %v2529
        %v2539 = vsel %vm1647, %v2531, %v2533
        %v2540 = vsel %vm1647, %v2535, %v2537
        %v2547 = vadd.f32 %v2480, %v2538
        %v2548 = vadd.f32 %v2481, %v2529
        %v2549 = vadd.f32 %v2482, %v2539
        %v2550 = vadd.f32 %v2483, %v2533
        %v2551 = vadd.f32 %v2484, %v2540
        %v2552 = vadd.f32 %v2485, %v2537
        %s2553 = scalar_lea.vmem [#allocation4], 35
        %v2554 = vld [vmem:[%s2553] ss:$8 sm:$0x3]
        %v2556 = vlaneseq
        %v2557 = vshrl.u32 %v2556, 7
        %v2558 = vsub.s32 0, %v2557
        %v2559 = vrot.slane %v2554, %v2558
        %v2560 = vlaneseq
        %v2561 = vshrl.u32 %v2560, 7
        %v2562 = vsub.s32 1, %v2561
        %v2563 = vrot.slane %v2554, %v2562
        %2564 = vrot.lane.b32.xlu0 %v2559, 40
        %v2565 = vpop.permute.xlu0 %2564
        %2566 = vrot.lane.b32.xlu0 %v2563, 40
        %v2567 = vpop.permute.xlu0 %2566
        %v2568 = vsel %vm1678, %v2565, %v2567
        %v2571 = vmul.f32 %v2236, %v2565
        %v2572 = vmul.f32 %v2237, %v2568
        %v2573 = vmul.f32 %v1410, %v2565
        %v2574 = vmul.f32 %v1411, %v2568
        %v2575 = vmul.f32 %v2238, %v2565
        %v2576 = vmul.f32 %v2239, %v2568
        %v2583 = vrot.slane %v2571, 2
        %v2584 = vrot.slane %v2573, 2
        %v2585 = vsel %vm870, %v2583, %v2584
        %v2586 = vrot.slane %v2572, 2
        %v2587 = vrot.slane %v2574, 2
        %v2588 = vsel %vm870, %v2586, %v2587
        %v2589 = vrot.slane %v2575, 2
        %v2590 = vsel %vm870, %v2584, %v2589
        %v2591 = vrot.slane %v2576, 2
        %v2592 = vsel %vm870, %v2587, %v2591
        %2593 = vrot.lane.b32.xlu0 %v2585, 88
        %v2594 = vpop.permute.xlu0 %2593
        %2595 = vrot.lane.b32.xlu0 %v2588, 88
        %v2596 = vpop.permute.xlu0 %2595
        %2597 = vrot.lane.b32.xlu0 %v2590, 88
        %v2598 = vpop.permute.xlu0 %2597
        %2599 = vrot.lane.b32.xlu0 %v2592, 88
        %v2600 = vpop.permute.xlu0 %2599
        %2601 = vrot.lane.b32.xlu0 %v2589, 88
        %v2602 = vpop.permute.xlu0 %2601
        %2603 = vrot.lane.b32.xlu0 %v2591, 88
        %v2604 = vpop.permute.xlu0 %2603
        %v2605 = vsel %vm1706, %v2594, %v2596
        %v2606 = vsel %vm1706, %v2598, %v2600
        %v2607 = vsel %vm1706, %v2602, %v2604
        %v2614 = vadd.f32 %v2547, %v2605
        %v2615 = vadd.f32 %v2548, %v2596
        %v2616 = vadd.f32 %v2549, %v2606
        %v2617 = vadd.f32 %v2550, %v2600
        %v2618 = vadd.f32 %v2551, %v2607
        %v2619 = vadd.f32 %v2552, %v2604
        %s2620 = scalar_lea.vmem [#allocation4], 36
        %v2621 = vld [vmem:[%s2620] ss:$8 sm:$0x3]
        %v2623 = vlaneseq
        %v2624 = vshrl.u32 %v2623, 7
        %v2625 = vsub.s32 0, %v2624
        %v2626 = vrot.slane %v2621, %v2625
        %v2627 = vlaneseq
        %v2628 = vshrl.u32 %v2627, 7
        %v2629 = vsub.s32 1, %v2628
        %v2630 = vrot.slane %v2621, %v2629
        %2631 = vrot.lane.b32.xlu0 %v2626, 48
        %v2632 = vpop.permute.xlu0 %2631
        %2633 = vrot.lane.b32.xlu0 %v2630, 48
        %v2634 = vpop.permute.xlu0 %2633
        %v2635 = vsel %vm1737, %v2632, %v2634
        %v2638 = vmul.f32 %v2236, %v2632
        %v2639 = vmul.f32 %v2237, %v2635
        %v2640 = vmul.f32 %v1410, %v2632
        %v2641 = vmul.f32 %v1411, %v2635
        %v2642 = vmul.f32 %v2238, %v2632
        %v2643 = vmul.f32 %v2239, %v2635
        %v2650 = vrot.slane %v2638, 2
        %v2651 = vrot.slane %v2640, 2
        %v2652 = vsel %vm870, %v2650, %v2651
        %v2653 = vrot.slane %v2639, 2
        %v2654 = vrot.slane %v2641, 2
        %v2655 = vsel %vm870, %v2653, %v2654
        %v2656 = vrot.slane %v2642, 2
        %v2657 = vsel %vm870, %v2651, %v2656
        %v2658 = vrot.slane %v2643, 2
        %v2659 = vsel %vm870, %v2654, %v2658
        %2660 = vrot.lane.b32.xlu0 %v2652, 80
        %v2661 = vpop.permute.xlu0 %2660
        %2662 = vrot.lane.b32.xlu0 %v2655, 80
        %v2663 = vpop.permute.xlu0 %2662
        %2664 = vrot.lane.b32.xlu0 %v2657, 80
        %v2665 = vpop.permute.xlu0 %2664
        %2666 = vrot.lane.b32.xlu0 %v2659, 80
        %v2667 = vpop.permute.xlu0 %2666
        %2668 = vrot.lane.b32.xlu0 %v2656, 80
        %v2669 = vpop.permute.xlu0 %2668
        %2670 = vrot.lane.b32.xlu0 %v2658, 80
        %v2671 = vpop.permute.xlu0 %2670
        %v2672 = vsel %vm1765, %v2661, %v2663
        %v2673 = vsel %vm1765, %v2665, %v2667
        %v2674 = vsel %vm1765, %v2669, %v2671
        %v2681 = vadd.f32 %v2614, %v2672
        %v2682 = vadd.f32 %v2615, %v2663
        %v2683 = vadd.f32 %v2616, %v2673
        %v2684 = vadd.f32 %v2617, %v2667
        %v2685 = vadd.f32 %v2618, %v2674
        %v2686 = vadd.f32 %v2619, %v2671
        %s2687 = scalar_lea.vmem [#allocation4], 37
        %v2688 = vld [vmem:[%s2687] ss:$8 sm:$0x3]
        %v2689 = vld [vmem:[#allocation2] sm:$0xf8]
        %v2690 = vld [vmem:[#allocation2 + $0x8] sm:$0xf8]
        %v2691 = vld [vmem:[#allocation2 + $0x20] sm:$0x1f]
        %v2692 = vld [vmem:[#allocation2 + $0x28] sm:$0x1f]
        %v2694 = vlaneseq
        %v2695 = vshrl.u32 %v2694, 7
        %v2696 = vsub.s32 0, %v2695
        %v2697 = vrot.slane %v2688, %v2696
        %v2698 = vlaneseq
        %v2699 = vshrl.u32 %v2698, 7
        %v2700 = vsub.s32 1, %v2699
        %v2701 = vrot.slane %v2688, %v2700
        %v2704 = vmul.f32 %v2689, %v2697
        %v2705 = vmul.f32 %v2690, %v2701
        %v2706 = vmul.f32 %v1410, %v2697
        %v2707 = vmul.f32 %v1411, %v2701
        %v2708 = vmul.f32 %v2691, %v2697
        %v2709 = vmul.f32 %v2692, %v2701
        %vm2716 = vcmask 1044480
        %v2717 = vrot.slane %v2704, 3
        %v2718 = vrot.slane %v2706, 3
        %v2719 = vsel %vm2716, %v2717, %v2718
        %v2720 = vrot.slane %v2705, 3
        %v2721 = vrot.slane %v2707, 3
        %v2722 = vsel %vm2716, %v2720, %v2721
        %v2723 = vrot.slane %v2708, 3
        %v2724 = vsel %vm2716, %v2718, %v2723
        %v2725 = vrot.slane %v2709, 3
        %v2726 = vsel %vm2716, %v2721, %v2725
        %v2733 = vadd.f32 %v2681, %v2719
        %v2734 = vadd.f32 %v2682, %v2722
        %v2735 = vadd.f32 %v2683, %v2724
        %v2736 = vadd.f32 %v2684, %v2726
        %v2737 = vadd.f32 %v2685, %v2723
        %v2738 = vadd.f32 %v2686, %v2725
        %s2739 = scalar_lea.vmem [#allocation4], 38
        %v2740 = vld [vmem:[%s2739] ss:$8 sm:$0x3]
        %v2742 = vlaneseq
        %v2743 = vshrl.u32 %v2742, 7
        %v2744 = vsub.s32 0, %v2743
        %v2745 = vrot.slane %v2740, %v2744
        %v2746 = vlaneseq
        %v2747 = vshrl.u32 %v2746, 7
        %v2748 = vsub.s32 1, %v2747
        %v2749 = vrot.slane %v2740, %v2748
        %2750 = vrot.lane.b32.xlu0 %v2745, 8
        %v2751 = vpop.permute.xlu0 %2750
        %2752 = vrot.lane.b32.xlu0 %v2749, 8
        %v2753 = vpop.permute.xlu0 %2752
        %v2754 = vsel %vm524, %v2751, %v2753
        %v2757 = vmul.f32 %v2689, %v2751
        %v2758 = vmul.f32 %v2690, %v2754
        %v2759 = vmul.f32 %v1410, %v2751
        %v2760 = vmul.f32 %v1411, %v2754
        %v2761 = vmul.f32 %v2691, %v2751
        %v2762 = vmul.f32 %v2692, %v2754
        %v2769 = vrot.slane %v2757, 3
        %v2770 = vrot.slane %v2759, 3
        %v2771 = vsel %vm2716, %v2769, %v2770
        %v2772 = vrot.slane %v2758, 3
        %v2773 = vrot.slane %v2760, 3
        %v2774 = vsel %vm2716, %v2772, %v2773
        %v2775 = vrot.slane %v2761, 3
        %v2776 = vsel %vm2716, %v2770, %v2775
        %v2777 = vrot.slane %v2762, 3
        %v2778 = vsel %vm2716, %v2773, %v2777
        %2779 = vrot.lane.b32.xlu0 %v2771, 120
        %v2780 = vpop.permute.xlu0 %2779
        %2781 = vrot.lane.b32.xlu0 %v2774, 120
        %v2782 = vpop.permute.xlu0 %2781
        %2783 = vrot.lane.b32.xlu0 %v2776, 120
        %v2784 = vpop.permute.xlu0 %2783
        %2785 = vrot.lane.b32.xlu0 %v2778, 120
        %v2786 = vpop.permute.xlu0 %2785
        %2787 = vrot.lane.b32.xlu0 %v2775, 120
        %v2788 = vpop.permute.xlu0 %2787
        %2789 = vrot.lane.b32.xlu0 %v2777, 120
        %v2790 = vpop.permute.xlu0 %2789
        %v2791 = vsel %vm552, %v2780, %v2782
        %v2792 = vsel %vm552, %v2784, %v2786
        %v2793 = vsel %vm552, %v2788, %v2790
        %v2800 = vadd.f32 %v2733, %v2791
        %v2801 = vadd.f32 %v2734, %v2782
        %v2802 = vadd.f32 %v2735, %v2792
        %v2803 = vadd.f32 %v2736, %v2786
        %v2804 = vadd.f32 %v2737, %v2793
        %v2805 = vadd.f32 %v2738, %v2790
        %s2806 = scalar_lea.vmem [#allocation4], 39
        %v2807 = vld [vmem:[%s2806] ss:$8 sm:$0x3]
        %v2809 = vlaneseq
        %v2810 = vshrl.u32 %v2809, 7
        %v2811 = vsub.s32 0, %v2810
        %v2812 = vrot.slane %v2807, %v2811
        %v2813 = vlaneseq
        %v2814 = vshrl.u32 %v2813, 7
        %v2815 = vsub.s32 1, %v2814
        %v2816 = vrot.slane %v2807, %v2815
        %2817 = vrot.lane.b32.xlu0 %v2812, 16
        %v2818 = vpop.permute.xlu0 %2817
        %2819 = vrot.lane.b32.xlu0 %v2816, 16
        %v2820 = vpop.permute.xlu0 %2819
        %v2821 = vsel %vm583, %v2818, %v2820
        %v2824 = vmul.f32 %v2689, %v2818
        %v2825 = vmul.f32 %v2690, %v2821
        %v2826 = vmul.f32 %v1410, %v2818
        %v2827 = vmul.f32 %v1411, %v2821
        %v2828 = vmul.f32 %v2691, %v2818
        %v2829 = vmul.f32 %v2692, %v2821
        %v2836 = vrot.slane %v2824, 3
        %v2837 = vrot.slane %v2826, 3
        %v2838 = vsel %vm2716, %v2836, %v2837
        %v2839 = vrot.slane %v2825, 3
        %v2840 = vrot.slane %v2827, 3
        %v2841 = vsel %vm2716, %v2839, %v2840
        %v2842 = vrot.slane %v2828, 3
        %v2843 = vsel %vm2716, %v2837, %v2842
        %v2844 = vrot.slane %v2829, 3
        %v2845 = vsel %vm2716, %v2840, %v2844
        %2846 = vrot.lane.b32.xlu0 %v2838, 112
        %v2847 = vpop.permute.xlu0 %2846
        %2848 = vrot.lane.b32.xlu0 %v2841, 112
        %v2849 = vpop.permute.xlu0 %2848
        %2850 = vrot.lane.b32.xlu0 %v2843, 112
        %v2851 = vpop.permute.xlu0 %2850
        %2852 = vrot.lane.b32.xlu0 %v2845, 112
        %v2853 = vpop.permute.xlu0 %2852
        %2854 = vrot.lane.b32.xlu0 %v2842, 112
        %v2855 = vpop.permute.xlu0 %2854
        %2856 = vrot.lane.b32.xlu0 %v2844, 112
        %v2857 = vpop.permute.xlu0 %2856
        %v2858 = vsel %vm611, %v2847, %v2849
        %v2859 = vsel %vm611, %v2851, %v2853
        %v2860 = vsel %vm611, %v2855, %v2857
        %v2867 = vadd.f32 %v2800, %v2858
        %v2868 = vadd.f32 %v2801, %v2849
        %v2869 = vadd.f32 %v2802, %v2859
        %v2870 = vadd.f32 %v2803, %v2853
        %v2871 = vadd.f32 %v2804, %v2860
        %v2872 = vadd.f32 %v2805, %v2857
        %s2873 = scalar_lea.vmem [#allocation4], 48
        %v2874 = vld [vmem:[%s2873] ss:$8 sm:$0x3]
        %v2876 = vlaneseq
        %v2877 = vshrl.u32 %v2876, 7
        %v2878 = vsub.s32 0, %v2877
        %v2879 = vrot.slane %v2874, %v2878
        %v2880 = vlaneseq
        %v2881 = vshrl.u32 %v2880, 7
        %v2882 = vsub.s32 1, %v2881
        %v2883 = vrot.slane %v2874, %v2882
        %2884 = vrot.lane.b32.xlu0 %v2879, 24
        %v2885 = vpop.permute.xlu0 %2884
        %2886 = vrot.lane.b32.xlu0 %v2883, 24
        %v2887 = vpop.permute.xlu0 %2886
        %v2888 = vsel %vm1560, %v2885, %v2887
        %v2891 = vmul.f32 %v2689, %v2885
        %v2892 = vmul.f32 %v2690, %v2888
        %v2893 = vmul.f32 %v1410, %v2885
        %v2894 = vmul.f32 %v1411, %v2888
        %v2895 = vmul.f32 %v2691, %v2885
        %v2896 = vmul.f32 %v2692, %v2888
        %v2903 = vrot.slane %v2891, 3
        %v2904 = vrot.slane %v2893, 3
        %v2905 = vsel %vm2716, %v2903, %v2904
        %v2906 = vrot.slane %v2892, 3
        %v2907 = vrot.slane %v2894, 3
        %v2908 = vsel %vm2716, %v2906, %v2907
        %v2909 = vrot.slane %v2895, 3
        %v2910 = vsel %vm2716, %v2904, %v2909
        %v2911 = vrot.slane %v2896, 3
        %v2912 = vsel %vm2716, %v2907, %v2911
        %2913 = vrot.lane.b32.xlu0 %v2905, 104
        %v2914 = vpop.permute.xlu0 %2913
        %2915 = vrot.lane.b32.xlu0 %v2908, 104
        %v2916 = vpop.permute.xlu0 %2915
        %2917 = vrot.lane.b32.xlu0 %v2910, 104
        %v2918 = vpop.permute.xlu0 %2917
        %2919 = vrot.lane.b32.xlu0 %v2912, 104
        %v2920 = vpop.permute.xlu0 %2919
        %2921 = vrot.lane.b32.xlu0 %v2909, 104
        %v2922 = vpop.permute.xlu0 %2921
        %2923 = vrot.lane.b32.xlu0 %v2911, 104
        %v2924 = vpop.permute.xlu0 %2923
        %v2925 = vsel %vm1588, %v2914, %v2916
        %v2926 = vsel %vm1588, %v2918, %v2920
        %v2927 = vsel %vm1588, %v2922, %v2924
        %v2934 = vadd.f32 %v2867, %v2925
        %v2935 = vadd.f32 %v2868, %v2916
        %v2936 = vadd.f32 %v2869, %v2926
        %v2937 = vadd.f32 %v2870, %v2920
        %v2938 = vadd.f32 %v2871, %v2927
        %v2939 = vadd.f32 %v2872, %v2924
        %s2940 = scalar_lea.vmem [#allocation4], 49
        %v2941 = vld [vmem:[%s2940] ss:$8 sm:$0x3]
        %v2943 = vlaneseq
        %v2944 = vshrl.u32 %v2943, 7
        %v2945 = vsub.s32 0, %v2944
        %v2946 = vrot.slane %v2941, %v2945
        %v2947 = vlaneseq
        %v2948 = vshrl.u32 %v2947, 7
        %v2949 = vsub.s32 1, %v2948
        %v2950 = vrot.slane %v2941, %v2949
        %2951 = vrot.lane.b32.xlu0 %v2946, 32
        %v2952 = vpop.permute.xlu0 %2951
        %2953 = vrot.lane.b32.xlu0 %v2950, 32
        %v2954 = vpop.permute.xlu0 %2953
        %v2955 = vsel %vm1619, %v2952, %v2954
        %v2958 = vmul.f32 %v2689, %v2952
        %v2959 = vmul.f32 %v2690, %v2955
        %v2960 = vmul.f32 %v1410, %v2952
        %v2961 = vmul.f32 %v1411, %v2955
        %v2962 = vmul.f32 %v2691, %v2952
        %v2963 = vmul.f32 %v2692, %v2955
        %v2970 = vrot.slane %v2958, 3
        %v2971 = vrot.slane %v2960, 3
        %v2972 = vsel %vm2716, %v2970, %v2971
        %v2973 = vrot.slane %v2959, 3
        %v2974 = vrot.slane %v2961, 3
        %v2975 = vsel %vm2716, %v2973, %v2974
        %v2976 = vrot.slane %v2962, 3
        %v2977 = vsel %vm2716, %v2971, %v2976
        %v2978 = vrot.slane %v2963, 3
        %v2979 = vsel %vm2716, %v2974, %v2978
        %2980 = vrot.lane.b32.xlu0 %v2972, 96
        %v2981 = vpop.permute.xlu0 %2980
        %2982 = vrot.lane.b32.xlu0 %v2975, 96
        %v2983 = vpop.permute.xlu0 %2982
        %2984 = vrot.lane.b32.xlu0 %v2977, 96
        %v2985 = vpop.permute.xlu0 %2984
        %2986 = vrot.lane.b32.xlu0 %v2979, 96
        %v2987 = vpop.permute.xlu0 %2986
        %2988 = vrot.lane.b32.xlu0 %v2976, 96
        %v2989 = vpop.permute.xlu0 %2988
        %2990 = vrot.lane.b32.xlu0 %v2978, 96
        %v2991 = vpop.permute.xlu0 %2990
        %v2992 = vsel %vm1647, %v2981, %v2983
        %v2993 = vsel %vm1647, %v2985, %v2987
        %v2994 = vsel %vm1647, %v2989, %v2991
        %v3001 = vadd.f32 %v2934, %v2992
        %v3002 = vadd.f32 %v2935, %v2983
        %v3003 = vadd.f32 %v2936, %v2993
        %v3004 = vadd.f32 %v2937, %v2987
        %v3005 = vadd.f32 %v2938, %v2994
        %v3006 = vadd.f32 %v2939, %v2991
        %s3007 = scalar_lea.vmem [#allocation4], 50
        %v3008 = vld [vmem:[%s3007] ss:$8 sm:$0x3]
        %v3010 = vlaneseq
        %v3011 = vshrl.u32 %v3010, 7
        %v3012 = vsub.s32 0, %v3011
        %v3013 = vrot.slane %v3008, %v3012
        %v3014 = vlaneseq
        %v3015 = vshrl.u32 %v3014, 7
        %v3016 = vsub.s32 1, %v3015
        %v3017 = vrot.slane %v3008, %v3016
        %3018 = vrot.lane.b32.xlu0 %v3013, 40
        %v3019 = vpop.permute.xlu0 %3018
        %3020 = vrot.lane.b32.xlu0 %v3017, 40
        %v3021 = vpop.permute.xlu0 %3020
        %v3022 = vsel %vm1678, %v3019, %v3021
        %v3025 = vmul.f32 %v2689, %v3019
        %v3026 = vmul.f32 %v2690, %v3022
        %v3027 = vmul.f32 %v1410, %v3019
        %v3028 = vmul.f32 %v1411, %v3022
        %v3029 = vmul.f32 %v2691, %v3019
        %v3030 = vmul.f32 %v2692, %v3022
        %v3037 = vrot.slane %v3025, 3
        %v3038 = vrot.slane %v3027, 3
        %v3039 = vsel %vm2716, %v3037, %v3038
        %v3040 = vrot.slane %v3026, 3
        %v3041 = vrot.slane %v3028, 3
        %v3042 = vsel %vm2716, %v3040, %v3041
        %v3043 = vrot.slane %v3029, 3
        %v3044 = vsel %vm2716, %v3038, %v3043
        %v3045 = vrot.slane %v3030, 3
        %v3046 = vsel %vm2716, %v3041, %v3045
        %3047 = vrot.lane.b32.xlu0 %v3039, 88
        %v3048 = vpop.permute.xlu0 %3047
        %3049 = vrot.lane.b32.xlu0 %v3042, 88
        %v3050 = vpop.permute.xlu0 %3049
        %3051 = vrot.lane.b32.xlu0 %v3044, 88
        %v3052 = vpop.permute.xlu0 %3051
        %3053 = vrot.lane.b32.xlu0 %v3046, 88
        %v3054 = vpop.permute.xlu0 %3053
        %3055 = vrot.lane.b32.xlu0 %v3043, 88
        %v3056 = vpop.permute.xlu0 %3055
        %3057 = vrot.lane.b32.xlu0 %v3045, 88
        %v3058 = vpop.permute.xlu0 %3057
        %v3059 = vsel %vm1706, %v3048, %v3050
        %v3060 = vsel %vm1706, %v3052, %v3054
        %v3061 = vsel %vm1706, %v3056, %v3058
        %v3068 = vadd.f32 %v3001, %v3059
        %v3069 = vadd.f32 %v3002, %v3050
        %v3070 = vadd.f32 %v3003, %v3060
        %v3071 = vadd.f32 %v3004, %v3054
        %v3072 = vadd.f32 %v3005, %v3061
        %v3073 = vadd.f32 %v3006, %v3058
        %s3074 = scalar_lea.vmem [#allocation4], 51
        %v3075 = vld [vmem:[%s3074] ss:$8 sm:$0x3]
        %v3077 = vlaneseq
        %v3078 = vshrl.u32 %v3077, 7
        %v3079 = vsub.s32 0, %v3078
        %v3080 = vrot.slane %v3075, %v3079
        %v3081 = vlaneseq
        %v3082 = vshrl.u32 %v3081, 7
        %v3083 = vsub.s32 1, %v3082
        %v3084 = vrot.slane %v3075, %v3083
        %3085 = vrot.lane.b32.xlu0 %v3080, 48
        %v3086 = vpop.permute.xlu0 %3085
        %3087 = vrot.lane.b32.xlu0 %v3084, 48
        %v3088 = vpop.permute.xlu0 %3087
        %v3089 = vsel %vm1737, %v3086, %v3088
        %v3092 = vmul.f32 %v2689, %v3086
        %v3093 = vmul.f32 %v2690, %v3089
        %v3094 = vmul.f32 %v1410, %v3086
        %v3095 = vmul.f32 %v1411, %v3089
        %v3096 = vmul.f32 %v2691, %v3086
        %v3097 = vmul.f32 %v2692, %v3089
        %v3104 = vrot.slane %v3092, 3
        %v3105 = vrot.slane %v3094, 3
        %v3106 = vsel %vm2716, %v3104, %v3105
        %v3107 = vrot.slane %v3093, 3
        %v3108 = vrot.slane %v3095, 3
        %v3109 = vsel %vm2716, %v3107, %v3108
        %v3110 = vrot.slane %v3096, 3
        %v3111 = vsel %vm2716, %v3105, %v3110
        %v3112 = vrot.slane %v3097, 3
        %v3113 = vsel %vm2716, %v3108, %v3112
        %3114 = vrot.lane.b32.xlu0 %v3106, 80
        %v3115 = vpop.permute.xlu0 %3114
        %3116 = vrot.lane.b32.xlu0 %v3109, 80
        %v3117 = vpop.permute.xlu0 %3116
        %3118 = vrot.lane.b32.xlu0 %v3111, 80
        %v3119 = vpop.permute.xlu0 %3118
        %3120 = vrot.lane.b32.xlu0 %v3113, 80
        %v3121 = vpop.permute.xlu0 %3120
        %3122 = vrot.lane.b32.xlu0 %v3110, 80
        %v3123 = vpop.permute.xlu0 %3122
        %3124 = vrot.lane.b32.xlu0 %v3112, 80
        %v3125 = vpop.permute.xlu0 %3124
        %v3126 = vsel %vm1765, %v3115, %v3117
        %v3127 = vsel %vm1765, %v3119, %v3121
        %v3128 = vsel %vm1765, %v3123, %v3125
        %v3135 = vadd.f32 %v3068, %v3126
        %v3136 = vadd.f32 %v3069, %v3117
        %v3137 = vadd.f32 %v3070, %v3127
        %v3138 = vadd.f32 %v3071, %v3121
        %v3139 = vadd.f32 %v3072, %v3128
        %v3140 = vadd.f32 %v3073, %v3125
        %s3141 = scalar_lea.vmem [#allocation4], 52
        %v3142 = vld [vmem:[%s3141] ss:$8 sm:$0x3]
        %v3143 = vld [vmem:[#allocation2] sm:$0xf0]
        %v3144 = vld [vmem:[#allocation2 + $0x8] sm:$0xf0]
        %v3145 = vld [vmem:[#allocation2 + $0x20] sm:$0x3f]
        %v3146 = vld [vmem:[#allocation2 + $0x28] sm:$0x3f]
        %v3148 = vlaneseq
        %v3149 = vshrl.u32 %v3148, 7
        %v3150 = vsub.s32 0, %v3149
        %v3151 = vrot.slane %v3142, %v3150
        %v3152 = vlaneseq
        %v3153 = vshrl.u32 %v3152, 7
        %v3154 = vsub.s32 1, %v3153
        %v3155 = vrot.slane %v3142, %v3154
        %v3158 = vmul.f32 %v3143, %v3151
        %v3159 = vmul.f32 %v3144, %v3155
        %v3160 = vmul.f32 %v1410, %v3151
        %v3161 = vmul.f32 %v1411, %v3155
        %v3162 = vmul.f32 %v3145, %v3151
        %v3163 = vmul.f32 %v3146, %v3155
        %vm3170 = vcmask 1043456
        %v3171 = vrot.slane %v3158, 4
        %v3172 = vrot.slane %v3160, 4
        %v3173 = vsel %vm3170, %v3171, %v3172
        %v3174 = vrot.slane %v3159, 4
        %v3175 = vrot.slane %v3161, 4
        %v3176 = vsel %vm3170, %v3174, %v3175
        %v3177 = vrot.slane %v3162, 4
        %v3178 = vsel %vm3170, %v3172, %v3177
        %v3179 = vrot.slane %v3163, 4
        %v3180 = vsel %vm3170, %v3175, %v3179
        %v3187 = vadd.f32 %v3135, %v3173
        %v3188 = vadd.f32 %v3136, %v3176
        %v3189 = vadd.f32 %v3137, %v3178
        %v3190 = vadd.f32 %v3138, %v3180
        %v3191 = vadd.f32 %v3139, %v3177
        %v3192 = vadd.f32 %v3140, %v3179
        %s3193 = scalar_lea.vmem [#allocation4], 53
        %v3194 = vld [vmem:[%s3193] ss:$8 sm:$0x3]
        %v3196 = vlaneseq
        %v3197 = vshrl.u32 %v3196, 7
        %v3198 = vsub.s32 0, %v3197
        %v3199 = vrot.slane %v3194, %v3198
        %v3200 = vlaneseq
        %v3201 = vshrl.u32 %v3200, 7
        %v3202 = vsub.s32 1, %v3201
        %v3203 = vrot.slane %v3194, %v3202
        %3204 = vrot.lane.b32.xlu0 %v3199, 8
        %v3205 = vpop.permute.xlu0 %3204
        %3206 = vrot.lane.b32.xlu0 %v3203, 8
        %v3207 = vpop.permute.xlu0 %3206
        %v3208 = vsel %vm524, %v3205, %v3207
        %v3211 = vmul.f32 %v3143, %v3205
        %v3212 = vmul.f32 %v3144, %v3208
        %v3213 = vmul.f32 %v1410, %v3205
        %v3214 = vmul.f32 %v1411, %v3208
        %v3215 = vmul.f32 %v3145, %v3205
        %v3216 = vmul.f32 %v3146, %v3208
        %v3223 = vrot.slane %v3211, 4
        %v3224 = vrot.slane %v3213, 4
        %v3225 = vsel %vm3170, %v3223, %v3224
        %v3226 = vrot.slane %v3212, 4
        %v3227 = vrot.slane %v3214, 4
        %v3228 = vsel %vm3170, %v3226, %v3227
        %v3229 = vrot.slane %v3215, 4
        %v3230 = vsel %vm3170, %v3224, %v3229
        %v3231 = vrot.slane %v3216, 4
        %v3232 = vsel %vm3170, %v3227, %v3231
        %3233 = vrot.lane.b32.xlu0 %v3225, 120
        %v3234 = vpop.permute.xlu0 %3233
        %3235 = vrot.lane.b32.xlu0 %v3228, 120
        %v3236 = vpop.permute.xlu0 %3235
        %3237 = vrot.lane.b32.xlu0 %v3230, 120
        %v3238 = vpop.permute.xlu0 %3237
        %3239 = vrot.lane.b32.xlu0 %v3232, 120
        %v3240 = vpop.permute.xlu0 %3239
        %3241 = vrot.lane.b32.xlu0 %v3229, 120
        %v3242 = vpop.permute.xlu0 %3241
        %3243 = vrot.lane.b32.xlu0 %v3231, 120
        %v3244 = vpop.permute.xlu0 %3243
        %v3245 = vsel %vm552, %v3234, %v3236
        %v3246 = vsel %vm552, %v3238, %v3240
        %v3247 = vsel %vm552, %v3242, %v3244
        %v3254 = vadd.f32 %v3187, %v3245
        %v3255 = vadd.f32 %v3188, %v3236
        %v3256 = vadd.f32 %v3189, %v3246
        %v3257 = vadd.f32 %v3190, %v3240
        %v3258 = vadd.f32 %v3191, %v3247
        %v3259 = vadd.f32 %v3192, %v3244
        %s3260 = scalar_lea.vmem [#allocation4], 54
        %v3261 = vld [vmem:[%s3260] ss:$8 sm:$0x3]
        %v3263 = vlaneseq
        %v3264 = vshrl.u32 %v3263, 7
        %v3265 = vsub.s32 0, %v3264
        %v3266 = vrot.slane %v3261, %v3265
        %v3267 = vlaneseq
        %v3268 = vshrl.u32 %v3267, 7
        %v3269 = vsub.s32 1, %v3268
        %v3270 = vrot.slane %v3261, %v3269
        %3271 = vrot.lane.b32.xlu0 %v3266, 16
        %v3272 = vpop.permute.xlu0 %3271
        %3273 = vrot.lane.b32.xlu0 %v3270, 16
        %v3274 = vpop.permute.xlu0 %3273
        %v3275 = vsel %vm583, %v3272, %v3274
        %v3278 = vmul.f32 %v3143, %v3272
        %v3279 = vmul.f32 %v3144, %v3275
        %v3280 = vmul.f32 %v1410, %v3272
        %v3281 = vmul.f32 %v1411, %v3275
        %v3282 = vmul.f32 %v3145, %v3272
        %v3283 = vmul.f32 %v3146, %v3275
        %v3290 = vrot.slane %v3278, 4
        %v3291 = vrot.slane %v3280, 4
        %v3292 = vsel %vm3170, %v3290, %v3291
        %v3293 = vrot.slane %v3279, 4
        %v3294 = vrot.slane %v3281, 4
        %v3295 = vsel %vm3170, %v3293, %v3294
        %v3296 = vrot.slane %v3282, 4
        %v3297 = vsel %vm3170, %v3291, %v3296
        %v3298 = vrot.slane %v3283, 4
        %v3299 = vsel %vm3170, %v3294, %v3298
        %3300 = vrot.lane.b32.xlu0 %v3292, 112
        %v3301 = vpop.permute.xlu0 %3300
        %3302 = vrot.lane.b32.xlu0 %v3295, 112
        %v3303 = vpop.permute.xlu0 %3302
        %3304 = vrot.lane.b32.xlu0 %v3297, 112
        %v3305 = vpop.permute.xlu0 %3304
        %3306 = vrot.lane.b32.xlu0 %v3299, 112
        %v3307 = vpop.permute.xlu0 %3306
        %3308 = vrot.lane.b32.xlu0 %v3296, 112
        %v3309 = vpop.permute.xlu0 %3308
        %3310 = vrot.lane.b32.xlu0 %v3298, 112
        %v3311 = vpop.permute.xlu0 %3310
        %v3312 = vsel %vm611, %v3301, %v3303
        %v3313 = vsel %vm611, %v3305, %v3307
        %v3314 = vsel %vm611, %v3309, %v3311
        %v3321 = vadd.f32 %v3254, %v3312
        %v3322 = vadd.f32 %v3255, %v3303
        %v3323 = vadd.f32 %v3256, %v3313
        %v3324 = vadd.f32 %v3257, %v3307
        %v3325 = vadd.f32 %v3258, %v3314
        %v3326 = vadd.f32 %v3259, %v3311
        %s3327 = scalar_lea.vmem [#allocation4], 55
        %v3328 = vld [vmem:[%s3327] ss:$8 sm:$0x3]
        %v3330 = vlaneseq
        %v3331 = vshrl.u32 %v3330, 7
        %v3332 = vsub.s32 0, %v3331
        %v3333 = vrot.slane %v3328, %v3332
        %v3334 = vlaneseq
        %v3335 = vshrl.u32 %v3334, 7
        %v3336 = vsub.s32 1, %v3335
        %v3337 = vrot.slane %v3328, %v3336
        %3338 = vrot.lane.b32.xlu0 %v3333, 24
        %v3339 = vpop.permute.xlu0 %3338
        %3340 = vrot.lane.b32.xlu0 %v3337, 24
        %v3341 = vpop.permute.xlu0 %3340
        %v3342 = vsel %vm1560, %v3339, %v3341
        %v3345 = vmul.f32 %v3143, %v3339
        %v3346 = vmul.f32 %v3144, %v3342
        %v3347 = vmul.f32 %v1410, %v3339
        %v3348 = vmul.f32 %v1411, %v3342
        %v3349 = vmul.f32 %v3145, %v3339
        %v3350 = vmul.f32 %v3146, %v3342
        %v3357 = vrot.slane %v3345, 4
        %v3358 = vrot.slane %v3347, 4
        %v3359 = vsel %vm3170, %v3357, %v3358
        %v3360 = vrot.slane %v3346, 4
        %v3361 = vrot.slane %v3348, 4
        %v3362 = vsel %vm3170, %v3360, %v3361
        %v3363 = vrot.slane %v3349, 4
        %v3364 = vsel %vm3170, %v3358, %v3363
        %v3365 = vrot.slane %v3350, 4
        %v3366 = vsel %vm3170, %v3361, %v3365
        %3367 = vrot.lane.b32.xlu0 %v3359, 104
        %v3368 = vpop.permute.xlu0 %3367
        %3369 = vrot.lane.b32.xlu0 %v3362, 104
        %v3370 = vpop.permute.xlu0 %3369
        %3371 = vrot.lane.b32.xlu0 %v3364, 104
        %v3372 = vpop.permute.xlu0 %3371
        %3373 = vrot.lane.b32.xlu0 %v3366, 104
        %v3374 = vpop.permute.xlu0 %3373
        %3375 = vrot.lane.b32.xlu0 %v3363, 104
        %v3376 = vpop.permute.xlu0 %3375
        %3377 = vrot.lane.b32.xlu0 %v3365, 104
        %v3378 = vpop.permute.xlu0 %3377
        %v3379 = vsel %vm1588, %v3368, %v3370
        %v3380 = vsel %vm1588, %v3372, %v3374
        %v3381 = vsel %vm1588, %v3376, %v3378
        %v3388 = vadd.f32 %v3321, %v3379
        %v3389 = vadd.f32 %v3322, %v3370
        %v3390 = vadd.f32 %v3323, %v3380
        %v3391 = vadd.f32 %v3324, %v3374
        %v3392 = vadd.f32 %v3325, %v3381
        %v3393 = vadd.f32 %v3326, %v3378
        %s3394 = scalar_lea.vmem [#allocation4], 64
        %v3395 = vld [vmem:[%s3394] ss:$8 sm:$0x3]
        %v3397 = vlaneseq
        %v3398 = vshrl.u32 %v3397, 7
        %v3399 = vsub.s32 0, %v3398
        %v3400 = vrot.slane %v3395, %v3399
        %v3401 = vlaneseq
        %v3402 = vshrl.u32 %v3401, 7
        %v3403 = vsub.s32 1, %v3402
        %v3404 = vrot.slane %v3395, %v3403
        %3405 = vrot.lane.b32.xlu0 %v3400, 32
        %v3406 = vpop.permute.xlu0 %3405
        %3407 = vrot.lane.b32.xlu0 %v3404, 32
        %v3408 = vpop.permute.xlu0 %3407
        %v3409 = vsel %vm1619, %v3406, %v3408
        %v3412 = vmul.f32 %v3143, %v3406
        %v3413 = vmul.f32 %v3144, %v3409
        %v3414 = vmul.f32 %v1410, %v3406
        %v3415 = vmul.f32 %v1411, %v3409
        %v3416 = vmul.f32 %v3145, %v3406
        %v3417 = vmul.f32 %v3146, %v3409
        %v3424 = vrot.slane %v3412, 4
        %v3425 = vrot.slane %v3414, 4
        %v3426 = vsel %vm3170, %v3424, %v3425
        %v3427 = vrot.slane %v3413, 4
        %v3428 = vrot.slane %v3415, 4
        %v3429 = vsel %vm3170, %v3427, %v3428
        %v3430 = vrot.slane %v3416, 4
        %v3431 = vsel %vm3170, %v3425, %v3430
        %v3432 = vrot.slane %v3417, 4
        %v3433 = vsel %vm3170, %v3428, %v3432
        %3434 = vrot.lane.b32.xlu0 %v3426, 96
        %v3435 = vpop.permute.xlu0 %3434
        %3436 = vrot.lane.b32.xlu0 %v3429, 96
        %v3437 = vpop.permute.xlu0 %3436
        %3438 = vrot.lane.b32.xlu0 %v3431, 96
        %v3439 = vpop.permute.xlu0 %3438
        %3440 = vrot.lane.b32.xlu0 %v3433, 96
        %v3441 = vpop.permute.xlu0 %3440
        %3442 = vrot.lane.b32.xlu0 %v3430, 96
        %v3443 = vpop.permute.xlu0 %3442
        %3444 = vrot.lane.b32.xlu0 %v3432, 96
        %v3445 = vpop.permute.xlu0 %3444
        %v3446 = vsel %vm1647, %v3435, %v3437
        %v3447 = vsel %vm1647, %v3439, %v3441
        %v3448 = vsel %vm1647, %v3443, %v3445
        %v3455 = vadd.f32 %v3388, %v3446
        %v3456 = vadd.f32 %v3389, %v3437
        %v3457 = vadd.f32 %v3390, %v3447
        %v3458 = vadd.f32 %v3391, %v3441
        %v3459 = vadd.f32 %v3392, %v3448
        %v3460 = vadd.f32 %v3393, %v3445
        %s3461 = scalar_lea.vmem [#allocation4], 65
        %v3462 = vld [vmem:[%s3461] ss:$8 sm:$0x3]
        %v3464 = vlaneseq
        %v3465 = vshrl.u32 %v3464, 7
        %v3466 = vsub.s32 0, %v3465
        %v3467 = vrot.slane %v3462, %v3466
        %v3468 = vlaneseq
        %v3469 = vshrl.u32 %v3468, 7
        %v3470 = vsub.s32 1, %v3469
        %v3471 = vrot.slane %v3462, %v3470
        %3472 = vrot.lane.b32.xlu0 %v3467, 40
        %v3473 = vpop.permute.xlu0 %3472
        %3474 = vrot.lane.b32.xlu0 %v3471, 40
        %v3475 = vpop.permute.xlu0 %3474
        %v3476 = vsel %vm1678, %v3473, %v3475
        %v3479 = vmul.f32 %v3143, %v3473
        %v3480 = vmul.f32 %v3144, %v3476
        %v3481 = vmul.f32 %v1410, %v3473
        %v3482 = vmul.f32 %v1411, %v3476
        %v3483 = vmul.f32 %v3145, %v3473
        %v3484 = vmul.f32 %v3146, %v3476
        %v3491 = vrot.slane %v3479, 4
        %v3492 = vrot.slane %v3481, 4
        %v3493 = vsel %vm3170, %v3491, %v3492
        %v3494 = vrot.slane %v3480, 4
        %v3495 = vrot.slane %v3482, 4
        %v3496 = vsel %vm3170, %v3494, %v3495
        %v3497 = vrot.slane %v3483, 4
        %v3498 = vsel %vm3170, %v3492, %v3497
        %v3499 = vrot.slane %v3484, 4
        %v3500 = vsel %vm3170, %v3495, %v3499
        %3501 = vrot.lane.b32.xlu0 %v3493, 88
        %v3502 = vpop.permute.xlu0 %3501
        %3503 = vrot.lane.b32.xlu0 %v3496, 88
        %v3504 = vpop.permute.xlu0 %3503
        %3505 = vrot.lane.b32.xlu0 %v3498, 88
        %v3506 = vpop.permute.xlu0 %3505
        %3507 = vrot.lane.b32.xlu0 %v3500, 88
        %v3508 = vpop.permute.xlu0 %3507
        %3509 = vrot.lane.b32.xlu0 %v3497, 88
        %v3510 = vpop.permute.xlu0 %3509
        %3511 = vrot.lane.b32.xlu0 %v3499, 88
        %v3512 = vpop.permute.xlu0 %3511
        %v3513 = vsel %vm1706, %v3502, %v3504
        %v3514 = vsel %vm1706, %v3506, %v3508
        %v3515 = vsel %vm1706, %v3510, %v3512
        %v3522 = vadd.f32 %v3455, %v3513
        %v3523 = vadd.f32 %v3456, %v3504
        %v3524 = vadd.f32 %v3457, %v3514
        %v3525 = vadd.f32 %v3458, %v3508
        %v3526 = vadd.f32 %v3459, %v3515
        %v3527 = vadd.f32 %v3460, %v3512
        %s3528 = scalar_lea.vmem [#allocation4], 66
        %v3529 = vld [vmem:[%s3528] ss:$8 sm:$0x3]
        %v3531 = vlaneseq
        %v3532 = vshrl.u32 %v3531, 7
        %v3533 = vsub.s32 0, %v3532
        %v3534 = vrot.slane %v3529, %v3533
        %v3535 = vlaneseq
        %v3536 = vshrl.u32 %v3535, 7
        %v3537 = vsub.s32 1, %v3536
        %v3538 = vrot.slane %v3529, %v3537
        %3539 = vrot.lane.b32.xlu0 %v3534, 48
        %v3540 = vpop.permute.xlu0 %3539
        %3541 = vrot.lane.b32.xlu0 %v3538, 48
        %v3542 = vpop.permute.xlu0 %3541
        %v3543 = vsel %vm1737, %v3540, %v3542
        %v3546 = vmul.f32 %v3143, %v3540
        %v3547 = vmul.f32 %v3144, %v3543
        %v3548 = vmul.f32 %v1410, %v3540
        %v3549 = vmul.f32 %v1411, %v3543
        %v3550 = vmul.f32 %v3145, %v3540
        %v3551 = vmul.f32 %v3146, %v3543
        %v3558 = vrot.slane %v3546, 4
        %v3559 = vrot.slane %v3548, 4
        %v3560 = vsel %vm3170, %v3558, %v3559
        %v3561 = vrot.slane %v3547, 4
        %v3562 = vrot.slane %v3549, 4
        %v3563 = vsel %vm3170, %v3561, %v3562
        %v3564 = vrot.slane %v3550, 4
        %v3565 = vsel %vm3170, %v3559, %v3564
        %v3566 = vrot.slane %v3551, 4
        %v3567 = vsel %vm3170, %v3562, %v3566
        %3568 = vrot.lane.b32.xlu0 %v3560, 80
        %v3569 = vpop.permute.xlu0 %3568
        %3570 = vrot.lane.b32.xlu0 %v3563, 80
        %v3571 = vpop.permute.xlu0 %3570
        %3572 = vrot.lane.b32.xlu0 %v3565, 80
        %v3573 = vpop.permute.xlu0 %3572
        %3574 = vrot.lane.b32.xlu0 %v3567, 80
        %v3575 = vpop.permute.xlu0 %3574
        %3576 = vrot.lane.b32.xlu0 %v3564, 80
        %v3577 = vpop.permute.xlu0 %3576
        %3578 = vrot.lane.b32.xlu0 %v3566, 80
        %v3579 = vpop.permute.xlu0 %3578
        %v3580 = vsel %vm1765, %v3569, %v3571
        %v3581 = vsel %vm1765, %v3573, %v3575
        %v3582 = vsel %vm1765, %v3577, %v3579
        %v3589 = vadd.f32 %v3522, %v3580
        %v3590 = vadd.f32 %v3523, %v3571
        %v3591 = vadd.f32 %v3524, %v3581
        %v3592 = vadd.f32 %v3525, %v3575
        %v3593 = vadd.f32 %v3526, %v3582
        %v3594 = vadd.f32 %v3527, %v3579
        %s3595 = scalar_lea.vmem [#allocation4], 67
        %v3596 = vld [vmem:[%s3595] ss:$8 sm:$0x3]
        %v3597 = vld [vmem:[#allocation2] sm:$0xe0]
        %v3598 = vld [vmem:[#allocation2 + $0x8] sm:$0xe0]
        %v3599 = vld [vmem:[#allocation2 + $0x20] sm:$0x7f]
        %v3600 = vld [vmem:[#allocation2 + $0x28] sm:$0x7f]
        %v3602 = vlaneseq
        %v3603 = vshrl.u32 %v3602, 7
        %v3604 = vsub.s32 0, %v3603
        %v3605 = vrot.slane %v3596, %v3604
        %v3606 = vlaneseq
        %v3607 = vshrl.u32 %v3606, 7
        %v3608 = vsub.s32 1, %v3607
        %v3609 = vrot.slane %v3596, %v3608
        %v3612 = vmul.f32 %v3597, %v3605
        %v3613 = vmul.f32 %v3598, %v3609
        %v3614 = vmul.f32 %v1410, %v3605
        %v3615 = vmul.f32 %v1411, %v3609
        %v3616 = vmul.f32 %v3599, %v3605
        %v3617 = vmul.f32 %v3600, %v3609
        %vm3624 = vcmask 1042432
        %v3625 = vrot.slane %v3612, 5
        %v3626 = vrot.slane %v3614, 5
        %v3627 = vsel %vm3624, %v3625, %v3626
        %v3628 = vrot.slane %v3613, 5
        %v3629 = vrot.slane %v3615, 5
        %v3630 = vsel %vm3624, %v3628, %v3629
        %v3631 = vrot.slane %v3616, 5
        %v3632 = vsel %vm3624, %v3626, %v3631
        %v3633 = vrot.slane %v3617, 5
        %v3634 = vsel %vm3624, %v3629, %v3633
        %v3641 = vadd.f32 %v3589, %v3627
        %v3642 = vadd.f32 %v3590, %v3630
        %v3643 = vadd.f32 %v3591, %v3632
        %v3644 = vadd.f32 %v3592, %v3634
        %v3645 = vadd.f32 %v3593, %v3631
        %v3646 = vadd.f32 %v3594, %v3633
        %s3647 = scalar_lea.vmem [#allocation4], 68
        %v3648 = vld [vmem:[%s3647] ss:$8 sm:$0x3]
        %v3650 = vlaneseq
        %v3651 = vshrl.u32 %v3650, 7
        %v3652 = vsub.s32 0, %v3651
        %v3653 = vrot.slane %v3648, %v3652
        %v3654 = vlaneseq
        %v3655 = vshrl.u32 %v3654, 7
        %v3656 = vsub.s32 1, %v3655
        %v3657 = vrot.slane %v3648, %v3656
        %3658 = vrot.lane.b32.xlu0 %v3653, 8
        %v3659 = vpop.permute.xlu0 %3658
        %3660 = vrot.lane.b32.xlu0 %v3657, 8
        %v3661 = vpop.permute.xlu0 %3660
        %v3662 = vsel %vm524, %v3659, %v3661
        %v3665 = vmul.f32 %v3597, %v3659
        %v3666 = vmul.f32 %v3598, %v3662
        %v3667 = vmul.f32 %v1410, %v3659
        %v3668 = vmul.f32 %v1411, %v3662
        %v3669 = vmul.f32 %v3599, %v3659
        %v3670 = vmul.f32 %v3600, %v3662
        %v3677 = vrot.slane %v3665, 5
        %v3678 = vrot.slane %v3667, 5
        %v3679 = vsel %vm3624, %v3677, %v3678
        %v3680 = vrot.slane %v3666, 5
        %v3681 = vrot.slane %v3668, 5
        %v3682 = vsel %vm3624, %v3680, %v3681
        %v3683 = vrot.slane %v3669, 5
        %v3684 = vsel %vm3624, %v3678, %v3683
        %v3685 = vrot.slane %v3670, 5
        %v3686 = vsel %vm3624, %v3681, %v3685
        %3687 = vrot.lane.b32.xlu0 %v3679, 120
        %v3688 = vpop.permute.xlu0 %3687
        %3689 = vrot.lane.b32.xlu0 %v3682, 120
        %v3690 = vpop.permute.xlu0 %3689
        %3691 = vrot.lane.b32.xlu0 %v3684, 120
        %v3692 = vpop.permute.xlu0 %3691
        %3693 = vrot.lane.b32.xlu0 %v3686, 120
        %v3694 = vpop.permute.xlu0 %3693
        %3695 = vrot.lane.b32.xlu0 %v3683, 120
        %v3696 = vpop.permute.xlu0 %3695
        %3697 = vrot.lane.b32.xlu0 %v3685, 120
        %v3698 = vpop.permute.xlu0 %3697
        %v3699 = vsel %vm552, %v3688, %v3690
        %v3700 = vsel %vm552, %v3692, %v3694
        %v3701 = vsel %vm552, %v3696, %v3698
        %v3708 = vadd.f32 %v3641, %v3699
        %v3709 = vadd.f32 %v3642, %v3690
        %v3710 = vadd.f32 %v3643, %v3700
        %v3711 = vadd.f32 %v3644, %v3694
        %v3712 = vadd.f32 %v3645, %v3701
        %v3713 = vadd.f32 %v3646, %v3698
        %s3714 = scalar_lea.vmem [#allocation4], 69
        %v3715 = vld [vmem:[%s3714] ss:$8 sm:$0x3]
        %v3717 = vlaneseq
        %v3718 = vshrl.u32 %v3717, 7
        %v3719 = vsub.s32 0, %v3718
        %v3720 = vrot.slane %v3715, %v3719
        %v3721 = vlaneseq
        %v3722 = vshrl.u32 %v3721, 7
        %v3723 = vsub.s32 1, %v3722
        %v3724 = vrot.slane %v3715, %v3723
        %3725 = vrot.lane.b32.xlu0 %v3720, 16
        %v3726 = vpop.permute.xlu0 %3725
        %3727 = vrot.lane.b32.xlu0 %v3724, 16
        %v3728 = vpop.permute.xlu0 %3727
        %v3729 = vsel %vm583, %v3726, %v3728
        %v3732 = vmul.f32 %v3597, %v3726
        %v3733 = vmul.f32 %v3598, %v3729
        %v3734 = vmul.f32 %v1410, %v3726
        %v3735 = vmul.f32 %v1411, %v3729
        %v3736 = vmul.f32 %v3599, %v3726
        %v3737 = vmul.f32 %v3600, %v3729
        %v3744 = vrot.slane %v3732, 5
        %v3745 = vrot.slane %v3734, 5
        %v3746 = vsel %vm3624, %v3744, %v3745
        %v3747 = vrot.slane %v3733, 5
        %v3748 = vrot.slane %v3735, 5
        %v3749 = vsel %vm3624, %v3747, %v3748
        %v3750 = vrot.slane %v3736, 5
        %v3751 = vsel %vm3624, %v3745, %v3750
        %v3752 = vrot.slane %v3737, 5
        %v3753 = vsel %vm3624, %v3748, %v3752
        %3754 = vrot.lane.b32.xlu0 %v3746, 112
        %v3755 = vpop.permute.xlu0 %3754
        %3756 = vrot.lane.b32.xlu0 %v3749, 112
        %v3757 = vpop.permute.xlu0 %3756
        %3758 = vrot.lane.b32.xlu0 %v3751, 112
        %v3759 = vpop.permute.xlu0 %3758
        %3760 = vrot.lane.b32.xlu0 %v3753, 112
        %v3761 = vpop.permute.xlu0 %3760
        %3762 = vrot.lane.b32.xlu0 %v3750, 112
        %v3763 = vpop.permute.xlu0 %3762
        %3764 = vrot.lane.b32.xlu0 %v3752, 112
        %v3765 = vpop.permute.xlu0 %3764
        %v3766 = vsel %vm611, %v3755, %v3757
        %v3767 = vsel %vm611, %v3759, %v3761
        %v3768 = vsel %vm611, %v3763, %v3765
        %v3775 = vadd.f32 %v3708, %v3766
        %v3776 = vadd.f32 %v3709, %v3757
        %v3777 = vadd.f32 %v3710, %v3767
        %v3778 = vadd.f32 %v3711, %v3761
        %v3779 = vadd.f32 %v3712, %v3768
        %v3780 = vadd.f32 %v3713, %v3765
        %s3781 = scalar_lea.vmem [#allocation4], 70
        %v3782 = vld [vmem:[%s3781] ss:$8 sm:$0x3]
        %v3784 = vlaneseq
        %v3785 = vshrl.u32 %v3784, 7
        %v3786 = vsub.s32 0, %v3785
        %v3787 = vrot.slane %v3782, %v3786
        %v3788 = vlaneseq
        %v3789 = vshrl.u32 %v3788, 7
        %v3790 = vsub.s32 1, %v3789
        %v3791 = vrot.slane %v3782, %v3790
        %3792 = vrot.lane.b32.xlu0 %v3787, 24
        %v3793 = vpop.permute.xlu0 %3792
        %3794 = vrot.lane.b32.xlu0 %v3791, 24
        %v3795 = vpop.permute.xlu0 %3794
        %v3796 = vsel %vm1560, %v3793, %v3795
        %v3799 = vmul.f32 %v3597, %v3793
        %v3800 = vmul.f32 %v3598, %v3796
        %v3801 = vmul.f32 %v1410, %v3793
        %v3802 = vmul.f32 %v1411, %v3796
        %v3803 = vmul.f32 %v3599, %v3793
        %v3804 = vmul.f32 %v3600, %v3796
        %v3811 = vrot.slane %v3799, 5
        %v3812 = vrot.slane %v3801, 5
        %v3813 = vsel %vm3624, %v3811, %v3812
        %v3814 = vrot.slane %v3800, 5
        %v3815 = vrot.slane %v3802, 5
        %v3816 = vsel %vm3624, %v3814, %v3815
        %v3817 = vrot.slane %v3803, 5
        %v3818 = vsel %vm3624, %v3812, %v3817
        %v3819 = vrot.slane %v3804, 5
        %v3820 = vsel %vm3624, %v3815, %v3819
        %3821 = vrot.lane.b32.xlu0 %v3813, 104
        %v3822 = vpop.permute.xlu0 %3821
        %3823 = vrot.lane.b32.xlu0 %v3816, 104
        %v3824 = vpop.permute.xlu0 %3823
        %3825 = vrot.lane.b32.xlu0 %v3818, 104
        %v3826 = vpop.permute.xlu0 %3825
        %3827 = vrot.lane.b32.xlu0 %v3820, 104
        %v3828 = vpop.permute.xlu0 %3827
        %3829 = vrot.lane.b32.xlu0 %v3817, 104
        %v3830 = vpop.permute.xlu0 %3829
        %3831 = vrot.lane.b32.xlu0 %v3819, 104
        %v3832 = vpop.permute.xlu0 %3831
        %v3833 = vsel %vm1588, %v3822, %v3824
        %v3834 = vsel %vm1588, %v3826, %v3828
        %v3835 = vsel %vm1588, %v3830, %v3832
        %v3842 = vadd.f32 %v3775, %v3833
        %v3843 = vadd.f32 %v3776, %v3824
        %v3844 = vadd.f32 %v3777, %v3834
        %v3845 = vadd.f32 %v3778, %v3828
        %v3846 = vadd.f32 %v3779, %v3835
        %v3847 = vadd.f32 %v3780, %v3832
        %s3848 = scalar_lea.vmem [#allocation4], 71
        %v3849 = vld [vmem:[%s3848] ss:$8 sm:$0x3]
        %v3851 = vlaneseq
        %v3852 = vshrl.u32 %v3851, 7
        %v3853 = vsub.s32 0, %v3852
        %v3854 = vrot.slane %v3849, %v3853
        %v3855 = vlaneseq
        %v3856 = vshrl.u32 %v3855, 7
        %v3857 = vsub.s32 1, %v3856
        %v3858 = vrot.slane %v3849, %v3857
        %3859 = vrot.lane.b32.xlu0 %v3854, 32
        %v3860 = vpop.permute.xlu0 %3859
        %3861 = vrot.lane.b32.xlu0 %v3858, 32
        %v3862 = vpop.permute.xlu0 %3861
        %v3863 = vsel %vm1619, %v3860, %v3862
        %v3866 = vmul.f32 %v3597, %v3860
        %v3867 = vmul.f32 %v3598, %v3863
        %v3868 = vmul.f32 %v1410, %v3860
        %v3869 = vmul.f32 %v1411, %v3863
        %v3870 = vmul.f32 %v3599, %v3860
        %v3871 = vmul.f32 %v3600, %v3863
        %v3878 = vrot.slane %v3866, 5
        %v3879 = vrot.slane %v3868, 5
        %v3880 = vsel %vm3624, %v3878, %v3879
        %v3881 = vrot.slane %v3867, 5
        %v3882 = vrot.slane %v3869, 5
        %v3883 = vsel %vm3624, %v3881, %v3882
        %v3884 = vrot.slane %v3870, 5
        %v3885 = vsel %vm3624, %v3879, %v3884
        %v3886 = vrot.slane %v3871, 5
        %v3887 = vsel %vm3624, %v3882, %v3886
        %3888 = vrot.lane.b32.xlu0 %v3880, 96
        %v3889 = vpop.permute.xlu0 %3888
        %3890 = vrot.lane.b32.xlu0 %v3883, 96
        %v3891 = vpop.permute.xlu0 %3890
        %3892 = vrot.lane.b32.xlu0 %v3885, 96
        %v3893 = vpop.permute.xlu0 %3892
        %3894 = vrot.lane.b32.xlu0 %v3887, 96
        %v3895 = vpop.permute.xlu0 %3894
        %3896 = vrot.lane.b32.xlu0 %v3884, 96
        %v3897 = vpop.permute.xlu0 %3896
        %3898 = vrot.lane.b32.xlu0 %v3886, 96
        %v3899 = vpop.permute.xlu0 %3898
        %v3900 = vsel %vm1647, %v3889, %v3891
        %v3901 = vsel %vm1647, %v3893, %v3895
        %v3902 = vsel %vm1647, %v3897, %v3899
        %v3909 = vadd.f32 %v3842, %v3900
        %v3910 = vadd.f32 %v3843, %v3891
        %v3911 = vadd.f32 %v3844, %v3901
        %v3912 = vadd.f32 %v3845, %v3895
        %v3913 = vadd.f32 %v3846, %v3902
        %v3914 = vadd.f32 %v3847, %v3899
        %s3915 = scalar_lea.vmem [#allocation4], 80
        %v3916 = vld [vmem:[%s3915] ss:$8 sm:$0x3]
        %v3918 = vlaneseq
        %v3919 = vshrl.u32 %v3918, 7
        %v3920 = vsub.s32 0, %v3919
        %v3921 = vrot.slane %v3916, %v3920
        %v3922 = vlaneseq
        %v3923 = vshrl.u32 %v3922, 7
        %v3924 = vsub.s32 1, %v3923
        %v3925 = vrot.slane %v3916, %v3924
        %3926 = vrot.lane.b32.xlu0 %v3921, 40
        %v3927 = vpop.permute.xlu0 %3926
        %3928 = vrot.lane.b32.xlu0 %v3925, 40
        %v3929 = vpop.permute.xlu0 %3928
        %v3930 = vsel %vm1678, %v3927, %v3929
        %v3933 = vmul.f32 %v3597, %v3927
        %v3934 = vmul.f32 %v3598, %v3930
        %v3935 = vmul.f32 %v1410, %v3927
        %v3936 = vmul.f32 %v1411, %v3930
        %v3937 = vmul.f32 %v3599, %v3927
        %v3938 = vmul.f32 %v3600, %v3930
        %v3945 = vrot.slane %v3933, 5
        %v3946 = vrot.slane %v3935, 5
        %v3947 = vsel %vm3624, %v3945, %v3946
        %v3948 = vrot.slane %v3934, 5
        %v3949 = vrot.slane %v3936, 5
        %v3950 = vsel %vm3624, %v3948, %v3949
        %v3951 = vrot.slane %v3937, 5
        %v3952 = vsel %vm3624, %v3946, %v3951
        %v3953 = vrot.slane %v3938, 5
        %v3954 = vsel %vm3624, %v3949, %v3953
        %3955 = vrot.lane.b32.xlu0 %v3947, 88
        %v3956 = vpop.permute.xlu0 %3955
        %3957 = vrot.lane.b32.xlu0 %v3950, 88
        %v3958 = vpop.permute.xlu0 %3957
        %3959 = vrot.lane.b32.xlu0 %v3952, 88
        %v3960 = vpop.permute.xlu0 %3959
        %3961 = vrot.lane.b32.xlu0 %v3954, 88
        %v3962 = vpop.permute.xlu0 %3961
        %3963 = vrot.lane.b32.xlu0 %v3951, 88
        %v3964 = vpop.permute.xlu0 %3963
        %3965 = vrot.lane.b32.xlu0 %v3953, 88
        %v3966 = vpop.permute.xlu0 %3965
        %v3967 = vsel %vm1706, %v3956, %v3958
        %v3968 = vsel %vm1706, %v3960, %v3962
        %v3969 = vsel %vm1706, %v3964, %v3966
        %v3976 = vadd.f32 %v3909, %v3967
        %v3977 = vadd.f32 %v3910, %v3958
        %v3978 = vadd.f32 %v3911, %v3968
        %v3979 = vadd.f32 %v3912, %v3962
        %v3980 = vadd.f32 %v3913, %v3969
        %v3981 = vadd.f32 %v3914, %v3966
        %s3982 = scalar_lea.vmem [#allocation4], 81
        %v3983 = vld [vmem:[%s3982] ss:$8 sm:$0x3]
        %v3985 = vlaneseq
        %v3986 = vshrl.u32 %v3985, 7
        %v3987 = vsub.s32 0, %v3986
        %v3988 = vrot.slane %v3983, %v3987
        %v3989 = vlaneseq
        %v3990 = vshrl.u32 %v3989, 7
        %v3991 = vsub.s32 1, %v3990
        %v3992 = vrot.slane %v3983, %v3991
        %3993 = vrot.lane.b32.xlu0 %v3988, 48
        %v3994 = vpop.permute.xlu0 %3993
        %3995 = vrot.lane.b32.xlu0 %v3992, 48
        %v3996 = vpop.permute.xlu0 %3995
        %v3997 = vsel %vm1737, %v3994, %v3996
        %v4000 = vmul.f32 %v3597, %v3994
        %v4001 = vmul.f32 %v3598, %v3997
        %v4002 = vmul.f32 %v1410, %v3994
        %v4003 = vmul.f32 %v1411, %v3997
        %v4004 = vmul.f32 %v3599, %v3994
        %v4005 = vmul.f32 %v3600, %v3997
        %v4012 = vrot.slane %v4000, 5
        %v4013 = vrot.slane %v4002, 5
        %v4014 = vsel %vm3624, %v4012, %v4013
        %v4015 = vrot.slane %v4001, 5
        %v4016 = vrot.slane %v4003, 5
        %v4017 = vsel %vm3624, %v4015, %v4016
        %v4018 = vrot.slane %v4004, 5
        %v4019 = vsel %vm3624, %v4013, %v4018
        %v4020 = vrot.slane %v4005, 5
        %v4021 = vsel %vm3624, %v4016, %v4020
        %4022 = vrot.lane.b32.xlu0 %v4014, 80
        %v4023 = vpop.permute.xlu0 %4022
        %4024 = vrot.lane.b32.xlu0 %v4017, 80
        %v4025 = vpop.permute.xlu0 %4024
        %4026 = vrot.lane.b32.xlu0 %v4019, 80
        %v4027 = vpop.permute.xlu0 %4026
        %4028 = vrot.lane.b32.xlu0 %v4021, 80
        %v4029 = vpop.permute.xlu0 %4028
        %4030 = vrot.lane.b32.xlu0 %v4018, 80
        %v4031 = vpop.permute.xlu0 %4030
        %4032 = vrot.lane.b32.xlu0 %v4020, 80
        %v4033 = vpop.permute.xlu0 %4032
        %v4034 = vsel %vm1765, %v4023, %v4025
        %v4035 = vsel %vm1765, %v4027, %v4029
        %v4036 = vsel %vm1765, %v4031, %v4033
        %v4043 = vadd.f32 %v3976, %v4034
        %v4044 = vadd.f32 %v3977, %v4025
        %v4045 = vadd.f32 %v3978, %v4035
        %v4046 = vadd.f32 %v3979, %v4029
        %v4047 = vadd.f32 %v3980, %v4036
        %v4048 = vadd.f32 %v3981, %v4033
        %s4049 = scalar_lea.vmem [#allocation4], 82
        %v4050 = vld [vmem:[%s4049] ss:$8 sm:$0x3]
        %v4051 = vld [vmem:[#allocation2] sm:$0xc0]
        %v4052 = vld [vmem:[#allocation2 + $0x8] sm:$0xc0]
        %v4053 = vld [vmem:[#allocation2 + $0x20] sm:$0xff]
        %v4054 = vld [vmem:[#allocation2 + $0x28] sm:$0xff]
        %v4056 = vlaneseq
        %v4057 = vshrl.u32 %v4056, 7
        %v4058 = vsub.s32 0, %v4057
        %v4059 = vrot.slane %v4050, %v4058
        %v4060 = vlaneseq
        %v4061 = vshrl.u32 %v4060, 7
        %v4062 = vsub.s32 1, %v4061
        %v4063 = vrot.slane %v4050, %v4062
        %v4066 = vmul.f32 %v4051, %v4059
        %v4067 = vmul.f32 %v4052, %v4063
        %v4068 = vmul.f32 %v1410, %v4059
        %v4069 = vmul.f32 %v1411, %v4063
        %v4070 = vmul.f32 %v4053, %v4059
        %v4071 = vmul.f32 %v4054, %v4063
        %vm4078 = vcmask 1041408
        %v4079 = vrot.slane %v4066, 6
        %v4080 = vrot.slane %v4068, 6
        %v4081 = vsel %vm4078, %v4079, %v4080
        %v4082 = vrot.slane %v4067, 6
        %v4083 = vrot.slane %v4069, 6
        %v4084 = vsel %vm4078, %v4082, %v4083
        %v4085 = vrot.slane %v4070, 6
        %v4086 = vsel %vm4078, %v4080, %v4085
        %v4087 = vrot.slane %v4071, 6
        %v4088 = vsel %vm4078, %v4083, %v4087
        %v4095 = vadd.f32 %v4043, %v4081
        %v4096 = vadd.f32 %v4044, %v4084
        %v4097 = vadd.f32 %v4045, %v4086
        %v4098 = vadd.f32 %v4046, %v4088
        %v4099 = vadd.f32 %v4047, %v4085
        %v4100 = vadd.f32 %v4048, %v4087
        %s4101 = scalar_lea.vmem [#allocation4], 83
        %v4102 = vld [vmem:[%s4101] ss:$8 sm:$0x3]
        %v4104 = vlaneseq
        %v4105 = vshrl.u32 %v4104, 7
        %v4106 = vsub.s32 0, %v4105
        %v4107 = vrot.slane %v4102, %v4106
        %v4108 = vlaneseq
        %v4109 = vshrl.u32 %v4108, 7
        %v4110 = vsub.s32 1, %v4109
        %v4111 = vrot.slane %v4102, %v4110
        %4112 = vrot.lane.b32.xlu0 %v4107, 8
        %v4113 = vpop.permute.xlu0 %4112
        %4114 = vrot.lane.b32.xlu0 %v4111, 8
        %v4115 = vpop.permute.xlu0 %4114
        %v4116 = vsel %vm524, %v4113, %v4115
        %v4119 = vmul.f32 %v4051, %v4113
        %v4120 = vmul.f32 %v4052, %v4116
        %v4121 = vmul.f32 %v1410, %v4113
        %v4122 = vmul.f32 %v1411, %v4116
        %v4123 = vmul.f32 %v4053, %v4113
        %v4124 = vmul.f32 %v4054, %v4116
        %v4131 = vrot.slane %v4119, 6
        %v4132 = vrot.slane %v4121, 6
        %v4133 = vsel %vm4078, %v4131, %v4132
        %v4134 = vrot.slane %v4120, 6
        %v4135 = vrot.slane %v4122, 6
        %v4136 = vsel %vm4078, %v4134, %v4135
        %v4137 = vrot.slane %v4123, 6
        %v4138 = vsel %vm4078, %v4132, %v4137
        %v4139 = vrot.slane %v4124, 6
        %v4140 = vsel %vm4078, %v4135, %v4139
        %4141 = vrot.lane.b32.xlu0 %v4133, 120
        %v4142 = vpop.permute.xlu0 %4141
        %4143 = vrot.lane.b32.xlu0 %v4136, 120
        %v4144 = vpop.permute.xlu0 %4143
        %4145 = vrot.lane.b32.xlu0 %v4138, 120
        %v4146 = vpop.permute.xlu0 %4145
        %4147 = vrot.lane.b32.xlu0 %v4140, 120
        %v4148 = vpop.permute.xlu0 %4147
        %4149 = vrot.lane.b32.xlu0 %v4137, 120
        %v4150 = vpop.permute.xlu0 %4149
        %4151 = vrot.lane.b32.xlu0 %v4139, 120
        %v4152 = vpop.permute.xlu0 %4151
        %v4153 = vsel %vm552, %v4142, %v4144
        %v4154 = vsel %vm552, %v4146, %v4148
        %v4155 = vsel %vm552, %v4150, %v4152
        %v4162 = vadd.f32 %v4095, %v4153
        %v4163 = vadd.f32 %v4096, %v4144
        %v4164 = vadd.f32 %v4097, %v4154
        %v4165 = vadd.f32 %v4098, %v4148
        %v4166 = vadd.f32 %v4099, %v4155
        %v4167 = vadd.f32 %v4100, %v4152
        %s4168 = scalar_lea.vmem [#allocation4], 84
        %v4169 = vld [vmem:[%s4168] ss:$8 sm:$0x3]
        %v4171 = vlaneseq
        %v4172 = vshrl.u32 %v4171, 7
        %v4173 = vsub.s32 0, %v4172
        %v4174 = vrot.slane %v4169, %v4173
        %v4175 = vlaneseq
        %v4176 = vshrl.u32 %v4175, 7
        %v4177 = vsub.s32 1, %v4176
        %v4178 = vrot.slane %v4169, %v4177
        %4179 = vrot.lane.b32.xlu0 %v4174, 16
        %v4180 = vpop.permute.xlu0 %4179
        %4181 = vrot.lane.b32.xlu0 %v4178, 16
        %v4182 = vpop.permute.xlu0 %4181
        %v4183 = vsel %vm583, %v4180, %v4182
        %v4186 = vmul.f32 %v4051, %v4180
        %v4187 = vmul.f32 %v4052, %v4183
        %v4188 = vmul.f32 %v1410, %v4180
        %v4189 = vmul.f32 %v1411, %v4183
        %v4190 = vmul.f32 %v4053, %v4180
        %v4191 = vmul.f32 %v4054, %v4183
        %v4198 = vrot.slane %v4186, 6
        %v4199 = vrot.slane %v4188, 6
        %v4200 = vsel %vm4078, %v4198, %v4199
        %v4201 = vrot.slane %v4187, 6
        %v4202 = vrot.slane %v4189, 6
        %v4203 = vsel %vm4078, %v4201, %v4202
        %v4204 = vrot.slane %v4190, 6
        %v4205 = vsel %vm4078, %v4199, %v4204
        %v4206 = vrot.slane %v4191, 6
        %v4207 = vsel %vm4078, %v4202, %v4206
        %4208 = vrot.lane.b32.xlu0 %v4200, 112
        %v4209 = vpop.permute.xlu0 %4208
        %4210 = vrot.lane.b32.xlu0 %v4203, 112
        %v4211 = vpop.permute.xlu0 %4210
        %4212 = vrot.lane.b32.xlu0 %v4205, 112
        %v4213 = vpop.permute.xlu0 %4212
        %4214 = vrot.lane.b32.xlu0 %v4207, 112
        %v4215 = vpop.permute.xlu0 %4214
        %4216 = vrot.lane.b32.xlu0 %v4204, 112
        %v4217 = vpop.permute.xlu0 %4216
        %4218 = vrot.lane.b32.xlu0 %v4206, 112
        %v4219 = vpop.permute.xlu0 %4218
        %v4220 = vsel %vm611, %v4209, %v4211
        %v4221 = vsel %vm611, %v4213, %v4215
        %v4222 = vsel %vm611, %v4217, %v4219
        %v4229 = vadd.f32 %v4162, %v4220
        %v4230 = vadd.f32 %v4163, %v4211
        %v4231 = vadd.f32 %v4164, %v4221
        %v4232 = vadd.f32 %v4165, %v4215
        %v4233 = vadd.f32 %v4166, %v4222
        %v4234 = vadd.f32 %v4167, %v4219
        %s4235 = scalar_lea.vmem [#allocation4], 85
        %v4236 = vld [vmem:[%s4235] ss:$8 sm:$0x3]
        %v4238 = vlaneseq
        %v4239 = vshrl.u32 %v4238, 7
        %v4240 = vsub.s32 0, %v4239
        %v4241 = vrot.slane %v4236, %v4240
        %v4242 = vlaneseq
        %v4243 = vshrl.u32 %v4242, 7
        %v4244 = vsub.s32 1, %v4243
        %v4245 = vrot.slane %v4236, %v4244
        %4246 = vrot.lane.b32.xlu0 %v4241, 24
        %v4247 = vpop.permute.xlu0 %4246
        %4248 = vrot.lane.b32.xlu0 %v4245, 24
        %v4249 = vpop.permute.xlu0 %4248
        %v4250 = vsel %vm1560, %v4247, %v4249
        %v4253 = vmul.f32 %v4051, %v4247
        %v4254 = vmul.f32 %v4052, %v4250
        %v4255 = vmul.f32 %v1410, %v4247
        %v4256 = vmul.f32 %v1411, %v4250
        %v4257 = vmul.f32 %v4053, %v4247
        %v4258 = vmul.f32 %v4054, %v4250
        %v4265 = vrot.slane %v4253, 6
        %v4266 = vrot.slane %v4255, 6
        %v4267 = vsel %vm4078, %v4265, %v4266
        %v4268 = vrot.slane %v4254, 6
        %v4269 = vrot.slane %v4256, 6
        %v4270 = vsel %vm4078, %v4268, %v4269
        %v4271 = vrot.slane %v4257, 6
        %v4272 = vsel %vm4078, %v4266, %v4271
        %v4273 = vrot.slane %v4258, 6
        %v4274 = vsel %vm4078, %v4269, %v4273
        %4275 = vrot.lane.b32.xlu0 %v4267, 104
        %v4276 = vpop.permute.xlu0 %4275
        %4277 = vrot.lane.b32.xlu0 %v4270, 104
        %v4278 = vpop.permute.xlu0 %4277
        %4279 = vrot.lane.b32.xlu0 %v4272, 104
        %v4280 = vpop.permute.xlu0 %4279
        %4281 = vrot.lane.b32.xlu0 %v4274, 104
        %v4282 = vpop.permute.xlu0 %4281
        %4283 = vrot.lane.b32.xlu0 %v4271, 104
        %v4284 = vpop.permute.xlu0 %4283
        %4285 = vrot.lane.b32.xlu0 %v4273, 104
        %v4286 = vpop.permute.xlu0 %4285
        %v4287 = vsel %vm1588, %v4276, %v4278
        %v4288 = vsel %vm1588, %v4280, %v4282
        %v4289 = vsel %vm1588, %v4284, %v4286
        %v4296 = vadd.f32 %v4229, %v4287
        %v4297 = vadd.f32 %v4230, %v4278
        %v4298 = vadd.f32 %v4231, %v4288
        %v4299 = vadd.f32 %v4232, %v4282
        %v4300 = vadd.f32 %v4233, %v4289
        %v4301 = vadd.f32 %v4234, %v4286
        %s4302 = scalar_lea.vmem [#allocation4], 86
        %v4303 = vld [vmem:[%s4302] ss:$8 sm:$0x3]
        %v4305 = vlaneseq
        %v4306 = vshrl.u32 %v4305, 7
        %v4307 = vsub.s32 0, %v4306
        %v4308 = vrot.slane %v4303, %v4307
        %v4309 = vlaneseq
        %v4310 = vshrl.u32 %v4309, 7
        %v4311 = vsub.s32 1, %v4310
        %v4312 = vrot.slane %v4303, %v4311
        %4313 = vrot.lane.b32.xlu0 %v4308, 32
        %v4314 = vpop.permute.xlu0 %4313
        %4315 = vrot.lane.b32.xlu0 %v4312, 32
        %v4316 = vpop.permute.xlu0 %4315
        %v4317 = vsel %vm1619, %v4314, %v4316
        %v4320 = vmul.f32 %v4051, %v4314
        %v4321 = vmul.f32 %v4052, %v4317
        %v4322 = vmul.f32 %v1410, %v4314
        %v4323 = vmul.f32 %v1411, %v4317
        %v4324 = vmul.f32 %v4053, %v4314
        %v4325 = vmul.f32 %v4054, %v4317
        %v4332 = vrot.slane %v4320, 6
        %v4333 = vrot.slane %v4322, 6
        %v4334 = vsel %vm4078, %v4332, %v4333
        %v4335 = vrot.slane %v4321, 6
        %v4336 = vrot.slane %v4323, 6
        %v4337 = vsel %vm4078, %v4335, %v4336
        %v4338 = vrot.slane %v4324, 6
        %v4339 = vsel %vm4078, %v4333, %v4338
        %v4340 = vrot.slane %v4325, 6
        %v4341 = vsel %vm4078, %v4336, %v4340
        %4342 = vrot.lane.b32.xlu0 %v4334, 96
        %v4343 = vpop.permute.xlu0 %4342
        %4344 = vrot.lane.b32.xlu0 %v4337, 96
        %v4345 = vpop.permute.xlu0 %4344
        %4346 = vrot.lane.b32.xlu0 %v4339, 96
        %v4347 = vpop.permute.xlu0 %4346
        %4348 = vrot.lane.b32.xlu0 %v4341, 96
        %v4349 = vpop.permute.xlu0 %4348
        %4350 = vrot.lane.b32.xlu0 %v4338, 96
        %v4351 = vpop.permute.xlu0 %4350
        %4352 = vrot.lane.b32.xlu0 %v4340, 96
        %v4353 = vpop.permute.xlu0 %4352
        %v4354 = vsel %vm1647, %v4343, %v4345
        %v4355 = vsel %vm1647, %v4347, %v4349
        %v4356 = vsel %vm1647, %v4351, %v4353
        %v4363 = vadd.f32 %v4296, %v4354
        %v4364 = vadd.f32 %v4297, %v4345
        %v4365 = vadd.f32 %v4298, %v4355
        %v4366 = vadd.f32 %v4299, %v4349
        %v4367 = vadd.f32 %v4300, %v4356
        %v4368 = vadd.f32 %v4301, %v4353
        %s4369 = scalar_lea.vmem [#allocation4], 87
        %v4370 = vld [vmem:[%s4369] ss:$8 sm:$0x3]
        %v4372 = vlaneseq
        %v4373 = vshrl.u32 %v4372, 7
        %v4374 = vsub.s32 0, %v4373
        %v4375 = vrot.slane %v4370, %v4374
        %v4376 = vlaneseq
        %v4377 = vshrl.u32 %v4376, 7
        %v4378 = vsub.s32 1, %v4377
        %v4379 = vrot.slane %v4370, %v4378
        %4380 = vrot.lane.b32.xlu0 %v4375, 40
        %v4381 = vpop.permute.xlu0 %4380
        %4382 = vrot.lane.b32.xlu0 %v4379, 40
        %v4383 = vpop.permute.xlu0 %4382
        %v4384 = vsel %vm1678, %v4381, %v4383
        %v4387 = vmul.f32 %v4051, %v4381
        %v4388 = vmul.f32 %v4052, %v4384
        %v4389 = vmul.f32 %v1410, %v4381
        %v4390 = vmul.f32 %v1411, %v4384
        %v4391 = vmul.f32 %v4053, %v4381
        %v4392 = vmul.f32 %v4054, %v4384
        %v4399 = vrot.slane %v4387, 6
        %v4400 = vrot.slane %v4389, 6
        %v4401 = vsel %vm4078, %v4399, %v4400
        %v4402 = vrot.slane %v4388, 6
        %v4403 = vrot.slane %v4390, 6
        %v4404 = vsel %vm4078, %v4402, %v4403
        %v4405 = vrot.slane %v4391, 6
        %v4406 = vsel %vm4078, %v4400, %v4405
        %v4407 = vrot.slane %v4392, 6
        %v4408 = vsel %vm4078, %v4403, %v4407
        %4409 = vrot.lane.b32.xlu0 %v4401, 88
        %v4410 = vpop.permute.xlu0 %4409
        %4411 = vrot.lane.b32.xlu0 %v4404, 88
        %v4412 = vpop.permute.xlu0 %4411
        %4413 = vrot.lane.b32.xlu0 %v4406, 88
        %v4414 = vpop.permute.xlu0 %4413
        %4415 = vrot.lane.b32.xlu0 %v4408, 88
        %v4416 = vpop.permute.xlu0 %4415
        %4417 = vrot.lane.b32.xlu0 %v4405, 88
        %v4418 = vpop.permute.xlu0 %4417
        %4419 = vrot.lane.b32.xlu0 %v4407, 88
        %v4420 = vpop.permute.xlu0 %4419
        %v4421 = vsel %vm1706, %v4410, %v4412
        %v4422 = vsel %vm1706, %v4414, %v4416
        %v4423 = vsel %vm1706, %v4418, %v4420
        %v4430 = vadd.f32 %v4363, %v4421
        %v4431 = vadd.f32 %v4364, %v4412
        %v4432 = vadd.f32 %v4365, %v4422
        %v4433 = vadd.f32 %v4366, %v4416
        %v4434 = vadd.f32 %v4367, %v4423
        %v4435 = vadd.f32 %v4368, %v4420
        %s4436 = scalar_lea.vmem [#allocation4], 96
        %v4437 = vld [vmem:[%s4436] ss:$8 sm:$0x3]
        %v4439 = vlaneseq
        %v4440 = vshrl.u32 %v4439, 7
        %v4441 = vsub.s32 0, %v4440
        %v4442 = vrot.slane %v4437, %v4441
        %v4443 = vlaneseq
        %v4444 = vshrl.u32 %v4443, 7
        %v4445 = vsub.s32 1, %v4444
        %v4446 = vrot.slane %v4437, %v4445
        %4447 = vrot.lane.b32.xlu0 %v4442, 48
        %v4448 = vpop.permute.xlu0 %4447
        %4449 = vrot.lane.b32.xlu0 %v4446, 48
        %v4450 = vpop.permute.xlu0 %4449
        %v4451 = vsel %vm1737, %v4448, %v4450
        %v4454 = vmul.f32 %v4051, %v4448
        %v4455 = vmul.f32 %v4052, %v4451
        %v4456 = vmul.f32 %v1410, %v4448
        %v4457 = vmul.f32 %v1411, %v4451
        %v4458 = vmul.f32 %v4053, %v4448
        %v4459 = vmul.f32 %v4054, %v4451
        %v4466 = vrot.slane %v4454, 6
        %v4467 = vrot.slane %v4456, 6
        %v4468 = vsel %vm4078, %v4466, %v4467
        %v4469 = vrot.slane %v4455, 6
        %v4470 = vrot.slane %v4457, 6
        %v4471 = vsel %vm4078, %v4469, %v4470
        %v4472 = vrot.slane %v4458, 6
        %v4473 = vsel %vm4078, %v4467, %v4472
        %v4474 = vrot.slane %v4459, 6
        %v4475 = vsel %vm4078, %v4470, %v4474
        %4476 = vrot.lane.b32.xlu0 %v4468, 80
        %v4477 = vpop.permute.xlu0 %4476
        %4478 = vrot.lane.b32.xlu0 %v4471, 80
        %v4479 = vpop.permute.xlu0 %4478
        %4480 = vrot.lane.b32.xlu0 %v4473, 80
        %v4481 = vpop.permute.xlu0 %4480
        %4482 = vrot.lane.b32.xlu0 %v4475, 80
        %v4483 = vpop.permute.xlu0 %4482
        %4484 = vrot.lane.b32.xlu0 %v4472, 80
        %v4485 = vpop.permute.xlu0 %4484
        %4486 = vrot.lane.b32.xlu0 %v4474, 80
        %v4487 = vpop.permute.xlu0 %4486
        %v4488 = vsel %vm1765, %v4477, %v4479
        %v4489 = vsel %vm1765, %v4481, %v4483
        %v4490 = vsel %vm1765, %v4485, %v4487
        %v4497 = vadd.f32 %v4430, %v4488
        %v4498 = vadd.f32 %v4431, %v4479
        %v4499 = vadd.f32 %v4432, %v4489
        %v4500 = vadd.f32 %v4433, %v4483
        %v4501 = vadd.f32 %v4434, %v4490
        %v4502 = vadd.f32 %v4435, %v4487
        %v4503 = vld [vmem:[%s6] sm:$0x3]
        %v4505 = vlaneseq
        %v4506 = vshrl.u32 %v4505, 7
        %v4507 = vsub.s32 0, %v4506
        %v4508 = vrot.slane %v4503, %v4507
        %v4509 = vlaneseq
        %v4510 = vshrl.u32 %v4509, 7
        %v4511 = vsub.s32 1, %v4510
        %v4512 = vrot.slane %v4503, %v4511
        %v4515 = vadd.f32 %v4497, %v4508
        %v4516 = vadd.f32 %v4498, %v4512
        %v4517 = vadd.f32 %v4499, %v4508
        %v4518 = vadd.f32 %v4500, %v4512
        %v4519 = vadd.f32 %v4501, %v4508
        %v4520 = vadd.f32 %v4502, %v4512
        %v4521 = vsub.f32 0.0, %v4515
        %v4522 = vsub.f32 0.0, %v4516
        %v4523 = vsub.f32 0.0, %v4517
        %v4524 = vsub.f32 0.0, %v4518
        %v4525 = vsub.f32 0.0, %v4519
        %v4526 = vsub.f32 0.0, %v4520
        %v4527 = vmul.f32 %v4521, 1.442695
        %v4528 = vpow.pop %v4527
        %v4529 = vmul.f32 %v4522, 1.442695
        %v4530 = vpow.pop %v4529
        %v4531 = vmul.f32 %v4523, 1.442695
        %v4532 = vpow.pop %v4531
        %v4533 = vmul.f32 %v4524, 1.442695
        %v4534 = vpow.pop %v4533
        %v4535 = vmul.f32 %v4525, 1.442695
        %v4536 = vpow.pop %v4535
        %v4537 = vmul.f32 %v4526, 1.442695
        %v4538 = vpow.pop %v4537
        %v4539 = vadd.f32 %v4528, 1.0
        %v4540 = vadd.f32 %v4530, 1.0
        %v4541 = vadd.f32 %v4532, 1.0
        %v4542 = vadd.f32 %v4534, 1.0
        %v4543 = vadd.f32 %v4536, 1.0
        %v4544 = vadd.f32 %v4538, 1.0
        %v4545 = vrcp.pop %v4539
        %v4546 = vrcp.pop %v4540
        %v4547 = vrcp.pop %v4541
        %v4548 = vrcp.pop %v4542
        %v4549 = vrcp.pop %v4543
        %v4550 = vrcp.pop %v4544
        %v4551 = vmul.f32 %v4515, %v4545
        %v4552 = vmul.f32 %v4516, %v4546
        %v4553 = vmul.f32 %v4517, %v4547
        %v4554 = vmul.f32 %v4518, %v4548
        %v4555 = vmul.f32 %v4519, %v4549
        %v4556 = vmul.f32 %v4520, %v4550
        %v4557 = vpack.c.bf16 %v4553, %v4551
        %v4558 = vpack.c.bf16 %v4554, %v4552
        %v4559 = vpack.c.bf16 %v4555, %v4555
        %v4560 = vpack.c.bf16 %v4556, %v4556
        %v4561 = vld [vmem:[#allocation7] sm:$0xff]
        %v4562 = vld [vmem:[#allocation7 + $0x8] sm:$0xff]
        %v4563 = vld [vmem:[#allocation7 + $0x10] sm:$0xff]
        %v4564 = vld [vmem:[#allocation7 + $0x18] sm:$0xff]
        %v4565 = vld [vmem:[#allocation7 + $0x20] sm:$0xff]
        %v4566 = vld [vmem:[#allocation7 + $0x28] sm:$0xff]
        %v4567 = vld [vmem:[#allocation7 + $0x30] sm:$0xff]
        %v4568 = vld [vmem:[#allocation7 + $0x38] sm:$0xff]
        %v4569 = vld [vmem:[#allocation7 + $0x40] sm:$0xff]
        %v4570 = vld [vmem:[#allocation7 + $0x48] sm:$0xff]
        %v4571 = vld [vmem:[#allocation7 + $0x50] sm:$0xff]
        %v4572 = vld [vmem:[#allocation7 + $0x58] sm:$0xff]
        %v4573 = vld [vmem:[#allocation7 + $0x60] sm:$0xff]
        %v4574 = vld [vmem:[#allocation7 + $0x68] sm:$0xff]
        %v4575 = vld [vmem:[#allocation7 + $0x70] sm:$0xff]
        %v4576 = vld [vmem:[#allocation7 + $0x78] sm:$0xff]
        %v4577 = vld [vmem:[#allocation7 + $0x80] sm:$0xff]
        %v4578 = vld [vmem:[#allocation7 + $0x88] sm:$0xff]
        %v4579 = vld [vmem:[%s8] sm:$0x3]
        %v4581 = vlaneseq
        %v4582 = vshrl.u32 %v4581, 7
        %v4583 = vsub.s32 0, %v4582
        %v4584 = vrot.slane %v4579, %v4583
        %v4585 = vlaneseq
        %v4586 = vshrl.u32 %v4585, 7
        %v4587 = vsub.s32 1, %v4586
        %v4588 = vrot.slane %v4579, %v4587
        %v4609 = vunpack.c.l.b16 %v4561
        %v4610 = vunpack.c.h.b16 %v4561
        %v4611 = vunpack.c.l.b16 %v4562
        %v4612 = vunpack.c.h.b16 %v4562
        %v4613 = vunpack.c.l.b16 %v4563
        %v4614 = vunpack.c.h.b16 %v4563
        %v4615 = vunpack.c.l.b16 %v4564
        %v4616 = vunpack.c.h.b16 %v4564
        %v4617 = vunpack.c.l.b16 %v4565
        %v4618 = vunpack.c.h.b16 %v4565
        %v4619 = vunpack.c.l.b16 %v4566
        %v4620 = vunpack.c.h.b16 %v4566
        %v4621 = vunpack.c.l.b16 %v4567
        %v4622 = vunpack.c.h.b16 %v4567
        %v4623 = vunpack.c.l.b16 %v4568
        %v4624 = vunpack.c.h.b16 %v4568
        %v4625 = vunpack.c.l.b16 %v4569
        %v4626 = vunpack.c.h.b16 %v4569
        %v4627 = vunpack.c.l.b16 %v4570
        %v4628 = vunpack.c.h.b16 %v4570
        %v4629 = vunpack.c.l.b16 %v4571
        %v4630 = vunpack.c.h.b16 %v4571
        %v4631 = vunpack.c.l.b16 %v4572
        %v4632 = vunpack.c.h.b16 %v4572
        %v4633 = vunpack.c.l.b16 %v4573
        %v4634 = vunpack.c.h.b16 %v4573
        %v4635 = vunpack.c.l.b16 %v4574
        %v4636 = vunpack.c.h.b16 %v4574
        %v4637 = vunpack.c.l.b16 %v4575
        %v4638 = vunpack.c.h.b16 %v4575
        %v4639 = vunpack.c.l.b16 %v4576
        %v4640 = vunpack.c.h.b16 %v4576
        %v4641 = vunpack.c.l.b16 %v4577
        %v4642 = vunpack.c.h.b16 %v4577
        %v4643 = vunpack.c.l.b16 %v4578
        %v4644 = vunpack.c.h.b16 %v4578
        %v4645 = vpack.c.b16 %v4611, %v4609
        %v4646 = vpack.c.b16 %v4612, %v4610
        %v4647 = vpack.c.b16 %v4615, %v4613
        %v4648 = vpack.c.b16 %v4616, %v4614
        %v4649 = vpack.c.b16 %v4619, %v4617
        %v4650 = vpack.c.b16 %v4620, %v4618
        %v4651 = vpack.c.b16 %v4623, %v4621
        %v4652 = vpack.c.b16 %v4624, %v4622
        %v4653 = vpack.c.b16 %v4627, %v4625
        %v4654 = vpack.c.b16 %v4628, %v4626
        %v4655 = vpack.c.b16 %v4631, %v4629
        %v4656 = vpack.c.b16 %v4632, %v4630
        %v4657 = vpack.c.b16 %v4635, %v4633
        %v4658 = vpack.c.b16 %v4636, %v4634
        %v4659 = vpack.c.b16 %v4639, %v4637
        %v4660 = vpack.c.b16 %v4640, %v4638
        %v4661 = vpack.c.b16 %v4643, %v4641
        %v4662 = vpack.c.b16 %v4644, %v4642
        %v4682 = vsel %vm583, %v4558, 0
        %v4685 = vsel %vm583, %v4560, 0
        %4687 = vmatprep.subr.bf16.mxu0 %v4646
        %4688 = vmatpush1.bf16.msra.mxu0 %v4645
        %4689 = vmatprep.subr.bf16.mxu0 %v4648
        %4690 = vmatpush1.bf16.msra.mxu0 %v4647
        %4691 = vmatprep.subr.bf16.mxu0 %v4650
        %4692 = vmatpush1.bf16.msra.mxu0 %v4649
        %4693 = vmatprep.subr.bf16.mxu0 %v4652
        %4694 = vmatpush1.bf16.msra.mxu0 %v4651
        %4695 = vmatprep.subr.bf16.mxu0 %v4654
        %4696 = vmatpush1.bf16.msra.mxu0 %v4653
        %4697 = vmatprep.subr.bf16.mxu0 %v4656
        %4698 = vmatpush1.bf16.msra.mxu0 %v4655
        %4699 = vmatprep.subr.bf16.mxu0 %v4658
        %4700 = vmatpush1.bf16.msra.mxu0 %v4657
        %4701 = vmatprep.subr.bf16.mxu0 %v4660
        %4702 = vmatpush1.bf16.msra.mxu0 %v4659
        %4703 = vmatprep.subr.bf16.mxu0 %v4662
        %4704 = vmatpush1.bf16.msra.mxu0 %v4661
        %4705 = vmatprep.subr.bf16.mxu0 0
        %4706 = vmatpush1.bf16.msra.mxu0 0
        %4707 = vmatprep.subr.bf16.mxu0 0
        %4708 = vmatpush1.bf16.msra.mxu0 0
        %4709 = vmatprep.subr.bf16.mxu0 0
        %4710 = vmatpush1.bf16.msra.mxu0 0
        %4711 = vmatprep.subr.bf16.mxu0 0
        %4712 = vmatpush1.bf16.msra.mxu0 0
        %4713 = vmatprep.subr.bf16.mxu0 0
        %4714 = vmatpush1.bf16.msra.mxu0 0
        %4715 = vmatprep.subr.bf16.mxu0 0
        %4716 = vmatpush1.bf16.msra.mxu0 0
        %4717 = vmatprep.subr.bf16.mxu0 0
        %4718 = vmatpush1.bf16.msra.mxu0 0
        %4719 = vmatprep.mubr.bf16.mxu0 %v4682
        %4720 = vmatmul.mubr.bf16.gmra.mrb[0].mxu0 %v4557
        %v4721 = vpop.f32.mrb[0].mxu0
        %v4722 = vadd.f32 %v4584, %v4721
        %v4723 = vpop.f32.mrb[0].mxu0
        %v4724 = vadd.f32 %v4588, %v4723
        %v4725 = vpop.f32.mrb[0].mxu0
        %v4726 = vadd.f32 %v4584, %v4725
        %v4727 = vpop.f32.mrb[0].mxu0
        %v4728 = vadd.f32 %v4588, %v4727
        %4729 = vmatprep.mubr.bf16.mxu0 %v4685
        %4730 = vmatmul.mubr.bf16.gmra.mrb[0].mxu0 %v4559
        %v4731 = vpop.f32.mrb[0].mxu0
        %v4732 = vadd.f32 %v4584, %v4731
        %v4733 = vpop.f32.mrb[0].mxu0
        %v4734 = vadd.f32 %v4588, %v4733
        %v4735 = vpop.f32.mrb[0].mxu0
        %v4736 = vpop.f32.mrb[0].mxu0
        %4737 = vdwg.mxu0
        %v4738 = vadd.s32 %v1320, 4294967295
        %v4739 = vadd.s32 %v1321, 4294967295
        %v4740 = vadd.s32 %v1322, 4294967295
        %vm4741 = vcmp.ge.s32.totalorder %v4738, 0
        %vm4742 = vcmp.ge.s32.totalorder %v4739, 0
        %vm4743 = vcmp.ge.s32.totalorder %v4740, 0
        %vm4744 = vcmp.lt.s32.totalorder %v4738, 16
        %vm4745 = vcmp.lt.s32.totalorder %v4739, 16
        %vm4746 = vcmp.lt.s32.totalorder %v4740, 16
        %vm4747 = vmand %vm4741, %vm4744
        %vm4748 = vmand %vm4742, %vm4745
        %vm4749 = vmand %vm4743, %vm4746
        %v4750 = vsel %vm4747, 1, 0
        %v4751 = vsel %vm4748, 1, 0
        %v4752 = vsel %vm4749, 1, 0
        %v4753 = vcvt.s32.f32 %v4750
        %v4754 = vcvt.s32.f32 %v4751
        %v4755 = vcvt.s32.f32 %v4752
        %v4756 = vsub.f32 0.0, %v4722
        %v4757 = vsub.f32 0.0, %v4724
        %v4758 = vsub.f32 0.0, %v4726
        %v4759 = vsub.f32 0.0, %v4728
        %v4760 = vsub.f32 0.0, %v4732
        %v4761 = vsub.f32 0.0, %v4734
        %v4762 = vmul.f32 %v4756, 1.442695
        %v4763 = vpow.pop %v4762
        %v4764 = vmul.f32 %v4757, 1.442695
        %v4765 = vpow.pop %v4764
        %v4766 = vmul.f32 %v4758, 1.442695
        %v4767 = vpow.pop %v4766
        %v4768 = vmul.f32 %v4759, 1.442695
        %v4769 = vpow.pop %v4768
        %v4770 = vmul.f32 %v4760, 1.442695
        %v4771 = vpow.pop %v4770
        %v4772 = vmul.f32 %v4761, 1.442695
        %v4773 = vpow.pop %v4772
        %v4774 = vadd.f32 %v4763, 1.0
        %v4775 = vadd.f32 %v4765, 1.0
        %v4776 = vadd.f32 %v4767, 1.0
        %v4777 = vadd.f32 %v4769, 1.0
        %v4778 = vadd.f32 %v4771, 1.0
        %v4779 = vadd.f32 %v4773, 1.0
        %v4780 = vrcp.pop %v4774
        %v4781 = vrcp.pop %v4775
        %v4782 = vrcp.pop %v4776
        %v4783 = vrcp.pop %v4777
        %v4784 = vrcp.pop %v4778
        %v4785 = vrcp.pop %v4779
        %v4786 = vmul.f32 %v4722, %v4780
        %v4787 = vmul.f32 %v4724, %v4781
        %v4788 = vmul.f32 %v4726, %v4782
        %v4789 = vmul.f32 %v4728, %v4783
        %v4790 = vmul.f32 %v4732, %v4784
        %v4791 = vmul.f32 %v4734, %v4785
        %v4792 = vld [vmem:[%s12] sm:$0x3]
        %v4794 = vlaneseq
        %v4795 = vshrl.u32 %v4794, 7
        %v4796 = vsub.s32 0, %v4795
        %v4797 = vrot.slane %v4792, %v4796
        %v4798 = vlaneseq
        %v4799 = vshrl.u32 %v4798, 7
        %v4800 = vsub.s32 1, %v4799
        %v4801 = vrot.slane %v4792, %v4800
        %v4804 = vmul.f32 %v4753, %v4797
        %v4805 = vmul.f32 %v4753, %v4801
        %v4806 = vmul.f32 %v4754, %v4797
        %v4807 = vmul.f32 %v4754, %v4801
        %v4808 = vmul.f32 %v4755, %v4797
        %v4809 = vmul.f32 %v4755, %v4801
        %v4810 = vmul.f32 %v4786, %v4804
        %v4811 = vmul.f32 %v4787, %v4805
        %v4812 = vmul.f32 %v4788, %v4806
        %v4813 = vmul.f32 %v4789, %v4807
        %v4814 = vmul.f32 %v4790, %v4808
        %v4815 = vmul.f32 %v4791, %v4809
        %4816 = vst [vmem:[#allocation3] sm:$0xff] %v4810
        %4817 = vst.msk [vmem:[#allocation3 + $0x8] sm:$0xff] %vm583, %v4811
        %4818 = vst [vmem:[#allocation3 + $0x10] sm:$0xff] %v4812
        %4819 = vst.msk [vmem:[#allocation3 + $0x18] sm:$0xff] %vm583, %v4813
        %4820 = vst [vmem:[#allocation3 + $0x20] sm:$0x3] %v4814
        %vm4821 = vcmask 123904
        %4822 = vst.msk [vmem:[#allocation3 + $0x28] sm:$0x3] %vm4821, %v4815
        %v4823 = vld [vmem:[%s9] sm:$0x1]
        %v4824 = vld [vmem:[#allocation3] sm:$0xff]
        %v4825 = vld [vmem:[#allocation3 + $0x10] sm:$0xff]
        %v4826 = vlaneseq
        %v4827 = vshrl.u32 %v4826, 7
        %v4828 = vsub.s32 0, %v4827
        %v4829 = vrot.slane %v4823, %v4828
        %v4830 = vmul.f32 %v4824, %v4829
        %v4831 = vmul.f32 %v4825, %v4829
        %v4832 = vld [vmem:[%s9 + $0x1] sm:$0x1]
        %v4833 = vld [vmem:[#allocation3 + $0x8] sm:$0xff]
        %v4834 = vld [vmem:[#allocation3 + $0x18] sm:$0xff]
        %v4835 = vlaneseq
        %v4836 = vshrl.u32 %v4835, 7
        %v4837 = vsub.s32 0, %v4836
        %v4838 = vrot.slane %v4832, %v4837
        %4840 = vrot.lane.b32.xlu0 %v4838, 8
        %v4841 = vpop.permute.xlu0 %4840
        %v4843 = vmul.f32 %v4824, %v4841
        %v4844 = vmul.f32 %v4833, %v4841
        %v4845 = vmul.f32 %v4825, %v4841
        %v4846 = vmul.f32 %v4834, %v4841
        %4851 = vrot.lane.b32.xlu0 %v4843, 120
        %v4852 = vpop.permute.xlu0 %4851
        %4853 = vrot.lane.b32.xlu0 %v4844, 120
        %v4854 = vpop.permute.xlu0 %4853
        %4855 = vrot.lane.b32.xlu0 %v4845, 120
        %v4856 = vpop.permute.xlu0 %4855
        %4857 = vrot.lane.b32.xlu0 %v4846, 120
        %v4858 = vpop.permute.xlu0 %4857
        %v4859 = vsel %vm552, %v4852, %v4854
        %v4860 = vsel %vm552, %v4856, %v4858
        %v4863 = vadd.f32 %v4830, %v4859
        %v4864 = vadd.f32 %v4831, %v4860
        %v4865 = vld [vmem:[%s9 + $0x2] sm:$0x1]
        %v4866 = vlaneseq
        %v4867 = vshrl.u32 %v4866, 7
        %v4868 = vsub.s32 0, %v4867
        %v4869 = vrot.slane %v4865, %v4868
        %4871 = vrot.lane.b32.xlu0 %v4869, 16
        %v4872 = vpop.permute.xlu0 %4871
        %v4874 = vmul.f32 %v4824, %v4872
        %v4875 = vmul.f32 %v4833, %v4872
        %v4876 = vmul.f32 %v4825, %v4872
        %v4877 = vmul.f32 %v4834, %v4872
        %4882 = vrot.lane.b32.xlu0 %v4874, 112
        %v4883 = vpop.permute.xlu0 %4882
        %4884 = vrot.lane.b32.xlu0 %v4875, 112
        %v4885 = vpop.permute.xlu0 %4884
        %4886 = vrot.lane.b32.xlu0 %v4876, 112
        %v4887 = vpop.permute.xlu0 %4886
        %4888 = vrot.lane.b32.xlu0 %v4877, 112
        %v4889 = vpop.permute.xlu0 %4888
        %v4890 = vsel %vm611, %v4883, %v4885
        %v4891 = vsel %vm611, %v4887, %v4889
        %v4894 = vadd.f32 %v4863, %v4890
        %v4895 = vadd.f32 %v4864, %v4891
        %v4896 = vld [vmem:[%s9 + $0x3] sm:$0x1]
        %v4897 = vld [vmem:[#allocation3] sm:$0xfe]
        %v4898 = vld [vmem:[#allocation3 + $0x20] sm:$0x1]
        %v4899 = vlaneseq
        %v4900 = vshrl.u32 %v4899, 7
        %v4901 = vsub.s32 0, %v4900
        %v4902 = vrot.slane %v4896, %v4901
        %v4903 = vmul.f32 %v4897, %v4902
        %v4904 = vmul.f32 %v4825, %v4902
        %v4905 = vmul.f32 %v4898, %v4902
        %v4909 = vrot.slane %v4903, 1
        %v4910 = vrot.slane %v4904, 1
        %v4911 = vsel %vm660, %v4909, %v4910
        %v4912 = vrot.slane %v4905, 1
        %v4913 = vsel %vm660, %v4910, %v4912
        %v4916 = vadd.f32 %v4894, %v4911
        %v4917 = vadd.f32 %v4895, %v4913
        %v4918 = vld [vmem:[%s9 + $0x4] sm:$0x1]
        %v4919 = vld [vmem:[#allocation3 + $0x8] sm:$0xfe]
        %v4920 = vld [vmem:[#allocation3 + $0x28] sm:$0x1]
        %v4921 = vlaneseq
        %v4922 = vshrl.u32 %v4921, 7
        %v4923 = vsub.s32 0, %v4922
        %v4924 = vrot.slane %v4918, %v4923
        %4926 = vrot.lane.b32.xlu0 %v4924, 8
        %v4927 = vpop.permute.xlu0 %4926
        %v4929 = vmul.f32 %v4897, %v4927
        %v4930 = vmul.f32 %v4919, %v4927
        %v4931 = vmul.f32 %v4825, %v4927
        %v4932 = vmul.f32 %v4834, %v4927
        %v4933 = vmul.f32 %v4898, %v4927
        %v4934 = vmul.f32 %v4920, %v4927
        %v4941 = vrot.slane %v4929, 1
        %v4942 = vrot.slane %v4931, 1
        %v4943 = vsel %vm660, %v4941, %v4942
        %v4944 = vrot.slane %v4930, 1
        %v4945 = vrot.slane %v4932, 1
        %v4946 = vsel %vm660, %v4944, %v4945
        %v4947 = vrot.slane %v4933, 1
        %v4948 = vsel %vm660, %v4942, %v4947
        %v4949 = vrot.slane %v4934, 1
        %v4950 = vsel %vm660, %v4945, %v4949
        %4951 = vrot.lane.b32.xlu0 %v4943, 120
        %v4952 = vpop.permute.xlu0 %4951
        %4953 = vrot.lane.b32.xlu0 %v4946, 120
        %v4954 = vpop.permute.xlu0 %4953
        %4955 = vrot.lane.b32.xlu0 %v4948, 120
        %v4956 = vpop.permute.xlu0 %4955
        %4957 = vrot.lane.b32.xlu0 %v4950, 120
        %v4958 = vpop.permute.xlu0 %4957
        %v4959 = vsel %vm552, %v4952, %v4954
        %v4960 = vsel %vm552, %v4956, %v4958
        %v4963 = vadd.f32 %v4916, %v4959
        %v4964 = vadd.f32 %v4917, %v4960
        %v4965 = vld [vmem:[%s9 + $0x5] sm:$0x1]
        %v4966 = vlaneseq
        %v4967 = vshrl.u32 %v4966, 7
        %v4968 = vsub.s32 0, %v4967
        %v4969 = vrot.slane %v4965, %v4968
        %4971 = vrot.lane.b32.xlu0 %v4969, 16
        %v4972 = vpop.permute.xlu0 %4971
        %v4974 = vmul.f32 %v4897, %v4972
        %v4975 = vmul.f32 %v4919, %v4972
        %v4976 = vmul.f32 %v4825, %v4972
        %v4977 = vmul.f32 %v4834, %v4972
        %v4978 = vmul.f32 %v4898, %v4972
        %v4979 = vmul.f32 %v4920, %v4972
        %v4986 = vrot.slane %v4974, 1
        %v4987 = vrot.slane %v4976, 1
        %v4988 = vsel %vm660, %v4986, %v4987
        %v4989 = vrot.slane %v4975, 1
        %v4990 = vrot.slane %v4977, 1
        %v4991 = vsel %vm660, %v4989, %v4990
        %v4992 = vrot.slane %v4978, 1
        %v4993 = vsel %vm660, %v4987, %v4992
        %v4994 = vrot.slane %v4979, 1
        %v4995 = vsel %vm660, %v4990, %v4994
        %4996 = vrot.lane.b32.xlu0 %v4988, 112
        %v4997 = vpop.permute.xlu0 %4996
        %4998 = vrot.lane.b32.xlu0 %v4991, 112
        %v4999 = vpop.permute.xlu0 %4998
        %5000 = vrot.lane.b32.xlu0 %v4993, 112
        %v5001 = vpop.permute.xlu0 %5000
        %5002 = vrot.lane.b32.xlu0 %v4995, 112
        %v5003 = vpop.permute.xlu0 %5002
        %v5004 = vsel %vm611, %v4997, %v4999
        %v5005 = vsel %vm611, %v5001, %v5003
        %v5008 = vadd.f32 %v4963, %v5004
        %v5009 = vadd.f32 %v4964, %v5005
        %v5010 = vld [vmem:[%s9 + $0x6] sm:$0x1]
        %v5011 = vld [vmem:[#allocation3] sm:$0xfc]
        %v5012 = vld [vmem:[#allocation3 + $0x20] sm:$0x3]
        %v5013 = vlaneseq
        %v5014 = vshrl.u32 %v5013, 7
        %v5015 = vsub.s32 0, %v5014
        %v5016 = vrot.slane %v5010, %v5015
        %v5017 = vmul.f32 %v5011, %v5016
        %v5018 = vmul.f32 %v4825, %v5016
        %v5019 = vmul.f32 %v5012, %v5016
        %v5023 = vrot.slane %v5017, 2
        %v5024 = vrot.slane %v5018, 2
        %v5025 = vsel %vm870, %v5023, %v5024
        %v5026 = vrot.slane %v5019, 2
        %v5027 = vsel %vm870, %v5024, %v5026
        %v5030 = vadd.f32 %v5008, %v5025
        %v5031 = vadd.f32 %v5009, %v5027
        %v5032 = vld [vmem:[%s9 + $0x7] sm:$0x1]
        %v5033 = vld [vmem:[#allocation3 + $0x8] sm:$0xfc]
        %v5034 = vld [vmem:[#allocation3 + $0x28] sm:$0x3]
        %v5035 = vlaneseq
        %v5036 = vshrl.u32 %v5035, 7
        %v5037 = vsub.s32 0, %v5036
        %v5038 = vrot.slane %v5032, %v5037
        %5040 = vrot.lane.b32.xlu0 %v5038, 8
        %v5041 = vpop.permute.xlu0 %5040
        %v5043 = vmul.f32 %v5011, %v5041
        %v5044 = vmul.f32 %v5033, %v5041
        %v5045 = vmul.f32 %v4825, %v5041
        %v5046 = vmul.f32 %v4834, %v5041
        %v5047 = vmul.f32 %v5012, %v5041
        %v5048 = vmul.f32 %v5034, %v5041
        %v5055 = vrot.slane %v5043, 2
        %v5056 = vrot.slane %v5045, 2
        %v5057 = vsel %vm870, %v5055, %v5056
        %v5058 = vrot.slane %v5044, 2
        %v5059 = vrot.slane %v5046, 2
        %v5060 = vsel %vm870, %v5058, %v5059
        %v5061 = vrot.slane %v5047, 2
        %v5062 = vsel %vm870, %v5056, %v5061
        %v5063 = vrot.slane %v5048, 2
        %v5064 = vsel %vm870, %v5059, %v5063
        %5065 = vrot.lane.b32.xlu0 %v5057, 120
        %v5066 = vpop.permute.xlu0 %5065
        %5067 = vrot.lane.b32.xlu0 %v5060, 120
        %v5068 = vpop.permute.xlu0 %5067
        %5069 = vrot.lane.b32.xlu0 %v5062, 120
        %v5070 = vpop.permute.xlu0 %5069
        %5071 = vrot.lane.b32.xlu0 %v5064, 120
        %v5072 = vpop.permute.xlu0 %5071
        %v5073 = vsel %vm552, %v5066, %v5068
        %v5074 = vsel %vm552, %v5070, %v5072
        %v5077 = vadd.f32 %v5030, %v5073
        %v5078 = vadd.f32 %v5031, %v5074
        %v5079 = vld [vmem:[%s9 + $0x8] sm:$0x1]
        %v5080 = vlaneseq
        %v5081 = vshrl.u32 %v5080, 7
        %v5082 = vsub.s32 0, %v5081
        %v5083 = vrot.slane %v5079, %v5082
        %5085 = vrot.lane.b32.xlu0 %v5083, 16
        %v5086 = vpop.permute.xlu0 %5085
        %v5088 = vmul.f32 %v5011, %v5086
        %v5089 = vmul.f32 %v5033, %v5086
        %v5090 = vmul.f32 %v4825, %v5086
        %v5091 = vmul.f32 %v4834, %v5086
        %v5092 = vmul.f32 %v5012, %v5086
        %v5093 = vmul.f32 %v5034, %v5086
        %v5100 = vrot.slane %v5088, 2
        %v5101 = vrot.slane %v5090, 2
        %v5102 = vsel %vm870, %v5100, %v5101
        %v5103 = vrot.slane %v5089, 2
        %v5104 = vrot.slane %v5091, 2
        %v5105 = vsel %vm870, %v5103, %v5104
        %v5106 = vrot.slane %v5092, 2
        %v5107 = vsel %vm870, %v5101, %v5106
        %v5108 = vrot.slane %v5093, 2
        %v5109 = vsel %vm870, %v5104, %v5108
        %5110 = vrot.lane.b32.xlu0 %v5102, 112
        %v5111 = vpop.permute.xlu0 %5110
        %5112 = vrot.lane.b32.xlu0 %v5105, 112
        %v5113 = vpop.permute.xlu0 %5112
        %5114 = vrot.lane.b32.xlu0 %v5107, 112
        %v5115 = vpop.permute.xlu0 %5114
        %5116 = vrot.lane.b32.xlu0 %v5109, 112
        %v5117 = vpop.permute.xlu0 %5116
        %v5118 = vsel %vm611, %v5111, %v5113
        %v5119 = vsel %vm611, %v5115, %v5117
        %v5122 = vadd.f32 %v5077, %v5118
        %v5123 = vadd.f32 %v5078, %v5119
        %v5124 = vld [vmem:[%s10] sm:$0x1]
        %v5126 = vlaneseq
        %v5127 = vshrl.u32 %v5126, 7
        %v5128 = vsub.s32 0, %v5127
        %v5129 = vrot.slane %v5124, %v5128
        %v5131 = vadd.f32 %v5122, %v5129
        %v5132 = vadd.f32 %v5123, %v5129
        %v5133 = vsub.f32 0.0, %v5131
        %v5134 = vsub.f32 0.0, %v5132
        %v5135 = vmul.f32 %v5133, 1.442695
        %v5136 = vpow.pop %v5135
        %v5137 = vmul.f32 %v5134, 1.442695
        %v5138 = vpow.pop %v5137
        %v5139 = vadd.f32 %v5136, 1.0
        %v5140 = vadd.f32 %v5138, 1.0
        %v5141 = vrcp.pop %v5139
        %v5142 = vrcp.pop %v5140
        %v5143 = vmul.f32 %v5131, %v5141
        %v5144 = vmul.f32 %v5132, %v5142
        %v5145 = vld [vmem:[%s482] sm:$0xe0]
        %v5146 = vld [vmem:[%s482 + $0x8] sm:$0xe0]
        %v5147 = vld [vmem:[%s482 + $0x10] sm:$0xff]
        %v5148 = vld [vmem:[%s482 + $0x18] sm:$0xff]
        %v5149 = vld [vmem:[%s482 + $0x20] sm:$0x1f]
        %v5150 = vld [vmem:[%s482 + $0x28] sm:$0x1f]
        %v5157 = vrot.slane %v5145, 5
        %v5158 = vrot.slane %v5147, 5
        %v5159 = vsel %vm3624, %v5157, %v5158
        %v5160 = vrot.slane %v5146, 5
        %v5161 = vrot.slane %v5148, 5
        %v5162 = vsel %vm3624, %v5160, %v5161
        %v5163 = vrot.slane %v5149, 5
        %v5164 = vsel %vm3624, %v5158, %v5163
        %v5165 = vrot.slane %v5150, 5
        %v5166 = vsel %vm3624, %v5161, %v5165
        %5167 = vrot.lane.b32.xlu0 %v5159, 88
        %v5168 = vpop.permute.xlu0 %5167
        %5169 = vrot.lane.b32.xlu0 %v5162, 88
        %v5170 = vpop.permute.xlu0 %5169
        %5171 = vrot.lane.b32.xlu0 %v5164, 88
        %v5172 = vpop.permute.xlu0 %5171
        %5173 = vrot.lane.b32.xlu0 %v5166, 88
        %v5174 = vpop.permute.xlu0 %5173
        %v5175 = vsel %vm1706, %v5168, %v5170
        %v5176 = vsel %vm1706, %v5172, %v5174
        %v5179 = vadd.f32 %v5143, %v5175
        %v5180 = vadd.f32 %v5144, %v5176
        %5181 = vst [vmem:[%s477] sm:$0xff] %v5179
        %5182 = vst [vmem:[%s477 + $0x8] sm:$0xff] %v5180
        %s5183 = sand.u32 %s329, 1
        %s5184 = scalar_lea.sflag [#allocation6], %s5183
        %s5185 = sand.u32 %s329, 1
        %s5186 = smul.addr %s5185, 16
        %s5187 = scalar_lea.vmem [#allocation9], %s5186
        // Predicated region
        $region81: #{tpu_custom_call.1} parent=71 // pred_check
          %p5188 = pneg %p339
        $region82: #{tpu_custom_call.1} parent=71 // pred_check_branch
          %5190 = sbr.rel (%p5188) target = $region84
        $region83: #{tpu_custom_call.1} parent=71 // pred_region
          %s5191 = smul.u32 2, %s34
          %s5193 = ssub.s32 256, 256
          %5194 = vsyncadd %s5184, %s5193
          %s5195 = smul.addr %s33, 2
          %s5196 = sadd.s32 %s5191, %s5195
          %s5197 = smul.addr %s5196, 128
          %s5198 = scalar_lea.hbm %s13, %s5197
          %s5199 = sshll.u32 %s5187, 4
          %s5200 = int_to_ptr.vmem [resolvable:$true] %s5199
          %5205 = dma.vmem_to_hbm [thread:$0]  %s5200, 256, %s5198, %s5184, 128, 128, 8
        $region84: #{tpu_custom_call.1} parent=71 // pred_fallthru
          _
      $region72: #{tpu_custom_call.1} parent=5 // pred_fallthru
        _
      %p5206 = scmp.le.s32.totalorder 2, %s24
      // Predicated region
      $region85: #{tpu_custom_call.1} parent=5 // pred_check
        %p5207 = pneg %p5206
      $region86: #{tpu_custom_call.1} parent=5 // pred_check_branch
        %5209 = sbr.rel (%p5207) target = $region88
      $region87: #{tpu_custom_call.1} parent=5 // pred_region
        %s5210 = ssub.s32 %s24, 2
        // Predicated region
        $region89: #{tpu_custom_call.1} parent=87 // pred_check
          %p5211 = pneg %p345
        $region90: #{tpu_custom_call.1} parent=87 // pred_check_branch
          %5213 = sbr.rel (%p5211) target = $region92
        $region91: #{tpu_custom_call.1} parent=87 // pred_region
          %s5214 = sand.u32 %s330, 1
          %s5215 = scalar_lea.sflag [#allocation6], %s5214
          %s5216 = sand.u32 %s330, 1
          %s5217 = smul.addr %s5216, 16
          %s5218 = scalar_lea.vmem [#allocation9], %s5217
          %5219 = dma.done %s5215, 256
        $region92: #{tpu_custom_call.1} parent=87 // pred_fallthru
          _
      $region88: #{tpu_custom_call.1} parent=5 // pred_fallthru
        _
    $region6: #{tpu_custom_call.1} parent=1 // loop_footer
      %s28 = sadd.s32 1, %s24
    $region7: #{tpu_custom_call.1} parent=1 // loop_footer_branch
      %23 = sbr.rel target = $region3
    $region8: #{tpu_custom_call.1} parent=1 // loop_exit
      _
    %5220 = vsyncpa [#allocation5], 1
    %s5221 = scalar_lea.sflag [#allocation5], 1
    %5222 = vsyncpa %s5221, 1
    %5223 = vsyncpa [#allocation8], 1
    %5224 = vsyncpa [#allocation6], 1
    %s5225 = scalar_lea.sflag [#allocation6], 1
    %5226 = vsyncpa %s5225, 1

</llo_original>
